<compile_context>
chip_gen: v6e
topology: v6e:2x2x1
jax: 0.10.0
libtpu: 0.0.40
codegen_flags: <defaults>
</compile_context>

<pallas_src>
import functools

import jax
import jax.numpy as jnp
from jax import lax
from jax.experimental import pallas as pl
from jax.experimental.pallas import tpu as pltpu


# ----------------------------------------------------------------------------
# Fused kernel body
# ----------------------------------------------------------------------------
def _resblock_kernel(H, W, x_ref, w1_ref, s1_ref, w2_ref, s2_ref, o_ref,
                     xcol_ref, hcol_ref):
    """One batch element:  relu(bn2(conv2(relu(bn1(conv1(x))))) + x).

    x_ref:    (H*W, Cin)          input tile
    w1_ref:   (3, 3*Cin, Cout)    BN1-scale-folded, kh-packed weights (bf16)
    s1_ref:   (1, Cout)           BN1 shift (f32)
    w2_ref:   (3, 3*Cout, Cout)   BN2-scale-folded, kh-packed weights (bf16)
    s2_ref:   (1, Cout)           BN2 shift (f32)
    o_ref:    (H*W, Cout)         output tile
    xcol_ref: (H+2, W, 3*Cin)     bf16 im2col strip for conv1 input
    hcol_ref: (H+2, W, 3*Cout)    bf16 im2col strip for conv2 input
    """
    HW = H * W
    Cin = x_ref.shape[-1]
    Cout = o_ref.shape[-1]

    def build_strip(col_ref, a):
        # a: (H, W, C) bf16.  col_ref[r, w, kw*C + c] = a_pad[r, w + kw, c]
        # where a_pad is `a` with a 1-pixel zero halo.  The kw shifts are paid
        # once here (not per tap in the dot loop); only the two halo rows and
        # the two edge columns are zero-filled (no full-scratch memset).
        C = a.shape[-1]
        zrow = jnp.zeros((1, W, 3 * C), jnp.bfloat16)
        zcol = jnp.zeros((H, 1, C), jnp.bfloat16)
        col_ref[0:1, :, :] = zrow                                # top halo
        col_ref[H + 1:H + 2, :, :] = zrow                        # bottom halo
        col_ref[1:H + 1, :, C:2 * C] = a                         # kw = 1 tap
        col_ref[1:H + 1, 0:1, 0:C] = zcol                        # kw = 0 edge
        col_ref[1:H + 1, 1:W, 0:C] = a[:, 0:W - 1, :]            # kw = 0 tap
        col_ref[1:H + 1, 0:W - 1, 2 * C:3 * C] = a[:, 1:W, :]    # kw = 2 tap
        col_ref[1:H + 1, W - 1:W, 2 * C:3 * C] = zcol            # kw = 2 edge

    def conv3x3(col_ref, w_ref, s_ref):
        # Three MXU matmuls with K = 3*C (leading-axis slices only, so reads
        # stay tile-aligned); f32 accumulation is loop-carried in registers
        # and the BN shift is folded into the returned expression.
        K = col_ref.shape[-1]
        acc = jnp.dot(col_ref[0:H, :, :].reshape(HW, K), w_ref[0],
                      preferred_element_type=jnp.float32)
        acc = acc + jnp.dot(col_ref[1:H + 1, :, :].reshape(HW, K), w_ref[1],
                            preferred_element_type=jnp.float32)
        acc = acc + jnp.dot(col_ref[2:H + 2, :, :].reshape(HW, K), w_ref[2],
                            preferred_element_type=jnp.float32)
        return acc + s_ref[...]                                  # (H*W, Cout)

    x2d = x_ref[...]                                             # (H*W, Cin)
    build_strip(xcol_ref, x2d.astype(jnp.bfloat16).reshape(H, W, Cin))

    # conv1 -> BN1 (scale folded into weights) -> ReLU, kept entirely in VMEM.
    h = jnp.maximum(conv3x3(xcol_ref, w1_ref, s1_ref), 0.0)
    build_strip(hcol_ref, h.astype(jnp.bfloat16).reshape(H, W, Cout))

    # conv2 -> BN2 -> + identity residual -> ReLU, single output store.
    y = conv3x3(hcol_ref, w2_ref, s2_ref) + x2d.astype(jnp.float32)
    o_ref[...] = jnp.maximum(y, 0.0).astype(o_ref.dtype)


# ----------------------------------------------------------------------------
# pallas_call wrapper — NHWC core API
# ----------------------------------------------------------------------------
def _physical_vmem_bytes():
    # v5e/v6e have 128 MiB VMEM per TensorCore, v7x only 64 MiB; query when
    # available, otherwise fall back to the most conservative value.
    try:
        return int(pltpu.get_tpu_info().vmem_capacity_bytes)
    except Exception:
        return 64 * 1024 * 1024


def res_block_forward_nhwc(x_nhwc, params):
    B, H, W, Cin = x_nhwc.shape
    Cout = params["w1"].shape[-1]
    if Cin != Cout:
        raise NotImplementedError("identity shortcut requires Cin == Cout")

    # Fold BN scale into the conv weights and pack per-kh for the im2col dots:
    # wk[kh, kw*Cin + ci, co] = w[kh, kw, ci, co] * scale[co].  Keep bf16.
    w1k = (params["w1"] * params["scale1"]).reshape(3, 3 * Cin, Cout)
    w1k = w1k.astype(jnp.bfloat16)
    w2k = (params["w2"] * params["scale2"]).reshape(3, 3 * Cout, Cout)
    w2k = w2k.astype(jnp.bfloat16)
    shift1 = params["shift1"].reshape(1, Cout).astype(jnp.float32)
    shift2 = params["shift2"].reshape(1, Cout).astype(jnp.float32)

    # Present activations as (B, H*W, C): residual add + output store need no
    # in-kernel reshape and the stored block has a large second-minor dim.
    x2d = x_nhwc.reshape(B, H * W, Cin)

    # Explicit VMEM budget: double-buffered I/O blocks + weights + strips.
    itemsize = x_nhwc.dtype.itemsize
    est = (2 * H * W * Cin * itemsize                  # x block (x2 buffers)
           + 2 * H * W * Cout * itemsize               # out block (x2 buffers)
           + 2 * 9 * (Cin * Cout + Cout * Cout) * 2    # bf16 weights (x2)
           + 4 * Cout * 4                              # shifts
           + (H + 2) * W * 3 * (Cin + Cout) * 2        # bf16 im2col strips
           + 2 * H * W * Cout * 4)                     # register/spill slack
    vmem_cap = int(0.85 * _physical_vmem_bytes())      # leave compiler headroom
    vmem_limit = int(min(max(2 * est, 16 * 1024 * 1024), vmem_cap))

    out2d = pl.pallas_call(
        functools.partial(_resblock_kernel, H, W),
        out_shape=jax.ShapeDtypeStruct((B, H * W, Cout), x_nhwc.dtype),
        grid_spec=pltpu.PrefetchScalarGridSpec(
            num_scalar_prefetch=0,
            grid=(B,),
            in_specs=[
                pl.BlockSpec((None, H * W, Cin), lambda b: (b, 0, 0)),
                pl.BlockSpec((3, 3 * Cin, Cout), lambda b: (0, 0, 0)),
                pl.BlockSpec((1, Cout), lambda b: (0, 0)),
                pl.BlockSpec((3, 3 * Cout, Cout), lambda b: (0, 0, 0)),
                pl.BlockSpec((1, Cout), lambda b: (0, 0)),
            ],
            out_specs=pl.BlockSpec((None, H * W, Cout), lambda b: (b, 0, 0)),
            scratch_shapes=[
                pltpu.VMEM((H + 2, W, 3 * Cin), jnp.bfloat16),   # conv1 strip
                pltpu.VMEM((H + 2, W, 3 * Cout), jnp.bfloat16),  # conv2 strip
            ],
        ),
        compiler_params=pltpu.CompilerParams(
            dimension_semantics=("parallel",),
            vmem_limit_bytes=vmem_limit,
        ),
    )(x2d, w1k, shift1, w2k, shift2)
    return out2d.reshape(B, H, W, Cout)


# PyTorch-parity wrapper (NCHW).  In a real model keep activations NHWC
# end-to-end and call res_block_forward_nhwc directly to avoid these passes.
def res_block_forward(x_nchw, params):
    x = jnp.transpose(x_nchw, (0, 2, 3, 1))          # NCHW -> NHWC
    y = res_block_forward_nhwc(x, params)
    return jnp.transpose(y, (0, 3, 1, 2))            # NHWC -> NCHW


# ----------------------------------------------------------------------------
# Pure-JAX references for verification
# ----------------------------------------------------------------------------
def _ref_forward_f32(x_nchw, params):
    """Exact module semantics in f32 (bit-for-bit BatchNorm fold)."""
    x = jnp.transpose(x_nchw, (0, 2, 3, 1))
    dn = ("NHWC", "HWIO", "NHWC")
    h = lax.conv_general_dilated(x, params["w1"], (1, 1), "SAME",
                                 dimension_numbers=dn)
    h = jnp.maximum(h * params["scale1"] + params["shift1"], 0.0)
    o = lax.conv_general_dilated(h, params["w2"], (1, 1), "SAME",
                                 dimension_numbers=dn)
    o = jnp.maximum(o * params["scale2"] + params["shift2"] + x, 0.0)
    return jnp.transpose(o, (0, 3, 1, 2))


def _ref_forward_bf16(x_nchw, params):
    """Same quantization points as the kernel (bf16 MXU inputs, f32 acc)."""
    x = jnp.transpose(x_nchw, (0, 2, 3, 1)).astype(jnp.float32)
    dn = ("NHWC", "HWIO", "NHWC")
    w1f = (params["w1"] * params["scale1"]).astype(jnp.bfloat16)
    w2f = (params["w2"] * params["scale2"]).astype(jnp.bfloat16)
    h = lax.conv_general_dilated(x.astype(jnp.bfloat16), w1f, (1, 1), "SAME",
                                 dimension_numbers=dn,
                                 preferred_element_type=jnp.float32)
    h = jnp.maximum(h + params["shift1"], 0.0)
    o = lax.conv_general_dilated(h.astype(jnp.bfloat16), w2f, (1, 1), "SAME",
                                 dimension_numbers=dn,
                                 preferred_element_type=jnp.float32)
    o = jnp.maximum(o + params["shift2"] + x, 0.0)
    return jnp.transpose(o, (0, 3, 1, 2))


def make_params(key, cin, cout, eps=1e-5):
    ks = jax.random.split(key, 10)

    def bn_fold(kg, kb, km, kv, c):
        gamma = 1.0 + 0.1 * jax.random.normal(kg, (c,), jnp.float32)
        beta = 0.1 * jax.random.normal(kb, (c,), jnp.float32)
        mean = 0.1 * jax.random.normal(km, (c,), jnp.float32)
        var = jnp.abs(jax.random.normal(kv, (c,), jnp.float32)) + 0.5
        scale = gamma * lax.rsqrt(var + eps)
        shift = beta - mean * scale
        return scale, shift

    w1 = 0.1 * jax.random.normal(ks[0], (3, 3, cin, cout), jnp.float32)
    w2 = 0.1 * jax.random.normal(ks[1], (3, 3, cout, cout), jnp.float32)
    scale1, shift1 = bn_fold(ks[2], ks[3], ks[4], ks[5], cout)
    scale2, shift2 = bn_fold(ks[6], ks[7], ks[8], ks[9], cout)
    return {"w1": w1, "w2": w2, "scale1": scale1, "shift1": shift1,
            "scale2": scale2, "shift2": shift2}


if __name__ == "__main__":
    key = jax.random.PRNGKey(0)
    kx, kp = jax.random.split(key)

    B, C, H, W = 2, 4, 16, 16   # inchannel == outchannel, stride=1, shortcut=None
    x = jax.random.normal(kx, (B, C, H, W), jnp.float32)
    params = make_params(kp, C, C)

    out = jax.block_until_ready(jax.jit(res_block_forward)(x, params))
    assert out.shape == (B, C, H, W)
    assert out.dtype == x.dtype

    # Tight check vs. a reference with the same bf16/f32 mixed-precision points.
    ref_q = jax.block_until_ready(_ref_forward_bf16(x, params))
    err_q = float(jnp.max(jnp.abs(out - ref_q)))
    assert jnp.allclose(out, ref_q, rtol=1e-3, atol=1e-3), err_q

    # Loose check vs. the exact f32 module semantics (bf16 MXU quantization).
    ref = jax.block_until_ready(_ref_forward_f32(x, params))
    err = float(jnp.max(jnp.abs(out - ref)))
    assert jnp.allclose(out, ref, rtol=5e-2, atol=5e-2), err

    print("KERNEL_OK")
</pallas_src>

<mosaic_0001>
module attributes {stable_mosaic.version = 11 : i64} {
  func.func @_resblock_kernel(%arg0: i32, %arg1: memref<1x256x4xf32, #tpu.memory_space<vmem>>, %arg2: memref<3x12x4xbf16, #tpu.memory_space<vmem>>, %arg3: memref<1x4xf32, #tpu.memory_space<vmem>>, %arg4: memref<3x12x4xbf16, #tpu.memory_space<vmem>>, %arg5: memref<1x4xf32, #tpu.memory_space<vmem>>, %arg6: memref<1x256x4xf32, #tpu.memory_space<vmem>>, %arg7: memref<18x16x12xbf16, #tpu.memory_space<vmem>>, %arg8: memref<18x16x12xbf16, #tpu.memory_space<vmem>>) attributes {dimension_semantics = [#tpu.dimension_semantics<parallel>], iteration_bounds = array<i64: 2>, scalar_prefetch = 0 : i64, scratch_operands = 2 : i64, tpu.core_type = #tpu.core_type<tc>, window_params = [{transform_indices = @transform_0, window_bounds = array<i64: 1, 256, 4>}, {pipeline_mode = #tpu.pipeline_mode<synchronous>, transform_indices = @transform_1, window_bounds = array<i64: 3, 12, 4>}, {pipeline_mode = #tpu.pipeline_mode<synchronous>, transform_indices = @transform_2, window_bounds = array<i64: 1, 4>}, {pipeline_mode = #tpu.pipeline_mode<synchronous>, transform_indices = @transform_3, window_bounds = array<i64: 3, 12, 4>}, {pipeline_mode = #tpu.pipeline_mode<synchronous>, transform_indices = @transform_4, window_bounds = array<i64: 1, 4>}, {transform_indices = @transform_5, window_bounds = array<i64: 1, 256, 4>}]} {
    %c0 = arith.constant 0 : index
    %c0_0 = arith.constant 0 : index
    %c0_1 = arith.constant 0 : index
    %0 = vector.load %arg1[%c0, %c0_0, %c0_1] : memref<1x256x4xf32, #tpu.memory_space<vmem>>, vector<1x256x4xf32>
    %1 = vector.shape_cast %0 : vector<1x256x4xf32> to vector<256x4xf32>
    %2 = arith.truncf %1 : vector<256x4xf32> to vector<256x4xbf16>
    %3 = vector.shape_cast %2 : vector<256x4xbf16> to vector<16x16x4xbf16>
    %cst = arith.constant 0.000000e+00 : bf16
    %4 = vector.broadcast %cst : bf16 to vector<1x16x12xbf16>
    %cst_2 = arith.constant 0.000000e+00 : bf16
    %5 = vector.broadcast %cst_2 : bf16 to vector<16x1x4xbf16>
    %c0_3 = arith.constant 0 : index
    %c0_4 = arith.constant 0 : index
    %c0_5 = arith.constant 0 : index
    %6 = vector.load %arg7[%c0_3, %c0_4, %c0_5] : memref<18x16x12xbf16, #tpu.memory_space<vmem>>, vector<1x16x12xbf16>
    tpu.vector_store %arg7[%c0_3, %c0_4, %c0_5], %4 {strides = array<i32>} : memref<18x16x12xbf16, #tpu.memory_space<vmem>>, vector<1x16x12xbf16>,
    %c17 = arith.constant 17 : index
    %c0_6 = arith.constant 0 : index
    %c0_7 = arith.constant 0 : index
    %7 = vector.load %arg7[%c17, %c0_6, %c0_7] : memref<18x16x12xbf16, #tpu.memory_space<vmem>>, vector<1x16x12xbf16>
    tpu.vector_store %arg7[%c17, %c0_6, %c0_7], %4 {strides = array<i32>} : memref<18x16x12xbf16, #tpu.memory_space<vmem>>, vector<1x16x12xbf16>,
    %c1 = arith.constant 1 : index
    %c0_8 = arith.constant 0 : index
    %c4 = arith.constant 4 : index
    %8 = vector.load %arg7[%c1, %c0_8, %c4] : memref<18x16x12xbf16, #tpu.memory_space<vmem>>, vector<16x16x4xbf16>
    tpu.vector_store %arg7[%c1, %c0_8, %c4], %3 {strides = array<i32>} : memref<18x16x12xbf16, #tpu.memory_space<vmem>>, vector<16x16x4xbf16>,
    %c1_9 = arith.constant 1 : index
    %c0_10 = arith.constant 0 : index
    %c0_11 = arith.constant 0 : index
    %9 = vector.load %arg7[%c1_9, %c0_10, %c0_11] : memref<18x16x12xbf16, #tpu.memory_space<vmem>>, vector<16x1x4xbf16>
    tpu.vector_store %arg7[%c1_9, %c0_10, %c0_11], %5 {strides = array<i32>} : memref<18x16x12xbf16, #tpu.memory_space<vmem>>, vector<16x1x4xbf16>,
    %10 = vector.extract_strided_slice %3 {offsets = [0, 0, 0], sizes = [16, 15, 4], strides = [1, 1, 1]} : vector<16x16x4xbf16> to vector<16x15x4xbf16>
    %c1_12 = arith.constant 1 : index
    %c1_13 = arith.constant 1 : index
    %c0_14 = arith.constant 0 : index
    %11 = vector.load %arg7[%c1_12, %c1_13, %c0_14] : memref<18x16x12xbf16, #tpu.memory_space<vmem>>, vector<16x15x4xbf16>
    tpu.vector_store %arg7[%c1_12, %c1_13, %c0_14], %10 {strides = array<i32>} : memref<18x16x12xbf16, #tpu.memory_space<vmem>>, vector<16x15x4xbf16>,
    %12 = vector.extract_strided_slice %3 {offsets = [0, 1, 0], sizes = [16, 15, 4], strides = [1, 1, 1]} : vector<16x16x4xbf16> to vector<16x15x4xbf16>
    %c1_15 = arith.constant 1 : index
    %c0_16 = arith.constant 0 : index
    %c8 = arith.constant 8 : index
    %13 = vector.load %arg7[%c1_15, %c0_16, %c8] : memref<18x16x12xbf16, #tpu.memory_space<vmem>>, vector<16x15x4xbf16>
    tpu.vector_store %arg7[%c1_15, %c0_16, %c8], %12 {strides = array<i32>} : memref<18x16x12xbf16, #tpu.memory_space<vmem>>, vector<16x15x4xbf16>,
    %c1_17 = arith.constant 1 : index
    %c15 = arith.constant 15 : index
    %c8_18 = arith.constant 8 : index
    %14 = vector.load %arg7[%c1_17, %c15, %c8_18] : memref<18x16x12xbf16, #tpu.memory_space<vmem>>, vector<16x1x4xbf16>
    tpu.vector_store %arg7[%c1_17, %c15, %c8_18], %5 {strides = array<i32>} : memref<18x16x12xbf16, #tpu.memory_space<vmem>>, vector<16x1x4xbf16>,
    %c0_19 = arith.constant 0 : index
    %c0_20 = arith.constant 0 : index
    %c0_21 = arith.constant 0 : index
    %15 = vector.load %arg7[%c0_19, %c0_20, %c0_21] : memref<18x16x12xbf16, #tpu.memory_space<vmem>>, vector<16x16x12xbf16>
    %16 = vector.shape_cast %15 : vector<16x16x12xbf16> to vector<256x12xbf16>
    %c0_22 = arith.constant 0 : index
    %c0_23 = arith.constant 0 : index
    %c0_24 = arith.constant 0 : index
    %17 = vector.load %arg2[%c0_22, %c0_23, %c0_24] : memref<3x12x4xbf16, #tpu.memory_space<vmem>>, vector<1x12x4xbf16>
    %18 = vector.shape_cast %17 : vector<1x12x4xbf16> to vector<12x4xbf16>
    %cst_25 = arith.constant dense<0.000000e+00> : vector<256x4xf32>
    %19 = tpu.matmul %16, %18, %cst_25 {dimension_numbers = #tpu.dot_dimension_numbers<[1], [0], [0], [1], [0, 0, 1, 1], [], []>} : vector<256x12xbf16>, vector<12x4xbf16>, vector<256x4xf32> -> vector<256x4xf32>
    %c1_26 = arith.constant 1 : index
    %c0_27 = arith.constant 0 : index
    %c0_28 = arith.constant 0 : index
    %20 = vector.load %arg7[%c1_26, %c0_27, %c0_28] : memref<18x16x12xbf16, #tpu.memory_space<vmem>>, vector<16x16x12xbf16>
    %21 = vector.shape_cast %20 : vector<16x16x12xbf16> to vector<256x12xbf16>
    %c1_29 = arith.constant 1 : index
    %c0_30 = arith.constant 0 : index
    %c0_31 = arith.constant 0 : index
    %22 = vector.load %arg2[%c1_29, %c0_30, %c0_31] : memref<3x12x4xbf16, #tpu.memory_space<vmem>>, vector<1x12x4xbf16>
    %23 = vector.shape_cast %22 : vector<1x12x4xbf16> to vector<12x4xbf16>
    %cst_32 = arith.constant dense<0.000000e+00> : vector<256x4xf32>
    %24 = tpu.matmul %21, %23, %cst_32 {dimension_numbers = #tpu.dot_dimension_numbers<[1], [0], [0], [1], [0, 0, 1, 1], [], []>} : vector<256x12xbf16>, vector<12x4xbf16>, vector<256x4xf32> -> vector<256x4xf32>
    %25 = arith.addf %19, %24 : vector<256x4xf32>
    %c2 = arith.constant 2 : index
    %c0_33 = arith.constant 0 : index
    %c0_34 = arith.constant 0 : index
    %26 = vector.load %arg7[%c2, %c0_33, %c0_34] : memref<18x16x12xbf16, #tpu.memory_space<vmem>>, vector<16x16x12xbf16>
    %27 = vector.shape_cast %26 : vector<16x16x12xbf16> to vector<256x12xbf16>
    %c2_35 = arith.constant 2 : index
    %c0_36 = arith.constant 0 : index
    %c0_37 = arith.constant 0 : index
    %28 = vector.load %arg2[%c2_35, %c0_36, %c0_37] : memref<3x12x4xbf16, #tpu.memory_space<vmem>>, vector<1x12x4xbf16>
    %29 = vector.shape_cast %28 : vector<1x12x4xbf16> to vector<12x4xbf16>
    %cst_38 = arith.constant dense<0.000000e+00> : vector<256x4xf32>
    %30 = tpu.matmul %27, %29, %cst_38 {dimension_numbers = #tpu.dot_dimension_numbers<[1], [0], [0], [1], [0, 0, 1, 1], [], []>} : vector<256x12xbf16>, vector<12x4xbf16>, vector<256x4xf32> -> vector<256x4xf32>
    %31 = arith.addf %25, %30 : vector<256x4xf32>
    %c0_39 = arith.constant 0 : index
    %c0_40 = arith.constant 0 : index
    %32 = vector.load %arg3[%c0_39, %c0_40] : memref<1x4xf32, #tpu.memory_space<vmem>>, vector<1x4xf32>
    %33 = vector.broadcast %32 : vector<1x4xf32> to vector<256x4xf32>
    %34 = arith.addf %31, %33 : vector<256x4xf32>
    %cst_41 = arith.constant 0.000000e+00 : f32
    %35 = vector.broadcast %cst_41 : f32 to vector<256x4xf32>
    %36 = arith.maximumf %34, %35 : vector<256x4xf32>
    %37 = arith.truncf %36 : vector<256x4xf32> to vector<256x4xbf16>
    %38 = vector.shape_cast %37 : vector<256x4xbf16> to vector<16x16x4xbf16>
    %cst_42 = arith.constant 0.000000e+00 : bf16
    %39 = vector.broadcast %cst_42 : bf16 to vector<1x16x12xbf16>
    %cst_43 = arith.constant 0.000000e+00 : bf16
    %40 = vector.broadcast %cst_43 : bf16 to vector<16x1x4xbf16>
    %c0_44 = arith.constant 0 : index
    %c0_45 = arith.constant 0 : index
    %c0_46 = arith.constant 0 : index
    %41 = vector.load %arg8[%c0_44, %c0_45, %c0_46] : memref<18x16x12xbf16, #tpu.memory_space<vmem>>, vector<1x16x12xbf16>
    tpu.vector_store %arg8[%c0_44, %c0_45, %c0_46], %39 {strides = array<i32>} : memref<18x16x12xbf16, #tpu.memory_space<vmem>>, vector<1x16x12xbf16>,
    %c17_47 = arith.constant 17 : index
    %c0_48 = arith.constant 0 : index
    %c0_49 = arith.constant 0 : index
    %42 = vector.load %arg8[%c17_47, %c0_48, %c0_49] : memref<18x16x12xbf16, #tpu.memory_space<vmem>>, vector<1x16x12xbf16>
    tpu.vector_store %arg8[%c17_47, %c0_48, %c0_49], %39 {strides = array<i32>} : memref<18x16x12xbf16, #tpu.memory_space<vmem>>, vector<1x16x12xbf16>,
    %c1_50 = arith.constant 1 : index
    %c0_51 = arith.constant 0 : index
    %c4_52 = arith.constant 4 : index
    %43 = vector.load %arg8[%c1_50, %c0_51, %c4_52] : memref<18x16x12xbf16, #tpu.memory_space<vmem>>, vector<16x16x4xbf16>
    tpu.vector_store %arg8[%c1_50, %c0_51, %c4_52], %38 {strides = array<i32>} : memref<18x16x12xbf16, #tpu.memory_space<vmem>>, vector<16x16x4xbf16>,
    %c1_53 = arith.constant 1 : index
    %c0_54 = arith.constant 0 : index
    %c0_55 = arith.constant 0 : index
    %44 = vector.load %arg8[%c1_53, %c0_54, %c0_55] : memref<18x16x12xbf16, #tpu.memory_space<vmem>>, vector<16x1x4xbf16>
    tpu.vector_store %arg8[%c1_53, %c0_54, %c0_55], %40 {strides = array<i32>} : memref<18x16x12xbf16, #tpu.memory_space<vmem>>, vector<16x1x4xbf16>,
    %45 = vector.extract_strided_slice %38 {offsets = [0, 0, 0], sizes = [16, 15, 4], strides = [1, 1, 1]} : vector<16x16x4xbf16> to vector<16x15x4xbf16>
    %c1_56 = arith.constant 1 : index
    %c1_57 = arith.constant 1 : index
    %c0_58 = arith.constant 0 : index
    %46 = vector.load %arg8[%c1_56, %c1_57, %c0_58] : memref<18x16x12xbf16, #tpu.memory_space<vmem>>, vector<16x15x4xbf16>
    tpu.vector_store %arg8[%c1_56, %c1_57, %c0_58], %45 {strides = array<i32>} : memref<18x16x12xbf16, #tpu.memory_space<vmem>>, vector<16x15x4xbf16>,
    %47 = vector.extract_strided_slice %38 {offsets = [0, 1, 0], sizes = [16, 15, 4], strides = [1, 1, 1]} : vector<16x16x4xbf16> to vector<16x15x4xbf16>
    %c1_59 = arith.constant 1 : index
    %c0_60 = arith.constant 0 : index
    %c8_61 = arith.constant 8 : index
    %48 = vector.load %arg8[%c1_59, %c0_60, %c8_61] : memref<18x16x12xbf16, #tpu.memory_space<vmem>>, vector<16x15x4xbf16>
    tpu.vector_store %arg8[%c1_59, %c0_60, %c8_61], %47 {strides = array<i32>} : memref<18x16x12xbf16, #tpu.memory_space<vmem>>, vector<16x15x4xbf16>,
    %c1_62 = arith.constant 1 : index
    %c15_63 = arith.constant 15 : index
    %c8_64 = arith.constant 8 : index
    %49 = vector.load %arg8[%c1_62, %c15_63, %c8_64] : memref<18x16x12xbf16, #tpu.memory_space<vmem>>, vector<16x1x4xbf16>
    tpu.vector_store %arg8[%c1_62, %c15_63, %c8_64], %40 {strides = array<i32>} : memref<18x16x12xbf16, #tpu.memory_space<vmem>>, vector<16x1x4xbf16>,
    %c0_65 = arith.constant 0 : index
    %c0_66 = arith.constant 0 : index
    %c0_67 = arith.constant 0 : index
    %50 = vector.load %arg8[%c0_65, %c0_66, %c0_67] : memref<18x16x12xbf16, #tpu.memory_space<vmem>>, vector<16x16x12xbf16>
    %51 = vector.shape_cast %50 : vector<16x16x12xbf16> to vector<256x12xbf16>
    %c0_68 = arith.constant 0 : index
    %c0_69 = arith.constant 0 : index
    %c0_70 = arith.constant 0 : index
    %52 = vector.load %arg4[%c0_68, %c0_69, %c0_70] : memref<3x12x4xbf16, #tpu.memory_space<vmem>>, vector<1x12x4xbf16>
    %53 = vector.shape_cast %52 : vector<1x12x4xbf16> to vector<12x4xbf16>
    %cst_71 = arith.constant dense<0.000000e+00> : vector<256x4xf32>
    %54 = tpu.matmul %51, %53, %cst_71 {dimension_numbers = #tpu.dot_dimension_numbers<[1], [0], [0], [1], [0, 0, 1, 1], [], []>} : vector<256x12xbf16>, vector<12x4xbf16>, vector<256x4xf32> -> vector<256x4xf32>
    %c1_72 = arith.constant 1 : index
    %c0_73 = arith.constant 0 : index
    %c0_74 = arith.constant 0 : index
    %55 = vector.load %arg8[%c1_72, %c0_73, %c0_74] : memref<18x16x12xbf16, #tpu.memory_space<vmem>>, vector<16x16x12xbf16>
    %56 = vector.shape_cast %55 : vector<16x16x12xbf16> to vector<256x12xbf16>
    %c1_75 = arith.constant 1 : index
    %c0_76 = arith.constant 0 : index
    %c0_77 = arith.constant 0 : index
    %57 = vector.load %arg4[%c1_75, %c0_76, %c0_77] : memref<3x12x4xbf16, #tpu.memory_space<vmem>>, vector<1x12x4xbf16>
    %58 = vector.shape_cast %57 : vector<1x12x4xbf16> to vector<12x4xbf16>
    %cst_78 = arith.constant dense<0.000000e+00> : vector<256x4xf32>
    %59 = tpu.matmul %56, %58, %cst_78 {dimension_numbers = #tpu.dot_dimension_numbers<[1], [0], [0], [1], [0, 0, 1, 1], [], []>} : vector<256x12xbf16>, vector<12x4xbf16>, vector<256x4xf32> -> vector<256x4xf32>
    %60 = arith.addf %54, %59 : vector<256x4xf32>
    %c2_79 = arith.constant 2 : index
    %c0_80 = arith.constant 0 : index
    %c0_81 = arith.constant 0 : index
    %61 = vector.load %arg8[%c2_79, %c0_80, %c0_81] : memref<18x16x12xbf16, #tpu.memory_space<vmem>>, vector<16x16x12xbf16>
    %62 = vector.shape_cast %61 : vector<16x16x12xbf16> to vector<256x12xbf16>
    %c2_82 = arith.constant 2 : index
    %c0_83 = arith.constant 0 : index
    %c0_84 = arith.constant 0 : index
    %63 = vector.load %arg4[%c2_82, %c0_83, %c0_84] : memref<3x12x4xbf16, #tpu.memory_space<vmem>>, vector<1x12x4xbf16>
    %64 = vector.shape_cast %63 : vector<1x12x4xbf16> to vector<12x4xbf16>
    %cst_85 = arith.constant dense<0.000000e+00> : vector<256x4xf32>
    %65 = tpu.matmul %62, %64, %cst_85 {dimension_numbers = #tpu.dot_dimension_numbers<[1], [0], [0], [1], [0, 0, 1, 1], [], []>} : vector<256x12xbf16>, vector<12x4xbf16>, vector<256x4xf32> -> vector<256x4xf32>
    %66 = arith.addf %60, %65 : vector<256x4xf32>
    %c0_86 = arith.constant 0 : index
    %c0_87 = arith.constant 0 : index
    %67 = vector.load %arg5[%c0_86, %c0_87] : memref<1x4xf32, #tpu.memory_space<vmem>>, vector<1x4xf32>
    %68 = vector.broadcast %67 : vector<1x4xf32> to vector<256x4xf32>
    %69 = arith.addf %66, %68 : vector<256x4xf32>
    %70 = arith.addf %69, %1 : vector<256x4xf32>
    %cst_88 = arith.constant 0.000000e+00 : f32
    %71 = vector.broadcast %cst_88 : f32 to vector<256x4xf32>
    %72 = arith.maximumf %70, %71 : vector<256x4xf32>
    %c0_89 = arith.constant 0 : index
    %c0_90 = arith.constant 0 : index
    %c0_91 = arith.constant 0 : index
    %73 = vector.load %arg6[%c0_89, %c0_90, %c0_91] : memref<1x256x4xf32, #tpu.memory_space<vmem>>, vector<1x256x4xf32>
    %74 = vector.shape_cast %73 : vector<1x256x4xf32> to vector<256x4xf32>
    %75 = vector.shape_cast %72 : vector<256x4xf32> to vector<1x256x4xf32>
    tpu.vector_store %arg6[%c0_89, %c0_90, %c0_91], %75 {strides = array<i32>} : memref<1x256x4xf32, #tpu.memory_space<vmem>>, vector<1x256x4xf32>,
    return
  }
  func.func @transform_0(%arg0: i32) -> (i32, i32, i32) {
    %c0_i32 = arith.constant 0 : i32
    %c0_i32_0 = arith.constant 0 : i32
    %c0_i32_1 = arith.constant 0 : i32
    return %arg0, %c0_i32, %c0_i32_0 : i32, i32, i32
  }
  func.func @transform_1(%arg0: i32) -> (i32, i32, i32) {
    %c0_i32 = arith.constant 0 : i32
    %c0_i32_0 = arith.constant 0 : i32
    %c0_i32_1 = arith.constant 0 : i32
    %c0_i32_2 = arith.constant 0 : i32
    return %c0_i32, %c0_i32_0, %c0_i32_1 : i32, i32, i32
  }
  func.func @transform_2(%arg0: i32) -> (i32, i32) {
    %c0_i32 = arith.constant 0 : i32
    %c0_i32_0 = arith.constant 0 : i32
    %c0_i32_1 = arith.constant 0 : i32
    return %c0_i32, %c0_i32_0 : i32, i32
  }
  func.func @transform_3(%arg0: i32) -> (i32, i32, i32) {
    %c0_i32 = arith.constant 0 : i32
    %c0_i32_0 = arith.constant 0 : i32
    %c0_i32_1 = arith.constant 0 : i32
    %c0_i32_2 = arith.constant 0 : i32
    return %c0_i32, %c0_i32_0, %c0_i32_1 : i32, i32, i32
  }
  func.func @transform_4(%arg0: i32) -> (i32, i32) {
    %c0_i32 = arith.constant 0 : i32
    %c0_i32_0 = arith.constant 0 : i32
    %c0_i32_1 = arith.constant 0 : i32
    return %c0_i32, %c0_i32_0 : i32, i32
  }
  func.func @transform_5(%arg0: i32) -> (i32, i32, i32) {
    %c0_i32 = arith.constant 0 : i32
    %c0_i32_0 = arith.constant 0 : i32
    %c0_i32_1 = arith.constant 0 : i32
    return %arg0, %c0_i32, %c0_i32_0 : i32, i32, i32
  }
}

</mosaic_0001>

<llo_original>
// kernel: res_block_forward.1
$region0: #{res_block_forward.1}
  #allocation0 [shape = 'u32[]', space=smem, size = 0x4, offset = 0x4, fixed_abs, tag = 'smem constant byte address 0x4 - core index']
  #allocation1 [shape = 'u32[144,128]{1,0:T(1,128)}', space=vmem, size = 0x12000, scoped, tag = 'internal scratch']
  #allocation2 [shape = 'bf16[18,16,12]{2,1,0:T(8,128)(2,1)}', space=vmem, size = 0x12000, scoped, tag = 'scratch operand']
  #allocation3 [shape = 'bf16[18,16,12]{2,1,0:T(8,128)(2,1)}', space=vmem, size = 0x12000, scoped, tag = 'scratch operand']
  %s0 = inlined_call_operand.vmem [shape: f32[2,256,4], index: 0, kind: input, shape index: {}]
  %s1 = inlined_call_operand.vmem [shape: bf16[3,12,4], index: 1, kind: input, shape index: {}]
  %s2 = inlined_call_operand.vmem [shape: f32[1,4], index: 2, kind: input, shape index: {}]
  %s3 = inlined_call_operand.vmem [shape: bf16[3,12,4], index: 3, kind: input, shape index: {}]
  %s4 = inlined_call_operand.vmem [shape: f32[1,4], index: 4, kind: input, shape index: {}]
  %s5 = inlined_call_operand.vmem [shape: f32[2,256,4], index: 5, kind: output, shape index: {}]
  %s6 = sld [smem:[#allocation0]]
  $region53: #{res_block_forward.1} parent=0
    _
  %s8 = ssub.s32 1, %s6
  %s9 = scalar_select 0, %s8, %s6
  loop: start=0, step=1, limit=4
  $region2: #{res_block_forward.1} parent=0 // loop_pre_header
    _
  $region3: #{res_block_forward.1} parent=0 // loop_header
    %s11 = sphi 0, %s15
    %p12 = scmp.ge.s32.totalorder %s11, 4
    %s21 = sphi 0, %s23
    %s24 = sphi 0, %s21
    %s25 = sphi 0, %s24
    %s41 = sphi 0, %s25
    %s45 = sphi 0, %s45
    %s47 = sphi 0, %s45
    %s48 = sphi 0, %s47
    %s62 = sphi 0, %s48
    %s66 = sphi 0, %s66
    %s68 = sphi 0, %s66
    %s69 = sphi 0, %s68
    %s83 = sphi 0, %s69
    %s87 = sphi 0, %s87
    %s89 = sphi 0, %s87
    %s90 = sphi 0, %s89
    %s104 = sphi 0, %s90
    %s108 = sphi 0, %s108
    %s110 = sphi 0, %s108
    %s111 = sphi 0, %s110
    %s125 = sphi 0, %s111
    %s131 = sphi 0, %s133
    %s134 = sphi 0, %s131
    %s135 = sphi 0, %s134
    %s151 = sphi 0, %s135
  $region4: #{res_block_forward.1} parent=0 // loop_header_branch
    %14 = sbr.rel (%p12) target = $region8
  $region5: #{res_block_forward.1} parent=0 // loop_body
    %s16 = ssub.s32 %s11, 1
    %s17 = ssub.s32 %s11, 2
    %s18 = sadd.s32 %s11, 1
    %s19 = ssub.s32 %s11, %s18
    %p20 = scmp.eq.s32.totalorder %s19, 0
    %s22 = sadd.s32 %s21, 1
    %s23 = scalar_select %p20, %s21, %s22
    %p26 = pneg %p20
    %p27 = scmp.eq.s32.totalorder %s11, 1
    %p28 = por %p26, %p27
    %p29 = scmp.ne.s32.totalorder %s21, %s24
    %p30 = scmp.eq.s32.totalorder %s11, 0
    %p31 = por %p29, %p30
    %p32 = scmp.ne.s32.totalorder %s21, %s24
    %p33 = scmp.eq.s32.totalorder %s16, 1
    %p34 = por %p32, %p33
    %p35 = scmp.ne.s32.totalorder %s24, %s25
    %p36 = scmp.eq.s32.totalorder %s16, 0
    %p37 = por %p35, %p36
    %p38 = scmp.ne.s32.totalorder %s24, %s25
    %p39 = scmp.eq.s32.totalorder %s17, 1
    %p40 = por %p38, %p39
    %p42 = scmp.ne.s32.totalorder %s25, %s41
    %p43 = scmp.eq.s32.totalorder %s17, 0
    %p44 = por %p42, %p43
    %s46 = sadd.s32 %s45, 1
    %p49 = scmp.eq.s32.totalorder %s11, 1
    %p50 = scmp.ne.s32.totalorder %s45, %s47
    %p51 = scmp.eq.s32.totalorder %s11, 0
    %p52 = por %p50, %p51
    %p53 = scmp.ne.s32.totalorder %s45, %s47
    %p54 = scmp.eq.s32.totalorder %s16, 1
    %p55 = por %p53, %p54
    %p56 = scmp.ne.s32.totalorder %s47, %s48
    %p57 = scmp.eq.s32.totalorder %s16, 0
    %p58 = por %p56, %p57
    %p59 = scmp.ne.s32.totalorder %s47, %s48
    %p60 = scmp.eq.s32.totalorder %s17, 1
    %p61 = por %p59, %p60
    %p63 = scmp.ne.s32.totalorder %s48, %s62
    %p64 = scmp.eq.s32.totalorder %s17, 0
    %p65 = por %p63, %p64
    %s67 = sadd.s32 %s66, 1
    %p70 = scmp.eq.s32.totalorder %s11, 1
    %p71 = scmp.ne.s32.totalorder %s66, %s68
    %p72 = scmp.eq.s32.totalorder %s11, 0
    %p73 = por %p71, %p72
    %p74 = scmp.ne.s32.totalorder %s66, %s68
    %p75 = scmp.eq.s32.totalorder %s16, 1
    %p76 = por %p74, %p75
    %p77 = scmp.ne.s32.totalorder %s68, %s69
    %p78 = scmp.eq.s32.totalorder %s16, 0
    %p79 = por %p77, %p78
    %p80 = scmp.ne.s32.totalorder %s68, %s69
    %p81 = scmp.eq.s32.totalorder %s17, 1
    %p82 = por %p80, %p81
    %p84 = scmp.ne.s32.totalorder %s69, %s83
    %p85 = scmp.eq.s32.totalorder %s17, 0
    %p86 = por %p84, %p85
    %s88 = sadd.s32 %s87, 1
    %p91 = scmp.eq.s32.totalorder %s11, 1
    %p92 = scmp.ne.s32.totalorder %s87, %s89
    %p93 = scmp.eq.s32.totalorder %s11, 0
    %p94 = por %p92, %p93
    %p95 = scmp.ne.s32.totalorder %s87, %s89
    %p96 = scmp.eq.s32.totalorder %s16, 1
    %p97 = por %p95, %p96
    %p98 = scmp.ne.s32.totalorder %s89, %s90
    %p99 = scmp.eq.s32.totalorder %s16, 0
    %p100 = por %p98, %p99
    %p101 = scmp.ne.s32.totalorder %s89, %s90
    %p102 = scmp.eq.s32.totalorder %s17, 1
    %p103 = por %p101, %p102
    %p105 = scmp.ne.s32.totalorder %s90, %s104
    %p106 = scmp.eq.s32.totalorder %s17, 0
    %p107 = por %p105, %p106
    %s109 = sadd.s32 %s108, 1
    %p112 = scmp.eq.s32.totalorder %s11, 1
    %p113 = scmp.ne.s32.totalorder %s108, %s110
    %p114 = scmp.eq.s32.totalorder %s11, 0
    %p115 = por %p113, %p114
    %p116 = scmp.ne.s32.totalorder %s108, %s110
    %p117 = scmp.eq.s32.totalorder %s16, 1
    %p118 = por %p116, %p117
    %p119 = scmp.ne.s32.totalorder %s110, %s111
    %p120 = scmp.eq.s32.totalorder %s16, 0
    %p121 = por %p119, %p120
    %p122 = scmp.ne.s32.totalorder %s110, %s111
    %p123 = scmp.eq.s32.totalorder %s17, 1
    %p124 = por %p122, %p123
    %p126 = scmp.ne.s32.totalorder %s111, %s125
    %p127 = scmp.eq.s32.totalorder %s17, 0
    %p128 = por %p126, %p127
    %s129 = ssub.s32 %s11, %s18
    %p130 = scmp.eq.s32.totalorder %s129, 0
    %s132 = sadd.s32 %s131, 1
    %s133 = scalar_select %p130, %s131, %s132
    %p136 = pneg %p130
    %p137 = scmp.eq.s32.totalorder %s11, 1
    %p138 = por %p136, %p137
    %p139 = scmp.ne.s32.totalorder %s131, %s134
    %p140 = scmp.eq.s32.totalorder %s11, 0
    %p141 = por %p139, %p140
    %p142 = scmp.ne.s32.totalorder %s131, %s134
    %p143 = scmp.eq.s32.totalorder %s16, 1
    %p144 = por %p142, %p143
    %p145 = scmp.ne.s32.totalorder %s134, %s135
    %p146 = scmp.eq.s32.totalorder %s16, 0
    %p147 = por %p145, %p146
    %p148 = scmp.ne.s32.totalorder %s134, %s135
    %p149 = scmp.eq.s32.totalorder %s17, 1
    %p150 = por %p148, %p149
    %p152 = scmp.ne.s32.totalorder %s135, %s151
    %p153 = scmp.eq.s32.totalorder %s17, 0
    %p154 = por %p152, %p153
    %p155 = scmp.le.s32.totalorder 1, %s11
    %p156 = scmp.lt.s32.totalorder %s11, 3
    %p157 = pnand %p155, %p156
    %p158 = pneg %p157
    // Predicated region
    $region9: #{res_block_forward.1} parent=5 // pred_check
      _
    $region10: #{res_block_forward.1} parent=5 // pred_check_branch
      %160 = sbr.rel (%p157) target = $region12
    $region11: #{res_block_forward.1} parent=5 // pred_region
      %s161 = ssub.s32 %s11, 1
      // Predicated region
      $region13: #{res_block_forward.1} parent=11 // pred_check
        %p162 = pneg %p58
      $region14: #{res_block_forward.1} parent=11 // pred_check_branch
        %164 = sbr.rel (%p162) target = $region16
      $region15: #{res_block_forward.1} parent=11 // pred_region
        _
      $region16: #{res_block_forward.1} parent=11 // pred_fallthru
        _
      // Predicated region
      $region17: #{res_block_forward.1} parent=11 // pred_check
        %p165 = pneg %p79
      $region18: #{res_block_forward.1} parent=11 // pred_check_branch
        %167 = sbr.rel (%p165) target = $region20
      $region19: #{res_block_forward.1} parent=11 // pred_region
        _
      $region20: #{res_block_forward.1} parent=11 // pred_fallthru
        _
      // Predicated region
      $region21: #{res_block_forward.1} parent=11 // pred_check
        %p168 = pneg %p100
      $region22: #{res_block_forward.1} parent=11 // pred_check_branch
        %170 = sbr.rel (%p168) target = $region24
      $region23: #{res_block_forward.1} parent=11 // pred_region
        _
      $region24: #{res_block_forward.1} parent=11 // pred_fallthru
        _
      // Predicated region
      $region25: #{res_block_forward.1} parent=11 // pred_check
        %p171 = pneg %p121
      $region26: #{res_block_forward.1} parent=11 // pred_check_branch
        %173 = sbr.rel (%p171) target = $region28
      $region27: #{res_block_forward.1} parent=11 // pred_region
        _
      $region28: #{res_block_forward.1} parent=11 // pred_fallthru
        _
    $region12: #{res_block_forward.1} parent=5 // pred_fallthru
      _
    %p174 = scmp.lt.s32.totalorder %s11, 2
    // Predicated region
    $region29: #{res_block_forward.1} parent=5 // pred_check
      %p175 = pneg %p174
    $region30: #{res_block_forward.1} parent=5 // pred_check_branch
      %177 = sbr.rel (%p175) target = $region32
    $region31: #{res_block_forward.1} parent=5 // pred_region
      // Predicated region
      $region33: #{res_block_forward.1} parent=31 // pred_check
        %p178 = pneg %p31
      $region34: #{res_block_forward.1} parent=31 // pred_check_branch
        %180 = sbr.rel (%p178) target = $region36
      $region35: #{res_block_forward.1} parent=31 // pred_region
        %p181 = scmp.lt.s32.totalorder %s11, 1
        %s182 = scalar_select %p181, %s11, 1
        %s183 = smul.addr %s182, 32
        %s184 = smul.addr %s183, 8
        %s185 = scalar_lea.vmem %s0, %s184
      $region36: #{res_block_forward.1} parent=31 // pred_fallthru
        _
    $region32: #{res_block_forward.1} parent=5 // pred_fallthru
      _
    %p186 = scmp.le.s32.totalorder 1, %s11
    %p187 = scmp.lt.s32.totalorder %s11, 3
    %p188 = pnand %p186, %p187
    %p189 = pneg %p188
    // Predicated region
    $region37: #{res_block_forward.1} parent=5 // pred_check
      _
    $region38: #{res_block_forward.1} parent=5 // pred_check_branch
      %191 = sbr.rel (%p188) target = $region40
    $region39: #{res_block_forward.1} parent=5 // pred_region
      %s192 = ssub.s32 %s11, 1
      %p193 = scmp.lt.s32.totalorder %s16, 1
      %s194 = scalar_select %p193, %s16, 1
      %s195 = smul.addr %s194, 32
      %s196 = smul.addr %s195, 8
      %s197 = scalar_lea.vmem %s0, %s196
      %p198 = pneg %p37
      %p199 = pneg %p34
      %p200 = pneg %p58
      %p201 = pneg %p55
      %p202 = pneg %p79
      %p203 = pneg %p76
      %p204 = pneg %p100
      %p205 = pneg %p97
      %p206 = pneg %p121
      %p207 = pneg %p118
      %p208 = pneg %p147
      %p209 = pneg %p144
      %p210 = scmp.lt.s32.totalorder %s16, 1
      %s211 = scalar_select %p210, %s16, 1
      %s212 = smul.addr %s211, 32
      %s213 = smul.addr %s212, 8
      %s214 = scalar_lea.vmem %s5, %s213
      %p215 = scmp.lt.s32.totalorder %s16, 1
      %s216 = scalar_select %p215, %s16, 1
      %s217 = smul.addr %s216, 32
      %s218 = smul.addr %s217, 8
      %s219 = scalar_lea.vmem %s0, %s218
      %p220 = scmp.lt.s32.totalorder %s16, 1
      %s221 = scalar_select %p220, %s16, 1
      %s222 = smul.addr %s221, 32
      %s223 = smul.addr %s222, 8
      %s224 = scalar_lea.vmem %s5, %s223
      %v226 = vld [vmem:[%s219] sm:$0xff]
      %v227 = vld [vmem:[%s219 + $0x8] sm:$0xff]
      %v228 = vld [vmem:[%s219 + $0x10] sm:$0xff]
      %v229 = vld [vmem:[%s219 + $0x18] sm:$0xff]
      %v230 = vld [vmem:[%s219 + $0x20] sm:$0xff]
      %v231 = vld [vmem:[%s219 + $0x28] sm:$0xff]
      %v232 = vld [vmem:[%s219 + $0x30] sm:$0xff]
      %v233 = vld [vmem:[%s219 + $0x38] sm:$0xff]
      %v234 = vld [vmem:[%s219 + $0x40] sm:$0xff]
      %v235 = vld [vmem:[%s219 + $0x48] sm:$0xff]
      %v236 = vld [vmem:[%s219 + $0x50] sm:$0xff]
      %v237 = vld [vmem:[%s219 + $0x58] sm:$0xff]
      %v238 = vld [vmem:[%s219 + $0x60] sm:$0xff]
      %v239 = vld [vmem:[%s219 + $0x68] sm:$0xff]
      %v240 = vld [vmem:[%s219 + $0x70] sm:$0xff]
      %v241 = vld [vmem:[%s219 + $0x78] sm:$0xff]
      %v242 = vld [vmem:[%s219 + $0x80] sm:$0xff]
      %v243 = vld [vmem:[%s219 + $0x88] sm:$0xff]
      %v244 = vld [vmem:[%s219 + $0x90] sm:$0xff]
      %v245 = vld [vmem:[%s219 + $0x98] sm:$0xff]
      %v246 = vld [vmem:[%s219 + $0xa0] sm:$0xff]
      %v247 = vld [vmem:[%s219 + $0xa8] sm:$0xff]
      %v248 = vld [vmem:[%s219 + $0xb0] sm:$0xff]
      %v249 = vld [vmem:[%s219 + $0xb8] sm:$0xff]
      %v250 = vld [vmem:[%s219 + $0xc0] sm:$0xff]
      %v251 = vld [vmem:[%s219 + $0xc8] sm:$0xff]
      %v252 = vld [vmem:[%s219 + $0xd0] sm:$0xff]
      %v253 = vld [vmem:[%s219 + $0xd8] sm:$0xff]
      %v254 = vld [vmem:[%s219 + $0xe0] sm:$0xff]
      %v255 = vld [vmem:[%s219 + $0xe8] sm:$0xff]
      %v256 = vld [vmem:[%s219 + $0xf0] sm:$0xff]
      %v257 = vld [vmem:[%s219 + $0xf8] sm:$0xff]
      %v258 = vpack.c.bf16 %v227, %v226
      %v259 = vpack.c.bf16 %v229, %v228
      %v260 = vpack.c.bf16 %v231, %v230
      %v261 = vpack.c.bf16 %v233, %v232
      %v262 = vpack.c.bf16 %v235, %v234
      %v263 = vpack.c.bf16 %v237, %v236
      %v264 = vpack.c.bf16 %v239, %v238
      %v265 = vpack.c.bf16 %v241, %v240
      %v266 = vpack.c.bf16 %v243, %v242
      %v267 = vpack.c.bf16 %v245, %v244
      %v268 = vpack.c.bf16 %v247, %v246
      %v269 = vpack.c.bf16 %v249, %v248
      %v270 = vpack.c.bf16 %v251, %v250
      %v271 = vpack.c.bf16 %v253, %v252
      %v272 = vpack.c.bf16 %v255, %v254
      %v273 = vpack.c.bf16 %v257, %v256
      %vm274 = vcmask 93184
      %275 = vst.msk [vmem:[#allocation2] sm:$0xf] %vm274, 0
      %276 = vst.msk [vmem:[#allocation2 + $0x4] sm:$0xf] %vm274, 0
      %s277 = scalar_lea.vmem [#allocation2], 136
      %278 = vst.msk [vmem:[%s277] sm:$0xf] %vm274, 0
      %279 = vst.msk [vmem:[%s277 + $0x4] sm:$0xf] %vm274, 0
      %v296 = vunpack.c.l.b16 %v258
      %v297 = vunpack.c.h.b16 %v258
      %v298 = vunpack.c.l.b16 %v259
      %v299 = vunpack.c.h.b16 %v259
      %v300 = vunpack.c.l.b16 %v260
      %v301 = vunpack.c.h.b16 %v260
      %v302 = vunpack.c.l.b16 %v261
      %v303 = vunpack.c.h.b16 %v261
      %v304 = vunpack.c.l.b16 %v262
      %v305 = vunpack.c.h.b16 %v262
      %v306 = vunpack.c.l.b16 %v263
      %v307 = vunpack.c.h.b16 %v263
      %v308 = vunpack.c.l.b16 %v264
      %v309 = vunpack.c.h.b16 %v264
      %v310 = vunpack.c.l.b16 %v265
      %v311 = vunpack.c.h.b16 %v265
      %v312 = vunpack.c.l.b16 %v266
      %v313 = vunpack.c.h.b16 %v266
      %v314 = vunpack.c.l.b16 %v267
      %v315 = vunpack.c.h.b16 %v267
      %v316 = vunpack.c.l.b16 %v268
      %v317 = vunpack.c.h.b16 %v268
      %v318 = vunpack.c.l.b16 %v269
      %v319 = vunpack.c.h.b16 %v269
      %v320 = vunpack.c.l.b16 %v270
      %v321 = vunpack.c.h.b16 %v270
      %v322 = vunpack.c.l.b16 %v271
      %v323 = vunpack.c.h.b16 %v271
      %v324 = vunpack.c.l.b16 %v272
      %v325 = vunpack.c.h.b16 %v272
      %v326 = vunpack.c.l.b16 %v273
      %v327 = vunpack.c.h.b16 %v273
      %v328 = vpack.c.b16 %v296, %v296
      %v329 = vpack.c.b16 %v297, %v297
      %v330 = vpack.c.b16 %v298, %v298
      %v331 = vpack.c.b16 %v299, %v299
      %v332 = vpack.c.b16 %v300, %v300
      %v333 = vpack.c.b16 %v301, %v301
      %v334 = vpack.c.b16 %v302, %v302
      %v335 = vpack.c.b16 %v303, %v303
      %v336 = vpack.c.b16 %v304, %v304
      %v337 = vpack.c.b16 %v305, %v305
      %v338 = vpack.c.b16 %v306, %v306
      %v339 = vpack.c.b16 %v307, %v307
      %v340 = vpack.c.b16 %v308, %v308
      %v341 = vpack.c.b16 %v309, %v309
      %v342 = vpack.c.b16 %v310, %v310
      %v343 = vpack.c.b16 %v311, %v311
      %v344 = vpack.c.b16 %v312, %v312
      %v345 = vpack.c.b16 %v313, %v313
      %v346 = vpack.c.b16 %v314, %v314
      %v347 = vpack.c.b16 %v315, %v315
      %v348 = vpack.c.b16 %v316, %v316
      %v349 = vpack.c.b16 %v317, %v317
      %v350 = vpack.c.b16 %v318, %v318
      %v351 = vpack.c.b16 %v319, %v319
      %v352 = vpack.c.b16 %v320, %v320
      %v353 = vpack.c.b16 %v321, %v321
      %v354 = vpack.c.b16 %v322, %v322
      %v355 = vpack.c.b16 %v323, %v323
      %v356 = vpack.c.b16 %v324, %v324
      %v357 = vpack.c.b16 %v325, %v325
      %v358 = vpack.c.b16 %v326, %v326
      %v359 = vpack.c.b16 %v327, %v327
      %360 = vrot.lane.b32.xlu0 %v328, 4
      %v361 = vpop.permute.xlu0 %360
      %362 = vrot.lane.b32.xlu0 %v329, 4
      %v363 = vpop.permute.xlu0 %362
      %364 = vrot.lane.b32.xlu0 %v330, 4
      %v365 = vpop.permute.xlu0 %364
      %366 = vrot.lane.b32.xlu0 %v331, 4
      %v367 = vpop.permute.xlu0 %366
      %368 = vrot.lane.b32.xlu0 %v332, 4
      %v369 = vpop.permute.xlu0 %368
      %370 = vrot.lane.b32.xlu0 %v333, 4
      %v371 = vpop.permute.xlu0 %370
      %372 = vrot.lane.b32.xlu0 %v334, 4
      %v373 = vpop.permute.xlu0 %372
      %374 = vrot.lane.b32.xlu0 %v335, 4
      %v375 = vpop.permute.xlu0 %374
      %376 = vrot.lane.b32.xlu0 %v336, 4
      %v377 = vpop.permute.xlu0 %376
      %378 = vrot.lane.b32.xlu0 %v337, 4
      %v379 = vpop.permute.xlu0 %378
      %380 = vrot.lane.b32.xlu0 %v338, 4
      %v381 = vpop.permute.xlu0 %380
      %382 = vrot.lane.b32.xlu0 %v339, 4
      %v383 = vpop.permute.xlu0 %382
      %384 = vrot.lane.b32.xlu0 %v340, 4
      %v385 = vpop.permute.xlu0 %384
      %386 = vrot.lane.b32.xlu0 %v341, 4
      %v387 = vpop.permute.xlu0 %386
      %388 = vrot.lane.b32.xlu0 %v342, 4
      %v389 = vpop.permute.xlu0 %388
      %390 = vrot.lane.b32.xlu0 %v343, 4
      %v391 = vpop.permute.xlu0 %390
      %392 = vrot.lane.b32.xlu0 %v344, 4
      %v393 = vpop.permute.xlu0 %392
      %394 = vrot.lane.b32.xlu0 %v345, 4
      %v395 = vpop.permute.xlu0 %394
      %396 = vrot.lane.b32.xlu0 %v346, 4
      %v397 = vpop.permute.xlu0 %396
      %398 = vrot.lane.b32.xlu0 %v347, 4
      %v399 = vpop.permute.xlu0 %398
      %400 = vrot.lane.b32.xlu0 %v348, 4
      %v401 = vpop.permute.xlu0 %400
      %402 = vrot.lane.b32.xlu0 %v349, 4
      %v403 = vpop.permute.xlu0 %402
      %404 = vrot.lane.b32.xlu0 %v350, 4
      %v405 = vpop.permute.xlu0 %404
      %406 = vrot.lane.b32.xlu0 %v351, 4
      %v407 = vpop.permute.xlu0 %406
      %408 = vrot.lane.b32.xlu0 %v352, 4
      %v409 = vpop.permute.xlu0 %408
      %410 = vrot.lane.b32.xlu0 %v353, 4
      %v411 = vpop.permute.xlu0 %410
      %412 = vrot.lane.b32.xlu0 %v354, 4
      %v413 = vpop.permute.xlu0 %412
      %414 = vrot.lane.b32.xlu0 %v355, 4
      %v415 = vpop.permute.xlu0 %414
      %416 = vrot.lane.b32.xlu0 %v356, 4
      %v417 = vpop.permute.xlu0 %416
      %418 = vrot.lane.b32.xlu0 %v357, 4
      %v419 = vpop.permute.xlu0 %418
      %420 = vrot.lane.b32.xlu0 %v358, 4
      %v421 = vpop.permute.xlu0 %420
      %422 = vrot.lane.b32.xlu0 %v359, 4
      %v423 = vpop.permute.xlu0 %422
      %s456 = scalar_lea.vmem [#allocation2], 8
      %vm457 = vcmask 60448
      %458 = vst.msk [vmem:[%s456] sm:$0xf] %vm457, %v361
      %459 = vst.msk [vmem:[%s456 + $0x4] sm:$0xf] %vm457, %v363
      %460 = vst.msk [vmem:[%s456 + $0x8] sm:$0xf] %vm457, %v365
      %461 = vst.msk [vmem:[%s456 + $0xc] sm:$0xf] %vm457, %v367
      %462 = vst.msk [vmem:[%s456 + $0x10] sm:$0xf] %vm457, %v369
      %463 = vst.msk [vmem:[%s456 + $0x14] sm:$0xf] %vm457, %v371
      %464 = vst.msk [vmem:[%s456 + $0x18] sm:$0xf] %vm457, %v373
      %465 = vst.msk [vmem:[%s456 + $0x1c] sm:$0xf] %vm457, %v375
      %466 = vst.msk [vmem:[%s456 + $0x20] sm:$0xf] %vm457, %v377
      %467 = vst.msk [vmem:[%s456 + $0x24] sm:$0xf] %vm457, %v379
      %468 = vst.msk [vmem:[%s456 + $0x28] sm:$0xf] %vm457, %v381
      %469 = vst.msk [vmem:[%s456 + $0x2c] sm:$0xf] %vm457, %v383
      %470 = vst.msk [vmem:[%s456 + $0x30] sm:$0xf] %vm457, %v385
      %471 = vst.msk [vmem:[%s456 + $0x34] sm:$0xf] %vm457, %v387
      %472 = vst.msk [vmem:[%s456 + $0x38] sm:$0xf] %vm457, %v389
      %473 = vst.msk [vmem:[%s456 + $0x3c] sm:$0xf] %vm457, %v391
      %474 = vst.msk [vmem:[%s456 + $0x40] sm:$0xf] %vm457, %v393
      %475 = vst.msk [vmem:[%s456 + $0x44] sm:$0xf] %vm457, %v395
      %476 = vst.msk [vmem:[%s456 + $0x48] sm:$0xf] %vm457, %v397
      %477 = vst.msk [vmem:[%s456 + $0x4c] sm:$0xf] %vm457, %v399
      %478 = vst.msk [vmem:[%s456 + $0x50] sm:$0xf] %vm457, %v401
      %479 = vst.msk [vmem:[%s456 + $0x54] sm:$0xf] %vm457, %v403
      %480 = vst.msk [vmem:[%s456 + $0x58] sm:$0xf] %vm457, %v405
      %481 = vst.msk [vmem:[%s456 + $0x5c] sm:$0xf] %vm457, %v407
      %482 = vst.msk [vmem:[%s456 + $0x60] sm:$0xf] %vm457, %v409
      %483 = vst.msk [vmem:[%s456 + $0x64] sm:$0xf] %vm457, %v411
      %484 = vst.msk [vmem:[%s456 + $0x68] sm:$0xf] %vm457, %v413
      %485 = vst.msk [vmem:[%s456 + $0x6c] sm:$0xf] %vm457, %v415
      %486 = vst.msk [vmem:[%s456 + $0x70] sm:$0xf] %vm457, %v417
      %487 = vst.msk [vmem:[%s456 + $0x74] sm:$0xf] %vm457, %v419
      %488 = vst.msk [vmem:[%s456 + $0x78] sm:$0xf] %vm457, %v421
      %489 = vst.msk [vmem:[%s456 + $0x7c] sm:$0xf] %vm457, %v423
      %vm490 = vcmask 24576
      %vm491 = vsmask.f32 256
      %vm492 = vmand %vm490, %vm491
      %v493 = vld [vmem:[%s456] sm:$0x1]
      %v494 = vsel %vm492, 0, %v493
      %495 = vst [vmem:[%s456] sm:$0x1] %v494
      %v496 = vld [vmem:[%s456 + $0x8] sm:$0x1]
      %v497 = vsel %vm492, 0, %v496
      %498 = vst [vmem:[%s456 + $0x8] sm:$0x1] %v497
      %v499 = vld [vmem:[%s456 + $0x10] sm:$0x1]
      %v500 = vsel %vm492, 0, %v499
      %501 = vst [vmem:[%s456 + $0x10] sm:$0x1] %v500
      %v502 = vld [vmem:[%s456 + $0x18] sm:$0x1]
      %v503 = vsel %vm492, 0, %v502
      %504 = vst [vmem:[%s456 + $0x18] sm:$0x1] %v503
      %v505 = vld [vmem:[%s456 + $0x20] sm:$0x1]
      %v506 = vsel %vm492, 0, %v505
      %507 = vst [vmem:[%s456 + $0x20] sm:$0x1] %v506
      %v508 = vld [vmem:[%s456 + $0x28] sm:$0x1]
      %v509 = vsel %vm492, 0, %v508
      %510 = vst [vmem:[%s456 + $0x28] sm:$0x1] %v509
      %v511 = vld [vmem:[%s456 + $0x30] sm:$0x1]
      %v512 = vsel %vm492, 0, %v511
      %513 = vst [vmem:[%s456 + $0x30] sm:$0x1] %v512
      %v514 = vld [vmem:[%s456 + $0x38] sm:$0x1]
      %v515 = vsel %vm492, 0, %v514
      %516 = vst [vmem:[%s456 + $0x38] sm:$0x1] %v515
      %v517 = vld [vmem:[%s456 + $0x40] sm:$0x1]
      %v518 = vsel %vm492, 0, %v517
      %519 = vst [vmem:[%s456 + $0x40] sm:$0x1] %v518
      %v520 = vld [vmem:[%s456 + $0x48] sm:$0x1]
      %v521 = vsel %vm492, 0, %v520
      %522 = vst [vmem:[%s456 + $0x48] sm:$0x1] %v521
      %v523 = vld [vmem:[%s456 + $0x50] sm:$0x1]
      %v524 = vsel %vm492, 0, %v523
      %525 = vst [vmem:[%s456 + $0x50] sm:$0x1] %v524
      %v526 = vld [vmem:[%s456 + $0x58] sm:$0x1]
      %v527 = vsel %vm492, 0, %v526
      %528 = vst [vmem:[%s456 + $0x58] sm:$0x1] %v527
      %v529 = vld [vmem:[%s456 + $0x60] sm:$0x1]
      %v530 = vsel %vm492, 0, %v529
      %531 = vst [vmem:[%s456 + $0x60] sm:$0x1] %v530
      %v532 = vld [vmem:[%s456 + $0x68] sm:$0x1]
      %v533 = vsel %vm492, 0, %v532
      %534 = vst [vmem:[%s456 + $0x68] sm:$0x1] %v533
      %v535 = vld [vmem:[%s456 + $0x70] sm:$0x1]
      %v536 = vsel %vm492, 0, %v535
      %537 = vst [vmem:[%s456 + $0x70] sm:$0x1] %v536
      %v538 = vld [vmem:[%s456 + $0x78] sm:$0x1]
      %v539 = vsel %vm492, 0, %v538
      %540 = vst [vmem:[%s456 + $0x78] sm:$0x1] %v539
      %vm541 = vsmask.f32 4368
      %vm542 = vmor %vm491, %vm541
      %v544 = vshrl.u32 %v328, 16
      %v546 = vrot.slane %v544, 7
      %v547 = vshll.u32 %v328, 16
      %v549 = vor.u32 %v546, %v547
      %v550 = vrot.slane %v546, 4
      %v552 = vshrl.u32 %v329, 16
      %v554 = vrot.slane %v552, 7
      %v555 = vshll.u32 %v329, 16
      %v557 = vor.u32 %v554, %v555
      %v558 = vsel %vm542, %v550, %v557
      %v560 = vshrl.u32 %v330, 16
      %v562 = vrot.slane %v560, 7
      %v563 = vshll.u32 %v330, 16
      %v565 = vor.u32 %v562, %v563
      %v566 = vrot.slane %v562, 4
      %v568 = vshrl.u32 %v331, 16
      %v570 = vrot.slane %v568, 7
      %v571 = vshll.u32 %v331, 16
      %v573 = vor.u32 %v570, %v571
      %v574 = vsel %vm542, %v566, %v573
      %v576 = vshrl.u32 %v332, 16
      %v578 = vrot.slane %v576, 7
      %v579 = vshll.u32 %v332, 16
      %v581 = vor.u32 %v578, %v579
      %v582 = vrot.slane %v578, 4
      %v584 = vshrl.u32 %v333, 16
      %v586 = vrot.slane %v584, 7
      %v587 = vshll.u32 %v333, 16
      %v589 = vor.u32 %v586, %v587
      %v590 = vsel %vm542, %v582, %v589
      %v592 = vshrl.u32 %v334, 16
      %v594 = vrot.slane %v592, 7
      %v595 = vshll.u32 %v334, 16
      %v597 = vor.u32 %v594, %v595
      %v598 = vrot.slane %v594, 4
      %v600 = vshrl.u32 %v335, 16
      %v602 = vrot.slane %v600, 7
      %v603 = vshll.u32 %v335, 16
      %v605 = vor.u32 %v602, %v603
      %v606 = vsel %vm542, %v598, %v605
      %v608 = vshrl.u32 %v336, 16
      %v610 = vrot.slane %v608, 7
      %v611 = vshll.u32 %v336, 16
      %v613 = vor.u32 %v610, %v611
      %v614 = vrot.slane %v610, 4
      %v616 = vshrl.u32 %v337, 16
      %v618 = vrot.slane %v616, 7
      %v619 = vshll.u32 %v337, 16
      %v621 = vor.u32 %v618, %v619
      %v622 = vsel %vm542, %v614, %v621
      %v624 = vshrl.u32 %v338, 16
      %v626 = vrot.slane %v624, 7
      %v627 = vshll.u32 %v338, 16
      %v629 = vor.u32 %v626, %v627
      %v630 = vrot.slane %v626, 4
      %v632 = vshrl.u32 %v339, 16
      %v634 = vrot.slane %v632, 7
      %v635 = vshll.u32 %v339, 16
      %v637 = vor.u32 %v634, %v635
      %v638 = vsel %vm542, %v630, %v637
      %v640 = vshrl.u32 %v340, 16
      %v642 = vrot.slane %v640, 7
      %v643 = vshll.u32 %v340, 16
      %v645 = vor.u32 %v642, %v643
      %v646 = vrot.slane %v642, 4
      %v648 = vshrl.u32 %v341, 16
      %v650 = vrot.slane %v648, 7
      %v651 = vshll.u32 %v341, 16
      %v653 = vor.u32 %v650, %v651
      %v654 = vsel %vm542, %v646, %v653
      %v656 = vshrl.u32 %v342, 16
      %v658 = vrot.slane %v656, 7
      %v659 = vshll.u32 %v342, 16
      %v661 = vor.u32 %v658, %v659
      %v662 = vrot.slane %v658, 4
      %v664 = vshrl.u32 %v343, 16
      %v666 = vrot.slane %v664, 7
      %v667 = vshll.u32 %v343, 16
      %v669 = vor.u32 %v666, %v667
      %v670 = vsel %vm542, %v662, %v669
      %v672 = vshrl.u32 %v344, 16
      %v674 = vrot.slane %v672, 7
      %v675 = vshll.u32 %v344, 16
      %v677 = vor.u32 %v674, %v675
      %v678 = vrot.slane %v674, 4
      %v680 = vshrl.u32 %v345, 16
      %v682 = vrot.slane %v680, 7
      %v683 = vshll.u32 %v345, 16
      %v685 = vor.u32 %v682, %v683
      %v686 = vsel %vm542, %v678, %v685
      %v688 = vshrl.u32 %v346, 16
      %v690 = vrot.slane %v688, 7
      %v691 = vshll.u32 %v346, 16
      %v693 = vor.u32 %v690, %v691
      %v694 = vrot.slane %v690, 4
      %v696 = vshrl.u32 %v347, 16
      %v698 = vrot.slane %v696, 7
      %v699 = vshll.u32 %v347, 16
      %v701 = vor.u32 %v698, %v699
      %v702 = vsel %vm542, %v694, %v701
      %v704 = vshrl.u32 %v348, 16
      %v706 = vrot.slane %v704, 7
      %v707 = vshll.u32 %v348, 16
      %v709 = vor.u32 %v706, %v707
      %v710 = vrot.slane %v706, 4
      %v712 = vshrl.u32 %v349, 16
      %v714 = vrot.slane %v712, 7
      %v715 = vshll.u32 %v349, 16
      %v717 = vor.u32 %v714, %v715
      %v718 = vsel %vm542, %v710, %v717
      %v720 = vshrl.u32 %v350, 16
      %v722 = vrot.slane %v720, 7
      %v723 = vshll.u32 %v350, 16
      %v725 = vor.u32 %v722, %v723
      %v726 = vrot.slane %v722, 4
      %v728 = vshrl.u32 %v351, 16
      %v730 = vrot.slane %v728, 7
      %v731 = vshll.u32 %v351, 16
      %v733 = vor.u32 %v730, %v731
      %v734 = vsel %vm542, %v726, %v733
      %v736 = vshrl.u32 %v352, 16
      %v738 = vrot.slane %v736, 7
      %v739 = vshll.u32 %v352, 16
      %v741 = vor.u32 %v738, %v739
      %v742 = vrot.slane %v738, 4
      %v744 = vshrl.u32 %v353, 16
      %v746 = vrot.slane %v744, 7
      %v747 = vshll.u32 %v353, 16
      %v749 = vor.u32 %v746, %v747
      %v750 = vsel %vm542, %v742, %v749
      %v752 = vshrl.u32 %v354, 16
      %v754 = vrot.slane %v752, 7
      %v755 = vshll.u32 %v354, 16
      %v757 = vor.u32 %v754, %v755
      %v758 = vrot.slane %v754, 4
      %v760 = vshrl.u32 %v355, 16
      %v762 = vrot.slane %v760, 7
      %v763 = vshll.u32 %v355, 16
      %v765 = vor.u32 %v762, %v763
      %v766 = vsel %vm542, %v758, %v765
      %v768 = vshrl.u32 %v356, 16
      %v770 = vrot.slane %v768, 7
      %v771 = vshll.u32 %v356, 16
      %v773 = vor.u32 %v770, %v771
      %v774 = vrot.slane %v770, 4
      %v776 = vshrl.u32 %v357, 16
      %v778 = vrot.slane %v776, 7
      %v779 = vshll.u32 %v357, 16
      %v781 = vor.u32 %v778, %v779
      %v782 = vsel %vm542, %v774, %v781
      %v784 = vshrl.u32 %v358, 16
      %v786 = vrot.slane %v784, 7
      %v787 = vshll.u32 %v358, 16
      %v789 = vor.u32 %v786, %v787
      %v790 = vrot.slane %v786, 4
      %v792 = vshrl.u32 %v359, 16
      %v794 = vrot.slane %v792, 7
      %v795 = vshll.u32 %v359, 16
      %v797 = vor.u32 %v794, %v795
      %v798 = vsel %vm542, %v790, %v797
      %vm831 = vcmask 27648
      %vm832 = vsmask.f32 7938
      %vm833 = vmand %vm831, %vm832
      %v834 = vld [vmem:[%s456] sm:$0xf]
      %v835 = vsel %vm833, %v549, %v834
      %836 = vst [vmem:[%s456] sm:$0xf] %v835
      %vm837 = vcmask 27648
      %838 = vst.msk [vmem:[%s456 + $0x4] sm:$0xf] %vm837, %v558
      %v839 = vld [vmem:[%s456 + $0x8] sm:$0xf]
      %v840 = vsel %vm833, %v565, %v839
      %841 = vst [vmem:[%s456 + $0x8] sm:$0xf] %v840
      %842 = vst.msk [vmem:[%s456 + $0xc] sm:$0xf] %vm837, %v574
      %v843 = vld [vmem:[%s456 + $0x10] sm:$0xf]
      %v844 = vsel %vm833, %v581, %v843
      %845 = vst [vmem:[%s456 + $0x10] sm:$0xf] %v844
      %846 = vst.msk [vmem:[%s456 + $0x14] sm:$0xf] %vm837, %v590
      %v847 = vld [vmem:[%s456 + $0x18] sm:$0xf]
      %v848 = vsel %vm833, %v597, %v847
      %849 = vst [vmem:[%s456 + $0x18] sm:$0xf] %v848
      %850 = vst.msk [vmem:[%s456 + $0x1c] sm:$0xf] %vm837, %v606
      %v851 = vld [vmem:[%s456 + $0x20] sm:$0xf]
      %v852 = vsel %vm833, %v613, %v851
      %853 = vst [vmem:[%s456 + $0x20] sm:$0xf] %v852
      %854 = vst.msk [vmem:[%s456 + $0x24] sm:$0xf] %vm837, %v622
      %v855 = vld [vmem:[%s456 + $0x28] sm:$0xf]
      %v856 = vsel %vm833, %v629, %v855
      %857 = vst [vmem:[%s456 + $0x28] sm:$0xf] %v856
      %858 = vst.msk [vmem:[%s456 + $0x2c] sm:$0xf] %vm837, %v638
      %v859 = vld [vmem:[%s456 + $0x30] sm:$0xf]
      %v860 = vsel %vm833, %v645, %v859
      %861 = vst [vmem:[%s456 + $0x30] sm:$0xf] %v860
      %862 = vst.msk [vmem:[%s456 + $0x34] sm:$0xf] %vm837, %v654
      %v863 = vld [vmem:[%s456 + $0x38] sm:$0xf]
      %v864 = vsel %vm833, %v661, %v863
      %865 = vst [vmem:[%s456 + $0x38] sm:$0xf] %v864
      %866 = vst.msk [vmem:[%s456 + $0x3c] sm:$0xf] %vm837, %v670
      %v867 = vld [vmem:[%s456 + $0x40] sm:$0xf]
      %v868 = vsel %vm833, %v677, %v867
      %869 = vst [vmem:[%s456 + $0x40] sm:$0xf] %v868
      %870 = vst.msk [vmem:[%s456 + $0x44] sm:$0xf] %vm837, %v686
      %v871 = vld [vmem:[%s456 + $0x48] sm:$0xf]
      %v872 = vsel %vm833, %v693, %v871
      %873 = vst [vmem:[%s456 + $0x48] sm:$0xf] %v872
      %874 = vst.msk [vmem:[%s456 + $0x4c] sm:$0xf] %vm837, %v702
      %v875 = vld [vmem:[%s456 + $0x50] sm:$0xf]
      %v876 = vsel %vm833, %v709, %v875
      %877 = vst [vmem:[%s456 + $0x50] sm:$0xf] %v876
      %878 = vst.msk [vmem:[%s456 + $0x54] sm:$0xf] %vm837, %v718
      %v879 = vld [vmem:[%s456 + $0x58] sm:$0xf]
      %v880 = vsel %vm833, %v725, %v879
      %881 = vst [vmem:[%s456 + $0x58] sm:$0xf] %v880
      %882 = vst.msk [vmem:[%s456 + $0x5c] sm:$0xf] %vm837, %v734
      %v883 = vld [vmem:[%s456 + $0x60] sm:$0xf]
      %v884 = vsel %vm833, %v741, %v883
      %885 = vst [vmem:[%s456 + $0x60] sm:$0xf] %v884
      %886 = vst.msk [vmem:[%s456 + $0x64] sm:$0xf] %vm837, %v750
      %v887 = vld [vmem:[%s456 + $0x68] sm:$0xf]
      %v888 = vsel %vm833, %v757, %v887
      %889 = vst [vmem:[%s456 + $0x68] sm:$0xf] %v888
      %890 = vst.msk [vmem:[%s456 + $0x6c] sm:$0xf] %vm837, %v766
      %v891 = vld [vmem:[%s456 + $0x70] sm:$0xf]
      %v892 = vsel %vm833, %v773, %v891
      %893 = vst [vmem:[%s456 + $0x70] sm:$0xf] %v892
      %894 = vst.msk [vmem:[%s456 + $0x74] sm:$0xf] %vm837, %v782
      %v895 = vld [vmem:[%s456 + $0x78] sm:$0xf]
      %v896 = vsel %vm833, %v789, %v895
      %897 = vst [vmem:[%s456 + $0x78] sm:$0xf] %v896
      %898 = vst.msk [vmem:[%s456 + $0x7c] sm:$0xf] %vm837, %v798
      %vm899 = vsmask.f32 3328
      %vm900 = vsmask.f32 7440
      %vm901 = vmor %vm899, %vm900
      %v902 = vrot.slane %v544, 4
      %v903 = vrot.slane %v547, 5
      %v904 = vor.u32 %v902, %v903
      %v905 = vrot.slane %v904, 4
      %v906 = vrot.slane %v555, 5
      %v907 = vsel %vm901, %v905, %v906
      %v908 = vrot.slane %v552, 4
      %v909 = vor.u32 %v908, %v906
      %v910 = vrot.slane %v909, 4
      %v911 = vrot.slane %v560, 4
      %v912 = vrot.slane %v563, 5
      %v913 = vor.u32 %v911, %v912
      %v914 = vrot.slane %v913, 4
      %v915 = vrot.slane %v571, 5
      %v916 = vsel %vm901, %v914, %v915
      %v917 = vrot.slane %v568, 4
      %v918 = vor.u32 %v917, %v915
      %v919 = vrot.slane %v918, 4
      %v920 = vrot.slane %v576, 4
      %v921 = vrot.slane %v579, 5
      %v922 = vor.u32 %v920, %v921
      %v923 = vrot.slane %v922, 4
      %v924 = vrot.slane %v587, 5
      %v925 = vsel %vm901, %v923, %v924
      %v926 = vrot.slane %v584, 4
      %v927 = vor.u32 %v926, %v924
      %v928 = vrot.slane %v927, 4
      %v929 = vrot.slane %v592, 4
      %v930 = vrot.slane %v595, 5
      %v931 = vor.u32 %v929, %v930
      %v932 = vrot.slane %v931, 4
      %v933 = vrot.slane %v603, 5
      %v934 = vsel %vm901, %v932, %v933
      %v935 = vrot.slane %v600, 4
      %v936 = vor.u32 %v935, %v933
      %v937 = vrot.slane %v936, 4
      %v938 = vrot.slane %v608, 4
      %v939 = vrot.slane %v611, 5
      %v940 = vor.u32 %v938, %v939
      %v941 = vrot.slane %v940, 4
      %v942 = vrot.slane %v619, 5
      %v943 = vsel %vm901, %v941, %v942
      %v944 = vrot.slane %v616, 4
      %v945 = vor.u32 %v944, %v942
      %v946 = vrot.slane %v945, 4
      %v947 = vrot.slane %v624, 4
      %v948 = vrot.slane %v627, 5
      %v949 = vor.u32 %v947, %v948
      %v950 = vrot.slane %v949, 4
      %v951 = vrot.slane %v635, 5
      %v952 = vsel %vm901, %v950, %v951
      %v953 = vrot.slane %v632, 4
      %v954 = vor.u32 %v953, %v951
      %v955 = vrot.slane %v954, 4
      %v956 = vrot.slane %v640, 4
      %v957 = vrot.slane %v643, 5
      %v958 = vor.u32 %v956, %v957
      %v959 = vrot.slane %v958, 4
      %v960 = vrot.slane %v651, 5
      %v961 = vsel %vm901, %v959, %v960
      %v962 = vrot.slane %v648, 4
      %v963 = vor.u32 %v962, %v960
      %v964 = vrot.slane %v963, 4
      %v965 = vrot.slane %v656, 4
      %v966 = vrot.slane %v659, 5
      %v967 = vor.u32 %v965, %v966
      %v968 = vrot.slane %v967, 4
      %v969 = vrot.slane %v667, 5
      %v970 = vsel %vm901, %v968, %v969
      %v971 = vrot.slane %v664, 4
      %v972 = vor.u32 %v971, %v969
      %v973 = vrot.slane %v972, 4
      %v974 = vrot.slane %v672, 4
      %v975 = vrot.slane %v675, 5
      %v976 = vor.u32 %v974, %v975
      %v977 = vrot.slane %v976, 4
      %v978 = vrot.slane %v683, 5
      %v979 = vsel %vm901, %v977, %v978
      %v980 = vrot.slane %v680, 4
      %v981 = vor.u32 %v980, %v978
      %v982 = vrot.slane %v981, 4
      %v983 = vrot.slane %v688, 4
      %v984 = vrot.slane %v691, 5
      %v985 = vor.u32 %v983, %v984
      %v986 = vrot.slane %v985, 4
      %v987 = vrot.slane %v699, 5
      %v988 = vsel %vm901, %v986, %v987
      %v989 = vrot.slane %v696, 4
      %v990 = vor.u32 %v989, %v987
      %v991 = vrot.slane %v990, 4
      %v992 = vrot.slane %v704, 4
      %v993 = vrot.slane %v707, 5
      %v994 = vor.u32 %v992, %v993
      %v995 = vrot.slane %v994, 4
      %v996 = vrot.slane %v715, 5
      %v997 = vsel %vm901, %v995, %v996
      %v998 = vrot.slane %v712, 4
      %v999 = vor.u32 %v998, %v996
      %v1000 = vrot.slane %v999, 4
      %v1001 = vrot.slane %v720, 4
      %v1002 = vrot.slane %v723, 5
      %v1003 = vor.u32 %v1001, %v1002
      %v1004 = vrot.slane %v1003, 4
      %v1005 = vrot.slane %v731, 5
      %v1006 = vsel %vm901, %v1004, %v1005
      %v1007 = vrot.slane %v728, 4
      %v1008 = vor.u32 %v1007, %v1005
      %v1009 = vrot.slane %v1008, 4
      %v1010 = vrot.slane %v736, 4
      %v1011 = vrot.slane %v739, 5
      %v1012 = vor.u32 %v1010, %v1011
      %v1013 = vrot.slane %v1012, 4
      %v1014 = vrot.slane %v747, 5
      %v1015 = vsel %vm901, %v1013, %v1014
      %v1016 = vrot.slane %v744, 4
      %v1017 = vor.u32 %v1016, %v1014
      %v1018 = vrot.slane %v1017, 4
      %v1019 = vrot.slane %v752, 4
      %v1020 = vrot.slane %v755, 5
      %v1021 = vor.u32 %v1019, %v1020
      %v1022 = vrot.slane %v1021, 4
      %v1023 = vrot.slane %v763, 5
      %v1024 = vsel %vm901, %v1022, %v1023
      %v1025 = vrot.slane %v760, 4
      %v1026 = vor.u32 %v1025, %v1023
      %v1027 = vrot.slane %v1026, 4
      %v1028 = vrot.slane %v768, 4
      %v1029 = vrot.slane %v771, 5
      %v1030 = vor.u32 %v1028, %v1029
      %v1031 = vrot.slane %v1030, 4
      %v1032 = vrot.slane %v779, 5
      %v1033 = vsel %vm901, %v1031, %v1032
      %v1034 = vrot.slane %v776, 4
      %v1035 = vor.u32 %v1034, %v1032
      %v1036 = vrot.slane %v1035, 4
      %v1037 = vrot.slane %v784, 4
      %v1038 = vrot.slane %v787, 5
      %v1039 = vor.u32 %v1037, %v1038
      %v1040 = vrot.slane %v1039, 4
      %v1041 = vrot.slane %v795, 5
      %v1042 = vsel %vm901, %v1040, %v1041
      %v1043 = vrot.slane %v792, 4
      %v1044 = vor.u32 %v1043, %v1041
      %v1045 = vrot.slane %v1044, 4
      %1046 = vrot.lane.b32.xlu0 %v907, 8
      %v1047 = vpop.permute.xlu0 %1046
      %1048 = vrot.lane.b32.xlu0 %v910, 8
      %v1049 = vpop.permute.xlu0 %1048
      %1050 = vrot.lane.b32.xlu0 %v916, 8
      %v1051 = vpop.permute.xlu0 %1050
      %1052 = vrot.lane.b32.xlu0 %v919, 8
      %v1053 = vpop.permute.xlu0 %1052
      %1054 = vrot.lane.b32.xlu0 %v925, 8
      %v1055 = vpop.permute.xlu0 %1054
      %1056 = vrot.lane.b32.xlu0 %v928, 8
      %v1057 = vpop.permute.xlu0 %1056
      %1058 = vrot.lane.b32.xlu0 %v934, 8
      %v1059 = vpop.permute.xlu0 %1058
      %1060 = vrot.lane.b32.xlu0 %v937, 8
      %v1061 = vpop.permute.xlu0 %1060
      %1062 = vrot.lane.b32.xlu0 %v943, 8
      %v1063 = vpop.permute.xlu0 %1062
      %1064 = vrot.lane.b32.xlu0 %v946, 8
      %v1065 = vpop.permute.xlu0 %1064
      %1066 = vrot.lane.b32.xlu0 %v952, 8
      %v1067 = vpop.permute.xlu0 %1066
      %1068 = vrot.lane.b32.xlu0 %v955, 8
      %v1069 = vpop.permute.xlu0 %1068
      %1070 = vrot.lane.b32.xlu0 %v961, 8
      %v1071 = vpop.permute.xlu0 %1070
      %1072 = vrot.lane.b32.xlu0 %v964, 8
      %v1073 = vpop.permute.xlu0 %1072
      %1074 = vrot.lane.b32.xlu0 %v970, 8
      %v1075 = vpop.permute.xlu0 %1074
      %1076 = vrot.lane.b32.xlu0 %v973, 8
      %v1077 = vpop.permute.xlu0 %1076
      %1078 = vrot.lane.b32.xlu0 %v979, 8
      %v1079 = vpop.permute.xlu0 %1078
      %1080 = vrot.lane.b32.xlu0 %v982, 8
      %v1081 = vpop.permute.xlu0 %1080
      %1082 = vrot.lane.b32.xlu0 %v988, 8
      %v1083 = vpop.permute.xlu0 %1082
      %1084 = vrot.lane.b32.xlu0 %v991, 8
      %v1085 = vpop.permute.xlu0 %1084
      %1086 = vrot.lane.b32.xlu0 %v997, 8
      %v1087 = vpop.permute.xlu0 %1086
      %1088 = vrot.lane.b32.xlu0 %v1000, 8
      %v1089 = vpop.permute.xlu0 %1088
      %1090 = vrot.lane.b32.xlu0 %v1006, 8
      %v1091 = vpop.permute.xlu0 %1090
      %1092 = vrot.lane.b32.xlu0 %v1009, 8
      %v1093 = vpop.permute.xlu0 %1092
      %1094 = vrot.lane.b32.xlu0 %v1015, 8
      %v1095 = vpop.permute.xlu0 %1094
      %1096 = vrot.lane.b32.xlu0 %v1018, 8
      %v1097 = vpop.permute.xlu0 %1096
      %1098 = vrot.lane.b32.xlu0 %v1024, 8
      %v1099 = vpop.permute.xlu0 %1098
      %1100 = vrot.lane.b32.xlu0 %v1027, 8
      %v1101 = vpop.permute.xlu0 %1100
      %1102 = vrot.lane.b32.xlu0 %v1033, 8
      %v1103 = vpop.permute.xlu0 %1102
      %1104 = vrot.lane.b32.xlu0 %v1036, 8
      %v1105 = vpop.permute.xlu0 %1104
      %1106 = vrot.lane.b32.xlu0 %v1042, 8
      %v1107 = vpop.permute.xlu0 %1106
      %1108 = vrot.lane.b32.xlu0 %v1045, 8
      %v1109 = vpop.permute.xlu0 %1108
      %vm1142 = vcmask 93248
      %1143 = vst.msk [vmem:[%s456] sm:$0xf] %vm1142, %v1047
      %vm1144 = vcmask 93248
      %vm1145 = vmand %vm1144, %vm899
      %v1146 = vld [vmem:[%s456 + $0x4] sm:$0xf]
      %v1147 = vsel %vm1145, %v1049, %v1146
      %1148 = vst [vmem:[%s456 + $0x4] sm:$0xf] %v1147
      %1149 = vst.msk [vmem:[%s456 + $0x8] sm:$0xf] %vm1142, %v1051
      %v1150 = vld [vmem:[%s456 + $0xc] sm:$0xf]
      %v1151 = vsel %vm1145, %v1053, %v1150
      %1152 = vst [vmem:[%s456 + $0xc] sm:$0xf] %v1151
      %1153 = vst.msk [vmem:[%s456 + $0x10] sm:$0xf] %vm1142, %v1055
      %v1154 = vld [vmem:[%s456 + $0x14] sm:$0xf]
      %v1155 = vsel %vm1145, %v1057, %v1154
      %1156 = vst [vmem:[%s456 + $0x14] sm:$0xf] %v1155
      %1157 = vst.msk [vmem:[%s456 + $0x18] sm:$0xf] %vm1142, %v1059
      %v1158 = vld [vmem:[%s456 + $0x1c] sm:$0xf]
      %v1159 = vsel %vm1145, %v1061, %v1158
      %1160 = vst [vmem:[%s456 + $0x1c] sm:$0xf] %v1159
      %1161 = vst.msk [vmem:[%s456 + $0x20] sm:$0xf] %vm1142, %v1063
      %v1162 = vld [vmem:[%s456 + $0x24] sm:$0xf]
      %v1163 = vsel %vm1145, %v1065, %v1162
      %1164 = vst [vmem:[%s456 + $0x24] sm:$0xf] %v1163
      %1165 = vst.msk [vmem:[%s456 + $0x28] sm:$0xf] %vm1142, %v1067
      %v1166 = vld [vmem:[%s456 + $0x2c] sm:$0xf]
      %v1167 = vsel %vm1145, %v1069, %v1166
      %1168 = vst [vmem:[%s456 + $0x2c] sm:$0xf] %v1167
      %1169 = vst.msk [vmem:[%s456 + $0x30] sm:$0xf] %vm1142, %v1071
      %v1170 = vld [vmem:[%s456 + $0x34] sm:$0xf]
      %v1171 = vsel %vm1145, %v1073, %v1170
      %1172 = vst [vmem:[%s456 + $0x34] sm:$0xf] %v1171
      %1173 = vst.msk [vmem:[%s456 + $0x38] sm:$0xf] %vm1142, %v1075
      %v1174 = vld [vmem:[%s456 + $0x3c] sm:$0xf]
      %v1175 = vsel %vm1145, %v1077, %v1174
      %1176 = vst [vmem:[%s456 + $0x3c] sm:$0xf] %v1175
      %1177 = vst.msk [vmem:[%s456 + $0x40] sm:$0xf] %vm1142, %v1079
      %v1178 = vld [vmem:[%s456 + $0x44] sm:$0xf]
      %v1179 = vsel %vm1145, %v1081, %v1178
      %1180 = vst [vmem:[%s456 + $0x44] sm:$0xf] %v1179
      %1181 = vst.msk [vmem:[%s456 + $0x48] sm:$0xf] %vm1142, %v1083
      %v1182 = vld [vmem:[%s456 + $0x4c] sm:$0xf]
      %v1183 = vsel %vm1145, %v1085, %v1182
      %1184 = vst [vmem:[%s456 + $0x4c] sm:$0xf] %v1183
      %1185 = vst.msk [vmem:[%s456 + $0x50] sm:$0xf] %vm1142, %v1087
      %v1186 = vld [vmem:[%s456 + $0x54] sm:$0xf]
      %v1187 = vsel %vm1145, %v1089, %v1186
      %1188 = vst [vmem:[%s456 + $0x54] sm:$0xf] %v1187
      %1189 = vst.msk [vmem:[%s456 + $0x58] sm:$0xf] %vm1142, %v1091
      %v1190 = vld [vmem:[%s456 + $0x5c] sm:$0xf]
      %v1191 = vsel %vm1145, %v1093, %v1190
      %1192 = vst [vmem:[%s456 + $0x5c] sm:$0xf] %v1191
      %1193 = vst.msk [vmem:[%s456 + $0x60] sm:$0xf] %vm1142, %v1095
      %v1194 = vld [vmem:[%s456 + $0x64] sm:$0xf]
      %v1195 = vsel %vm1145, %v1097, %v1194
      %1196 = vst [vmem:[%s456 + $0x64] sm:$0xf] %v1195
      %1197 = vst.msk [vmem:[%s456 + $0x68] sm:$0xf] %vm1142, %v1099
      %v1198 = vld [vmem:[%s456 + $0x6c] sm:$0xf]
      %v1199 = vsel %vm1145, %v1101, %v1198
      %1200 = vst [vmem:[%s456 + $0x6c] sm:$0xf] %v1199
      %1201 = vst.msk [vmem:[%s456 + $0x70] sm:$0xf] %vm1142, %v1103
      %v1202 = vld [vmem:[%s456 + $0x74] sm:$0xf]
      %v1203 = vsel %vm1145, %v1105, %v1202
      %1204 = vst [vmem:[%s456 + $0x74] sm:$0xf] %v1203
      %1205 = vst.msk [vmem:[%s456 + $0x78] sm:$0xf] %vm1142, %v1107
      %v1206 = vld [vmem:[%s456 + $0x7c] sm:$0xf]
      %v1207 = vsel %vm1145, %v1109, %v1206
      %1208 = vst [vmem:[%s456 + $0x7c] sm:$0xf] %v1207
      %vm1209 = vcmask 93251
      %vm1210 = vsmask.f32 7950
      %vm1211 = vmand %vm1209, %vm1210
      %v1212 = vld [vmem:[%s456 + $0x4] sm:$0x8]
      %v1213 = vsel %vm1211, 0, %v1212
      %1214 = vst [vmem:[%s456 + $0x4] sm:$0x8] %v1213
      %v1215 = vld [vmem:[%s456 + $0xc] sm:$0x8]
      %v1216 = vsel %vm1211, 0, %v1215
      %1217 = vst [vmem:[%s456 + $0xc] sm:$0x8] %v1216
      %v1218 = vld [vmem:[%s456 + $0x14] sm:$0x8]
      %v1219 = vsel %vm1211, 0, %v1218
      %1220 = vst [vmem:[%s456 + $0x14] sm:$0x8] %v1219
      %v1221 = vld [vmem:[%s456 + $0x1c] sm:$0x8]
      %v1222 = vsel %vm1211, 0, %v1221
      %1223 = vst [vmem:[%s456 + $0x1c] sm:$0x8] %v1222
      %v1224 = vld [vmem:[%s456 + $0x24] sm:$0x8]
      %v1225 = vsel %vm1211, 0, %v1224
      %1226 = vst [vmem:[%s456 + $0x24] sm:$0x8] %v1225
      %v1227 = vld [vmem:[%s456 + $0x2c] sm:$0x8]
      %v1228 = vsel %vm1211, 0, %v1227
      %1229 = vst [vmem:[%s456 + $0x2c] sm:$0x8] %v1228
      %v1230 = vld [vmem:[%s456 + $0x34] sm:$0x8]
      %v1231 = vsel %vm1211, 0, %v1230
      %1232 = vst [vmem:[%s456 + $0x34] sm:$0x8] %v1231
      %v1233 = vld [vmem:[%s456 + $0x3c] sm:$0x8]
      %v1234 = vsel %vm1211, 0, %v1233
      %1235 = vst [vmem:[%s456 + $0x3c] sm:$0x8] %v1234
      %v1236 = vld [vmem:[%s456 + $0x44] sm:$0x8]
      %v1237 = vsel %vm1211, 0, %v1236
      %1238 = vst [vmem:[%s456 + $0x44] sm:$0x8] %v1237
      %v1239 = vld [vmem:[%s456 + $0x4c] sm:$0x8]
      %v1240 = vsel %vm1211, 0, %v1239
      %1241 = vst [vmem:[%s456 + $0x4c] sm:$0x8] %v1240
      %v1242 = vld [vmem:[%s456 + $0x54] sm:$0x8]
      %v1243 = vsel %vm1211, 0, %v1242
      %1244 = vst [vmem:[%s456 + $0x54] sm:$0x8] %v1243
      %v1245 = vld [vmem:[%s456 + $0x5c] sm:$0x8]
      %v1246 = vsel %vm1211, 0, %v1245
      %1247 = vst [vmem:[%s456 + $0x5c] sm:$0x8] %v1246
      %v1248 = vld [vmem:[%s456 + $0x64] sm:$0x8]
      %v1249 = vsel %vm1211, 0, %v1248
      %1250 = vst [vmem:[%s456 + $0x64] sm:$0x8] %v1249
      %v1251 = vld [vmem:[%s456 + $0x6c] sm:$0x8]
      %v1252 = vsel %vm1211, 0, %v1251
      %1253 = vst [vmem:[%s456 + $0x6c] sm:$0x8] %v1252
      %v1254 = vld [vmem:[%s456 + $0x74] sm:$0x8]
      %v1255 = vsel %vm1211, 0, %v1254
      %1256 = vst [vmem:[%s456 + $0x74] sm:$0x8] %v1255
      %v1257 = vld [vmem:[%s456 + $0x7c] sm:$0x8]
      %v1258 = vsel %vm1211, 0, %v1257
      %1259 = vst [vmem:[%s456 + $0x7c] sm:$0x8] %v1258
      %v1260 = vld [vmem:[#allocation2] sm:$0xf]
      %v1261 = vld [vmem:[#allocation2 + $0x4] sm:$0xf]
      %v1262 = vld [vmem:[#allocation2 + $0x8] sm:$0xf]
      %v1263 = vld [vmem:[#allocation2 + $0xc] sm:$0xf]
      %v1264 = vld [vmem:[#allocation2 + $0x10] sm:$0xf]
      %v1265 = vld [vmem:[#allocation2 + $0x14] sm:$0xf]
      %v1266 = vld [vmem:[#allocation2 + $0x18] sm:$0xf]
      %v1267 = vld [vmem:[#allocation2 + $0x1c] sm:$0xf]
      %v1268 = vld [vmem:[#allocation2 + $0x20] sm:$0xf]
      %v1269 = vld [vmem:[#allocation2 + $0x24] sm:$0xf]
      %v1270 = vld [vmem:[#allocation2 + $0x28] sm:$0xf]
      %v1271 = vld [vmem:[#allocation2 + $0x2c] sm:$0xf]
      %v1272 = vld [vmem:[#allocation2 + $0x30] sm:$0xf]
      %v1273 = vld [vmem:[#allocation2 + $0x34] sm:$0xf]
      %v1274 = vld [vmem:[#allocation2 + $0x38] sm:$0xf]
      %v1275 = vld [vmem:[#allocation2 + $0x3c] sm:$0xf]
      %v1276 = vld [vmem:[#allocation2 + $0x40] sm:$0xf]
      %v1277 = vld [vmem:[#allocation2 + $0x44] sm:$0xf]
      %v1278 = vld [vmem:[#allocation2 + $0x48] sm:$0xf]
      %v1279 = vld [vmem:[#allocation2 + $0x4c] sm:$0xf]
      %v1280 = vld [vmem:[#allocation2 + $0x50] sm:$0xf]
      %v1281 = vld [vmem:[#allocation2 + $0x54] sm:$0xf]
      %v1282 = vld [vmem:[#allocation2 + $0x58] sm:$0xf]
      %v1283 = vld [vmem:[#allocation2 + $0x5c] sm:$0xf]
      %v1284 = vld [vmem:[#allocation2 + $0x60] sm:$0xf]
      %v1285 = vld [vmem:[#allocation2 + $0x64] sm:$0xf]
      %v1286 = vld [vmem:[#allocation2 + $0x68] sm:$0xf]
      %v1287 = vld [vmem:[#allocation2 + $0x6c] sm:$0xf]
      %v1288 = vld [vmem:[#allocation2 + $0x70] sm:$0xf]
      %v1289 = vld [vmem:[#allocation2 + $0x74] sm:$0xf]
      %v1290 = vld [vmem:[#allocation2 + $0x78] sm:$0xf]
      %v1291 = vld [vmem:[#allocation2 + $0x7c] sm:$0xf]
      %v1292 = vld [vmem:[%s1] sm:$0xf]
      %v1293 = vld [vmem:[%s1 + $0x4] sm:$0x3]
      %v1294 = vld [vmem:[%s456] sm:$0xf]
      %v1295 = vld [vmem:[%s456 + $0x4] sm:$0xf]
      %v1296 = vld [vmem:[%s456 + $0x8] sm:$0xf]
      %v1297 = vld [vmem:[%s456 + $0xc] sm:$0xf]
      %v1298 = vld [vmem:[%s456 + $0x10] sm:$0xf]
      %v1299 = vld [vmem:[%s456 + $0x14] sm:$0xf]
      %v1300 = vld [vmem:[%s456 + $0x18] sm:$0xf]
      %v1301 = vld [vmem:[%s456 + $0x1c] sm:$0xf]
      %v1302 = vld [vmem:[%s456 + $0x20] sm:$0xf]
      %v1303 = vld [vmem:[%s456 + $0x24] sm:$0xf]
      %v1304 = vld [vmem:[%s456 + $0x28] sm:$0xf]
      %v1305 = vld [vmem:[%s456 + $0x2c] sm:$0xf]
      %v1306 = vld [vmem:[%s456 + $0x30] sm:$0xf]
      %v1307 = vld [vmem:[%s456 + $0x34] sm:$0xf]
      %v1308 = vld [vmem:[%s456 + $0x38] sm:$0xf]
      %v1309 = vld [vmem:[%s456 + $0x3c] sm:$0xf]
      %v1310 = vld [vmem:[%s456 + $0x40] sm:$0xf]
      %v1311 = vld [vmem:[%s456 + $0x44] sm:$0xf]
      %v1312 = vld [vmem:[%s456 + $0x48] sm:$0xf]
      %v1313 = vld [vmem:[%s456 + $0x4c] sm:$0xf]
      %v1314 = vld [vmem:[%s456 + $0x50] sm:$0xf]
      %v1315 = vld [vmem:[%s456 + $0x54] sm:$0xf]
      %v1316 = vld [vmem:[%s456 + $0x58] sm:$0xf]
      %v1317 = vld [vmem:[%s456 + $0x5c] sm:$0xf]
      %v1318 = vld [vmem:[%s456 + $0x60] sm:$0xf]
      %v1319 = vld [vmem:[%s456 + $0x64] sm:$0xf]
      %v1320 = vld [vmem:[%s456 + $0x68] sm:$0xf]
      %v1321 = vld [vmem:[%s456 + $0x6c] sm:$0xf]
      %v1322 = vld [vmem:[%s456 + $0x70] sm:$0xf]
      %v1323 = vld [vmem:[%s456 + $0x74] sm:$0xf]
      %v1324 = vld [vmem:[%s456 + $0x78] sm:$0xf]
      %v1325 = vld [vmem:[%s456 + $0x7c] sm:$0xf]
      %s1326 = scalar_lea.vmem %s1, 8
      %v1327 = vld [vmem:[%s1326] sm:$0xf]
      %v1328 = vld [vmem:[%s1326 + $0x4] sm:$0x3]
      %v1361 = vunpack.c.l.b16 %v1294
      %v1362 = vunpack.c.l.b16 %v1295
      %v1363 = vunpack.c.l.b16 %v1296
      %v1364 = vunpack.c.l.b16 %v1297
      %v1365 = vunpack.c.l.b16 %v1298
      %v1366 = vunpack.c.l.b16 %v1299
      %v1367 = vunpack.c.l.b16 %v1300
      %v1368 = vunpack.c.l.b16 %v1301
      %v1369 = vunpack.c.l.b16 %v1302
      %v1370 = vunpack.c.l.b16 %v1303
      %v1371 = vunpack.c.l.b16 %v1304
      %v1372 = vunpack.c.l.b16 %v1305
      %v1373 = vunpack.c.l.b16 %v1306
      %v1374 = vunpack.c.l.b16 %v1307
      %v1375 = vunpack.c.l.b16 %v1308
      %v1376 = vunpack.c.l.b16 %v1309
      %v1377 = vunpack.c.l.b16 %v1310
      %v1378 = vunpack.c.l.b16 %v1311
      %v1379 = vunpack.c.l.b16 %v1312
      %v1380 = vunpack.c.l.b16 %v1313
      %v1381 = vunpack.c.l.b16 %v1314
      %v1382 = vunpack.c.l.b16 %v1315
      %v1383 = vunpack.c.l.b16 %v1316
      %v1384 = vunpack.c.l.b16 %v1317
      %v1385 = vunpack.c.l.b16 %v1318
      %v1386 = vunpack.c.l.b16 %v1319
      %v1387 = vunpack.c.l.b16 %v1320
      %v1388 = vunpack.c.l.b16 %v1321
      %v1389 = vunpack.c.l.b16 %v1322
      %v1390 = vunpack.c.l.b16 %v1323
      %v1391 = vunpack.c.l.b16 %v1324
      %v1392 = vunpack.c.l.b16 %v1325
      %v1393 = vpack.c.b16 %v1362, %v1361
      %v1394 = vpack.c.b16 %v1364, %v1363
      %v1395 = vpack.c.b16 %v1366, %v1365
      %v1396 = vpack.c.b16 %v1368, %v1367
      %v1397 = vpack.c.b16 %v1370, %v1369
      %v1398 = vpack.c.b16 %v1372, %v1371
      %v1399 = vpack.c.b16 %v1374, %v1373
      %v1400 = vpack.c.b16 %v1376, %v1375
      %v1401 = vpack.c.b16 %v1378, %v1377
      %v1402 = vpack.c.b16 %v1380, %v1379
      %v1403 = vpack.c.b16 %v1382, %v1381
      %v1404 = vpack.c.b16 %v1384, %v1383
      %v1405 = vpack.c.b16 %v1386, %v1385
      %v1406 = vpack.c.b16 %v1388, %v1387
      %v1407 = vpack.c.b16 %v1390, %v1389
      %v1408 = vpack.c.b16 %v1392, %v1391
      %v1411 = vunpack.c.l.b16 %v1327
      %v1412 = vunpack.c.l.b16 %v1328
      %v1413 = vpack.c.b16 %v1412, %v1411
      %vm1414 = vcmask 97280
      %v1416 = vsel %vm1414, %v1393, 0
      %v1419 = vsel %vm1414, %v1394, 0
      %v1422 = vsel %vm1414, %v1395, 0
      %v1425 = vsel %vm1414, %v1396, 0
      %v1428 = vsel %vm1414, %v1397, 0
      %v1431 = vsel %vm1414, %v1398, 0
      %v1434 = vsel %vm1414, %v1399, 0
      %v1437 = vsel %vm1414, %v1400, 0
      %v1440 = vsel %vm1414, %v1401, 0
      %v1443 = vsel %vm1414, %v1402, 0
      %v1446 = vsel %vm1414, %v1403, 0
      %v1449 = vsel %vm1414, %v1404, 0
      %v1452 = vsel %vm1414, %v1405, 0
      %v1455 = vsel %vm1414, %v1406, 0
      %v1458 = vsel %vm1414, %v1407, 0
      %v1461 = vsel %vm1414, %v1408, 0
      %vm1463 = vcmask 1045504
      %v1465 = vsel %vm1463, %v1413, 0
      %1467 = vmatprep.subr.bf16.mxu0 0
      %1468 = vmatpush1.bf16.msra.mxu0 0
      %1469 = vmatprep.subr.bf16.mxu0 0
      %1470 = vmatpush1.bf16.msra.mxu0 0
      %1471 = vmatprep.subr.bf16.mxu0 0
      %1472 = vmatpush1.bf16.msra.mxu0 0
      %1473 = vmatprep.subr.bf16.mxu0 0
      %1474 = vmatpush1.bf16.msra.mxu0 0
      %1475 = vmatprep.subr.bf16.mxu0 0
      %1476 = vmatpush1.bf16.msra.mxu0 0
      %1477 = vmatprep.subr.bf16.mxu0 0
      %1478 = vmatpush1.bf16.msra.mxu0 0
      %1479 = vmatprep.subr.bf16.mxu0 0
      %1480 = vmatpush1.bf16.msra.mxu0 0
      %1481 = vmatprep.subr.bf16.mxu0 0
      %1482 = vmatpush1.bf16.msra.mxu0 %v1465
      %1483 = vmatprep.subr.bf16.mxu0 0
      %1484 = vmatpush2.bf16.msra.mxu0 0
      %1485 = vmatprep.subr.bf16.mxu0 0
      %1486 = vmatpush2.bf16.msra.mxu0 0
      %1487 = vmatprep.subr.bf16.mxu0 0
      %1488 = vmatpush2.bf16.msra.mxu0 0
      %1489 = vmatprep.subr.bf16.mxu0 0
      %1490 = vmatpush2.bf16.msra.mxu0 0
      %1491 = vmatprep.subr.bf16.mxu0 0
      %1492 = vmatpush2.bf16.msra.mxu0 0
      %1493 = vmatprep.subr.bf16.mxu0 0
      %1494 = vmatpush2.bf16.msra.mxu0 0
      %1495 = vmatprep.subr.bf16.mxu0 0
      %1496 = vmatpush2.bf16.msra.mxu0 0
      %1497 = vmatprep.subr.bf16.mxu0 0
      %1498 = vmatpush2.bf16.msra.mxu0 0
      %1499 = vmatprep.mubr.bf16.mxu0 0
      %1500 = vmatmul.mubr.bf16.gmra.mxu0 %v1416
      %v1501 = vpop.f32.mrf.mxu0
      %v1502 = vadd.f32 0.0, %v1501
      %v1503 = vpop.f32.mrf.mxu0
      %v1504 = vpop.f32.mrf.mxu0
      %v1505 = vadd.f32 0.0, %v1504
      %v1506 = vpop.f32.mrf.mxu0
      %1507 = vmatprep.mubr.bf16.mxu0 0
      %1508 = vmatmul.mubr.bf16.gmra.mxu0 %v1419
      %v1509 = vpop.f32.mrf.mxu0
      %v1510 = vadd.f32 0.0, %v1509
      %v1511 = vpop.f32.mrf.mxu0
      %v1512 = vpop.f32.mrf.mxu0
      %v1513 = vadd.f32 0.0, %v1512
      %v1514 = vpop.f32.mrf.mxu0
      %1515 = vmatprep.mubr.bf16.mxu0 0
      %1516 = vmatmul.mubr.bf16.gmra.mxu0 %v1422
      %v1517 = vpop.f32.mrf.mxu0
      %v1518 = vadd.f32 0.0, %v1517
      %v1519 = vpop.f32.mrf.mxu0
      %v1520 = vpop.f32.mrf.mxu0
      %v1521 = vadd.f32 0.0, %v1520
      %v1522 = vpop.f32.mrf.mxu0
      %1523 = vmatprep.mubr.bf16.mxu0 0
      %1524 = vmatmul.mubr.bf16.gmra.mxu0 %v1425
      %v1525 = vpop.f32.mrf.mxu0
      %v1526 = vadd.f32 0.0, %v1525
      %v1527 = vpop.f32.mrf.mxu0
      %v1528 = vpop.f32.mrf.mxu0
      %v1529 = vadd.f32 0.0, %v1528
      %v1530 = vpop.f32.mrf.mxu0
      %1531 = vmatprep.mubr.bf16.mxu0 0
      %1532 = vmatmul.mubr.bf16.gmra.mxu0 %v1428
      %v1533 = vpop.f32.mrf.mxu0
      %v1534 = vadd.f32 0.0, %v1533
      %v1535 = vpop.f32.mrf.mxu0
      %v1536 = vpop.f32.mrf.mxu0
      %v1537 = vadd.f32 0.0, %v1536
      %v1538 = vpop.f32.mrf.mxu0
      %1539 = vmatprep.mubr.bf16.mxu0 0
      %1540 = vmatmul.mubr.bf16.gmra.mxu0 %v1431
      %v1541 = vpop.f32.mrf.mxu0
      %v1542 = vadd.f32 0.0, %v1541
      %v1543 = vpop.f32.mrf.mxu0
      %v1544 = vpop.f32.mrf.mxu0
      %v1545 = vadd.f32 0.0, %v1544
      %v1546 = vpop.f32.mrf.mxu0
      %1547 = vmatprep.mubr.bf16.mxu0 0
      %1548 = vmatmul.mubr.bf16.gmra.mxu0 %v1434
      %v1549 = vpop.f32.mrf.mxu0
      %v1550 = vadd.f32 0.0, %v1549
      %v1551 = vpop.f32.mrf.mxu0
      %v1552 = vpop.f32.mrf.mxu0
      %v1553 = vadd.f32 0.0, %v1552
      %v1554 = vpop.f32.mrf.mxu0
      %1555 = vmatprep.mubr.bf16.mxu0 0
      %1556 = vmatmul.mubr.bf16.gmra.mxu0 %v1437
      %v1557 = vpop.f32.mrf.mxu0
      %v1558 = vadd.f32 0.0, %v1557
      %v1559 = vpop.f32.mrf.mxu0
      %v1560 = vpop.f32.mrf.mxu0
      %v1561 = vadd.f32 0.0, %v1560
      %v1562 = vpop.f32.mrf.mxu0
      %1563 = vmatprep.mubr.bf16.mxu0 0
      %1564 = vmatmul.mubr.bf16.gmra.mxu0 %v1440
      %v1565 = vpop.f32.mrf.mxu0
      %v1566 = vadd.f32 0.0, %v1565
      %v1567 = vpop.f32.mrf.mxu0
      %v1568 = vpop.f32.mrf.mxu0
      %v1569 = vadd.f32 0.0, %v1568
      %v1570 = vpop.f32.mrf.mxu0
      %1571 = vmatprep.mubr.bf16.mxu0 0
      %1572 = vmatmul.mubr.bf16.gmra.mxu0 %v1443
      %v1573 = vpop.f32.mrf.mxu0
      %v1574 = vadd.f32 0.0, %v1573
      %v1575 = vpop.f32.mrf.mxu0
      %v1576 = vpop.f32.mrf.mxu0
      %v1577 = vadd.f32 0.0, %v1576
      %v1578 = vpop.f32.mrf.mxu0
      %1579 = vmatprep.mubr.bf16.mxu0 0
      %1580 = vmatmul.mubr.bf16.gmra.mxu0 %v1446
      %v1581 = vpop.f32.mrf.mxu0
      %v1582 = vadd.f32 0.0, %v1581
      %v1583 = vpop.f32.mrf.mxu0
      %v1584 = vpop.f32.mrf.mxu0
      %v1585 = vadd.f32 0.0, %v1584
      %v1586 = vpop.f32.mrf.mxu0
      %1587 = vmatprep.mubr.bf16.mxu0 0
      %1588 = vmatmul.mubr.bf16.gmra.mxu0 %v1449
      %v1589 = vpop.f32.mrf.mxu0
      %v1590 = vadd.f32 0.0, %v1589
      %v1591 = vpop.f32.mrf.mxu0
      %v1592 = vpop.f32.mrf.mxu0
      %v1593 = vadd.f32 0.0, %v1592
      %v1594 = vpop.f32.mrf.mxu0
      %1595 = vmatprep.mubr.bf16.mxu0 0
      %1596 = vmatmul.mubr.bf16.gmra.mxu0 %v1452
      %v1597 = vpop.f32.mrf.mxu0
      %v1598 = vadd.f32 0.0, %v1597
      %v1599 = vpop.f32.mrf.mxu0
      %v1600 = vpop.f32.mrf.mxu0
      %v1601 = vadd.f32 0.0, %v1600
      %v1602 = vpop.f32.mrf.mxu0
      %1603 = vmatprep.mubr.bf16.mxu0 0
      %1604 = vmatmul.mubr.bf16.gmra.mxu0 %v1455
      %v1605 = vpop.f32.mrf.mxu0
      %v1606 = vadd.f32 0.0, %v1605
      %v1607 = vpop.f32.mrf.mxu0
      %v1608 = vpop.f32.mrf.mxu0
      %v1609 = vadd.f32 0.0, %v1608
      %v1610 = vpop.f32.mrf.mxu0
      %1611 = vmatprep.mubr.bf16.mxu0 0
      %1612 = vmatmul.mubr.bf16.gmra.mxu0 %v1458
      %v1613 = vpop.f32.mrf.mxu0
      %v1614 = vadd.f32 0.0, %v1613
      %v1615 = vpop.f32.mrf.mxu0
      %v1616 = vpop.f32.mrf.mxu0
      %v1617 = vadd.f32 0.0, %v1616
      %v1618 = vpop.f32.mrf.mxu0
      %1619 = vmatprep.mubr.bf16.mxu0 0
      %1620 = vmatmul.mubr.bf16.gmra.mxu0 %v1461
      %v1621 = vpop.f32.mrf.mxu0
      %v1622 = vadd.f32 0.0, %v1621
      %v1623 = vpop.f32.mrf.mxu0
      %v1624 = vpop.f32.mrf.mxu0
      %v1625 = vadd.f32 0.0, %v1624
      %v1626 = vpop.f32.mrf.mxu0
      %1627 = vdwg.mxu0
      %v1660 = vunpack.c.l.b16 %v1260
      %v1661 = vunpack.c.l.b16 %v1261
      %v1662 = vunpack.c.l.b16 %v1262
      %v1663 = vunpack.c.l.b16 %v1263
      %v1664 = vunpack.c.l.b16 %v1264
      %v1665 = vunpack.c.l.b16 %v1265
      %v1666 = vunpack.c.l.b16 %v1266
      %v1667 = vunpack.c.l.b16 %v1267
      %v1668 = vunpack.c.l.b16 %v1268
      %v1669 = vunpack.c.l.b16 %v1269
      %v1670 = vunpack.c.l.b16 %v1270
      %v1671 = vunpack.c.l.b16 %v1271
      %v1672 = vunpack.c.l.b16 %v1272
      %v1673 = vunpack.c.l.b16 %v1273
      %v1674 = vunpack.c.l.b16 %v1274
      %v1675 = vunpack.c.l.b16 %v1275
      %v1676 = vunpack.c.l.b16 %v1276
      %v1677 = vunpack.c.l.b16 %v1277
      %v1678 = vunpack.c.l.b16 %v1278
      %v1679 = vunpack.c.l.b16 %v1279
      %v1680 = vunpack.c.l.b16 %v1280
      %v1681 = vunpack.c.l.b16 %v1281
      %v1682 = vunpack.c.l.b16 %v1282
      %v1683 = vunpack.c.l.b16 %v1283
      %v1684 = vunpack.c.l.b16 %v1284
      %v1685 = vunpack.c.l.b16 %v1285
      %v1686 = vunpack.c.l.b16 %v1286
      %v1687 = vunpack.c.l.b16 %v1287
      %v1688 = vunpack.c.l.b16 %v1288
      %v1689 = vunpack.c.l.b16 %v1289
      %v1690 = vunpack.c.l.b16 %v1290
      %v1691 = vunpack.c.l.b16 %v1291
      %v1692 = vpack.c.b16 %v1661, %v1660
      %v1693 = vpack.c.b16 %v1663, %v1662
      %v1694 = vpack.c.b16 %v1665, %v1664
      %v1695 = vpack.c.b16 %v1667, %v1666
      %v1696 = vpack.c.b16 %v1669, %v1668
      %v1697 = vpack.c.b16 %v1671, %v1670
      %v1698 = vpack.c.b16 %v1673, %v1672
      %v1699 = vpack.c.b16 %v1675, %v1674
      %v1700 = vpack.c.b16 %v1677, %v1676
      %v1701 = vpack.c.b16 %v1679, %v1678
      %v1702 = vpack.c.b16 %v1681, %v1680
      %v1703 = vpack.c.b16 %v1683, %v1682
      %v1704 = vpack.c.b16 %v1685, %v1684
      %v1705 = vpack.c.b16 %v1687, %v1686
      %v1706 = vpack.c.b16 %v1689, %v1688
      %v1707 = vpack.c.b16 %v1691, %v1690
      %v1710 = vunpack.c.l.b16 %v1292
      %v1711 = vunpack.c.l.b16 %v1293
      %v1712 = vpack.c.b16 %v1711, %v1710
      %v1714 = vsel %vm1414, %v1692, 0
      %v1717 = vsel %vm1414, %v1693, 0
      %v1720 = vsel %vm1414, %v1694, 0
      %v1723 = vsel %vm1414, %v1695, 0
      %v1726 = vsel %vm1414, %v1696, 0
      %v1729 = vsel %vm1414, %v1697, 0
      %v1732 = vsel %vm1414, %v1698, 0
      %v1735 = vsel %vm1414, %v1699, 0
      %v1738 = vsel %vm1414, %v1700, 0
      %v1741 = vsel %vm1414, %v1701, 0
      %v1744 = vsel %vm1414, %v1702, 0
      %v1747 = vsel %vm1414, %v1703, 0
      %v1750 = vsel %vm1414, %v1704, 0
      %v1753 = vsel %vm1414, %v1705, 0
      %v1756 = vsel %vm1414, %v1706, 0
      %v1759 = vsel %vm1414, %v1707, 0
      %v1762 = vsel %vm1463, %v1712, 0
      %1764 = vmatprep.subr.bf16.mxu0 0
      %1765 = vmatpush1.bf16.msra.mxu0 0
      %1766 = vmatprep.subr.bf16.mxu0 0
      %1767 = vmatpush1.bf16.msra.mxu0 0
      %1768 = vmatprep.subr.bf16.mxu0 0
      %1769 = vmatpush1.bf16.msra.mxu0 0
      %1770 = vmatprep.subr.bf16.mxu0 0
      %1771 = vmatpush1.bf16.msra.mxu0 0
      %1772 = vmatprep.subr.bf16.mxu0 0
      %1773 = vmatpush1.bf16.msra.mxu0 0
      %1774 = vmatprep.subr.bf16.mxu0 0
      %1775 = vmatpush1.bf16.msra.mxu0 0
      %1776 = vmatprep.subr.bf16.mxu0 0
      %1777 = vmatpush1.bf16.msra.mxu0 0
      %1778 = vmatprep.subr.bf16.mxu0 0
      %1779 = vmatpush1.bf16.msra.mxu0 %v1762
      %1780 = vmatprep.subr.bf16.mxu0 0
      %1781 = vmatpush2.bf16.msra.mxu0 0
      %1782 = vmatprep.subr.bf16.mxu0 0
      %1783 = vmatpush2.bf16.msra.mxu0 0
      %1784 = vmatprep.subr.bf16.mxu0 0
      %1785 = vmatpush2.bf16.msra.mxu0 0
      %1786 = vmatprep.subr.bf16.mxu0 0
      %1787 = vmatpush2.bf16.msra.mxu0 0
      %1788 = vmatprep.subr.bf16.mxu0 0
      %1789 = vmatpush2.bf16.msra.mxu0 0
      %1790 = vmatprep.subr.bf16.mxu0 0
      %1791 = vmatpush2.bf16.msra.mxu0 0
      %1792 = vmatprep.subr.bf16.mxu0 0
      %1793 = vmatpush2.bf16.msra.mxu0 0
      %1794 = vmatprep.subr.bf16.mxu0 0
      %1795 = vmatpush2.bf16.msra.mxu0 0
      %1796 = vmatprep.mubr.bf16.mxu0 0
      %1797 = vmatmul.mubr.bf16.gmra.mxu0 %v1714
      %v1798 = vpop.f32.mrf.mxu0
      %v1799 = vadd.f32 %v1502, %v1798
      %v1800 = vpop.f32.mrf.mxu0
      %v1801 = vpop.f32.mrf.mxu0
      %v1802 = vadd.f32 %v1505, %v1801
      %v1803 = vpop.f32.mrf.mxu0
      %1804 = vmatprep.mubr.bf16.mxu0 0
      %1805 = vmatmul.mubr.bf16.gmra.mxu0 %v1717
      %v1806 = vpop.f32.mrf.mxu0
      %v1807 = vadd.f32 %v1510, %v1806
      %v1808 = vpop.f32.mrf.mxu0
      %v1809 = vpop.f32.mrf.mxu0
      %v1810 = vadd.f32 %v1513, %v1809
      %v1811 = vpop.f32.mrf.mxu0
      %1812 = vmatprep.mubr.bf16.mxu0 0
      %1813 = vmatmul.mubr.bf16.gmra.mxu0 %v1720
      %v1814 = vpop.f32.mrf.mxu0
      %v1815 = vadd.f32 %v1518, %v1814
      %v1816 = vpop.f32.mrf.mxu0
      %v1817 = vpop.f32.mrf.mxu0
      %v1818 = vadd.f32 %v1521, %v1817
      %v1819 = vpop.f32.mrf.mxu0
      %1820 = vmatprep.mubr.bf16.mxu0 0
      %1821 = vmatmul.mubr.bf16.gmra.mxu0 %v1723
      %v1822 = vpop.f32.mrf.mxu0
      %v1823 = vadd.f32 %v1526, %v1822
      %v1824 = vpop.f32.mrf.mxu0
      %v1825 = vpop.f32.mrf.mxu0
      %v1826 = vadd.f32 %v1529, %v1825
      %v1827 = vpop.f32.mrf.mxu0
      %1828 = vmatprep.mubr.bf16.mxu0 0
      %1829 = vmatmul.mubr.bf16.gmra.mxu0 %v1726
      %v1830 = vpop.f32.mrf.mxu0
      %v1831 = vadd.f32 %v1534, %v1830
      %v1832 = vpop.f32.mrf.mxu0
      %v1833 = vpop.f32.mrf.mxu0
      %v1834 = vadd.f32 %v1537, %v1833
      %v1835 = vpop.f32.mrf.mxu0
      %1836 = vmatprep.mubr.bf16.mxu0 0
      %1837 = vmatmul.mubr.bf16.gmra.mxu0 %v1729
      %v1838 = vpop.f32.mrf.mxu0
      %v1839 = vadd.f32 %v1542, %v1838
      %v1840 = vpop.f32.mrf.mxu0
      %v1841 = vpop.f32.mrf.mxu0
      %v1842 = vadd.f32 %v1545, %v1841
      %v1843 = vpop.f32.mrf.mxu0
      %1844 = vmatprep.mubr.bf16.mxu0 0
      %1845 = vmatmul.mubr.bf16.gmra.mxu0 %v1732
      %v1846 = vpop.f32.mrf.mxu0
      %v1847 = vadd.f32 %v1550, %v1846
      %v1848 = vpop.f32.mrf.mxu0
      %v1849 = vpop.f32.mrf.mxu0
      %v1850 = vadd.f32 %v1553, %v1849
      %v1851 = vpop.f32.mrf.mxu0
      %1852 = vmatprep.mubr.bf16.mxu0 0
      %1853 = vmatmul.mubr.bf16.gmra.mxu0 %v1735
      %v1854 = vpop.f32.mrf.mxu0
      %v1855 = vadd.f32 %v1558, %v1854
      %v1856 = vpop.f32.mrf.mxu0
      %v1857 = vpop.f32.mrf.mxu0
      %v1858 = vadd.f32 %v1561, %v1857
      %v1859 = vpop.f32.mrf.mxu0
      %1860 = vmatprep.mubr.bf16.mxu0 0
      %1861 = vmatmul.mubr.bf16.gmra.mxu0 %v1738
      %v1862 = vpop.f32.mrf.mxu0
      %v1863 = vadd.f32 %v1566, %v1862
      %v1864 = vpop.f32.mrf.mxu0
      %v1865 = vpop.f32.mrf.mxu0
      %v1866 = vadd.f32 %v1569, %v1865
      %v1867 = vpop.f32.mrf.mxu0
      %1868 = vmatprep.mubr.bf16.mxu0 0
      %1869 = vmatmul.mubr.bf16.gmra.mxu0 %v1741
      %v1870 = vpop.f32.mrf.mxu0
      %v1871 = vadd.f32 %v1574, %v1870
      %v1872 = vpop.f32.mrf.mxu0
      %v1873 = vpop.f32.mrf.mxu0
      %v1874 = vadd.f32 %v1577, %v1873
      %v1875 = vpop.f32.mrf.mxu0
      %1876 = vmatprep.mubr.bf16.mxu0 0
      %1877 = vmatmul.mubr.bf16.gmra.mxu0 %v1744
      %v1878 = vpop.f32.mrf.mxu0
      %v1879 = vadd.f32 %v1582, %v1878
      %v1880 = vpop.f32.mrf.mxu0
      %v1881 = vpop.f32.mrf.mxu0
      %v1882 = vadd.f32 %v1585, %v1881
      %v1883 = vpop.f32.mrf.mxu0
      %1884 = vmatprep.mubr.bf16.mxu0 0
      %1885 = vmatmul.mubr.bf16.gmra.mxu0 %v1747
      %v1886 = vpop.f32.mrf.mxu0
      %v1887 = vadd.f32 %v1590, %v1886
      %v1888 = vpop.f32.mrf.mxu0
      %v1889 = vpop.f32.mrf.mxu0
      %v1890 = vadd.f32 %v1593, %v1889
      %v1891 = vpop.f32.mrf.mxu0
      %1892 = vmatprep.mubr.bf16.mxu0 0
      %1893 = vmatmul.mubr.bf16.gmra.mxu0 %v1750
      %v1894 = vpop.f32.mrf.mxu0
      %v1895 = vadd.f32 %v1598, %v1894
      %v1896 = vpop.f32.mrf.mxu0
      %v1897 = vpop.f32.mrf.mxu0
      %v1898 = vadd.f32 %v1601, %v1897
      %v1899 = vpop.f32.mrf.mxu0
      %1900 = vmatprep.mubr.bf16.mxu0 0
      %1901 = vmatmul.mubr.bf16.gmra.mxu0 %v1753
      %v1902 = vpop.f32.mrf.mxu0
      %v1903 = vadd.f32 %v1606, %v1902
      %v1904 = vpop.f32.mrf.mxu0
      %v1905 = vpop.f32.mrf.mxu0
      %v1906 = vadd.f32 %v1609, %v1905
      %v1907 = vpop.f32.mrf.mxu0
      %1908 = vmatprep.mubr.bf16.mxu0 0
      %1909 = vmatmul.mubr.bf16.gmra.mxu0 %v1756
      %v1910 = vpop.f32.mrf.mxu0
      %v1911 = vadd.f32 %v1614, %v1910
      %v1912 = vpop.f32.mrf.mxu0
      %v1913 = vpop.f32.mrf.mxu0
      %v1914 = vadd.f32 %v1617, %v1913
      %v1915 = vpop.f32.mrf.mxu0
      %1916 = vmatprep.mubr.bf16.mxu0 0
      %1917 = vmatmul.mubr.bf16.gmra.mxu0 %v1759
      %v1918 = vpop.f32.mrf.mxu0
      %v1919 = vadd.f32 %v1622, %v1918
      %v1920 = vpop.f32.mrf.mxu0
      %v1921 = vpop.f32.mrf.mxu0
      %v1922 = vadd.f32 %v1625, %v1921
      %v1923 = vpop.f32.mrf.mxu0
      %1924 = vdwg.mxu0
      %s1925 = scalar_lea.vmem [#allocation2], 16
      %v1926 = vld [vmem:[%s1925] sm:$0xf]
      %v1927 = vld [vmem:[%s1925 + $0x4] sm:$0xf]
      %v1928 = vld [vmem:[%s1925 + $0x8] sm:$0xf]
      %v1929 = vld [vmem:[%s1925 + $0xc] sm:$0xf]
      %v1930 = vld [vmem:[%s1925 + $0x10] sm:$0xf]
      %v1931 = vld [vmem:[%s1925 + $0x14] sm:$0xf]
      %v1932 = vld [vmem:[%s1925 + $0x18] sm:$0xf]
      %v1933 = vld [vmem:[%s1925 + $0x1c] sm:$0xf]
      %v1934 = vld [vmem:[%s1925 + $0x20] sm:$0xf]
      %v1935 = vld [vmem:[%s1925 + $0x24] sm:$0xf]
      %v1936 = vld [vmem:[%s1925 + $0x28] sm:$0xf]
      %v1937 = vld [vmem:[%s1925 + $0x2c] sm:$0xf]
      %v1938 = vld [vmem:[%s1925 + $0x30] sm:$0xf]
      %v1939 = vld [vmem:[%s1925 + $0x34] sm:$0xf]
      %v1940 = vld [vmem:[%s1925 + $0x38] sm:$0xf]
      %v1941 = vld [vmem:[%s1925 + $0x3c] sm:$0xf]
      %v1942 = vld [vmem:[%s1925 + $0x40] sm:$0xf]
      %v1943 = vld [vmem:[%s1925 + $0x44] sm:$0xf]
      %v1944 = vld [vmem:[%s1925 + $0x48] sm:$0xf]
      %v1945 = vld [vmem:[%s1925 + $0x4c] sm:$0xf]
      %v1946 = vld [vmem:[%s1925 + $0x50] sm:$0xf]
      %v1947 = vld [vmem:[%s1925 + $0x54] sm:$0xf]
      %v1948 = vld [vmem:[%s1925 + $0x58] sm:$0xf]
      %v1949 = vld [vmem:[%s1925 + $0x5c] sm:$0xf]
      %v1950 = vld [vmem:[%s1925 + $0x60] sm:$0xf]
      %v1951 = vld [vmem:[%s1925 + $0x64] sm:$0xf]
      %v1952 = vld [vmem:[%s1925 + $0x68] sm:$0xf]
      %v1953 = vld [vmem:[%s1925 + $0x6c] sm:$0xf]
      %v1954 = vld [vmem:[%s1925 + $0x70] sm:$0xf]
      %v1955 = vld [vmem:[%s1925 + $0x74] sm:$0xf]
      %v1956 = vld [vmem:[%s1925 + $0x78] sm:$0xf]
      %v1957 = vld [vmem:[%s1925 + $0x7c] sm:$0xf]
      %s1958 = scalar_lea.vmem %s1, 16
      %v1959 = vld [vmem:[%s1958] sm:$0xf]
      %v1960 = vld [vmem:[%s1958 + $0x4] sm:$0x3]
      %v1993 = vunpack.c.l.b16 %v1926
      %v1994 = vunpack.c.l.b16 %v1927
      %v1995 = vunpack.c.l.b16 %v1928
      %v1996 = vunpack.c.l.b16 %v1929
      %v1997 = vunpack.c.l.b16 %v1930
      %v1998 = vunpack.c.l.b16 %v1931
      %v1999 = vunpack.c.l.b16 %v1932
      %v2000 = vunpack.c.l.b16 %v1933
      %v2001 = vunpack.c.l.b16 %v1934
      %v2002 = vunpack.c.l.b16 %v1935
      %v2003 = vunpack.c.l.b16 %v1936
      %v2004 = vunpack.c.l.b16 %v1937
      %v2005 = vunpack.c.l.b16 %v1938
      %v2006 = vunpack.c.l.b16 %v1939
      %v2007 = vunpack.c.l.b16 %v1940
      %v2008 = vunpack.c.l.b16 %v1941
      %v2009 = vunpack.c.l.b16 %v1942
      %v2010 = vunpack.c.l.b16 %v1943
      %v2011 = vunpack.c.l.b16 %v1944
      %v2012 = vunpack.c.l.b16 %v1945
      %v2013 = vunpack.c.l.b16 %v1946
      %v2014 = vunpack.c.l.b16 %v1947
      %v2015 = vunpack.c.l.b16 %v1948
      %v2016 = vunpack.c.l.b16 %v1949
      %v2017 = vunpack.c.l.b16 %v1950
      %v2018 = vunpack.c.l.b16 %v1951
      %v2019 = vunpack.c.l.b16 %v1952
      %v2020 = vunpack.c.l.b16 %v1953
      %v2021 = vunpack.c.l.b16 %v1954
      %v2022 = vunpack.c.l.b16 %v1955
      %v2023 = vunpack.c.l.b16 %v1956
      %v2024 = vunpack.c.l.b16 %v1957
      %v2025 = vpack.c.b16 %v1994, %v1993
      %v2026 = vpack.c.b16 %v1996, %v1995
      %v2027 = vpack.c.b16 %v1998, %v1997
      %v2028 = vpack.c.b16 %v2000, %v1999
      %v2029 = vpack.c.b16 %v2002, %v2001
      %v2030 = vpack.c.b16 %v2004, %v2003
      %v2031 = vpack.c.b16 %v2006, %v2005
      %v2032 = vpack.c.b16 %v2008, %v2007
      %v2033 = vpack.c.b16 %v2010, %v2009
      %v2034 = vpack.c.b16 %v2012, %v2011
      %v2035 = vpack.c.b16 %v2014, %v2013
      %v2036 = vpack.c.b16 %v2016, %v2015
      %v2037 = vpack.c.b16 %v2018, %v2017
      %v2038 = vpack.c.b16 %v2020, %v2019
      %v2039 = vpack.c.b16 %v2022, %v2021
      %v2040 = vpack.c.b16 %v2024, %v2023
      %v2043 = vunpack.c.l.b16 %v1959
      %v2044 = vunpack.c.l.b16 %v1960
      %v2045 = vpack.c.b16 %v2044, %v2043
      %v2047 = vsel %vm1414, %v2025, 0
      %v2050 = vsel %vm1414, %v2026, 0
      %v2053 = vsel %vm1414, %v2027, 0
      %v2056 = vsel %vm1414, %v2028, 0
      %v2059 = vsel %vm1414, %v2029, 0
      %v2062 = vsel %vm1414, %v2030, 0
      %v2065 = vsel %vm1414, %v2031, 0
      %v2068 = vsel %vm1414, %v2032, 0
      %v2071 = vsel %vm1414, %v2033, 0
      %v2074 = vsel %vm1414, %v2034, 0
      %v2077 = vsel %vm1414, %v2035, 0
      %v2080 = vsel %vm1414, %v2036, 0
      %v2083 = vsel %vm1414, %v2037, 0
      %v2086 = vsel %vm1414, %v2038, 0
      %v2089 = vsel %vm1414, %v2039, 0
      %v2092 = vsel %vm1414, %v2040, 0
      %v2095 = vsel %vm1463, %v2045, 0
      %2097 = vmatprep.subr.bf16.mxu0 0
      %2098 = vmatpush1.bf16.msra.mxu0 0
      %2099 = vmatprep.subr.bf16.mxu0 0
      %2100 = vmatpush1.bf16.msra.mxu0 0
      %2101 = vmatprep.subr.bf16.mxu0 0
      %2102 = vmatpush1.bf16.msra.mxu0 0
      %2103 = vmatprep.subr.bf16.mxu0 0
      %2104 = vmatpush1.bf16.msra.mxu0 0
      %2105 = vmatprep.subr.bf16.mxu0 0
      %2106 = vmatpush1.bf16.msra.mxu0 0
      %2107 = vmatprep.subr.bf16.mxu0 0
      %2108 = vmatpush1.bf16.msra.mxu0 0
      %2109 = vmatprep.subr.bf16.mxu0 0
      %2110 = vmatpush1.bf16.msra.mxu0 0
      %2111 = vmatprep.subr.bf16.mxu0 0
      %2112 = vmatpush1.bf16.msra.mxu0 %v2095
      %2113 = vmatprep.subr.bf16.mxu0 0
      %2114 = vmatpush2.bf16.msra.mxu0 0
      %2115 = vmatprep.subr.bf16.mxu0 0
      %2116 = vmatpush2.bf16.msra.mxu0 0
      %2117 = vmatprep.subr.bf16.mxu0 0
      %2118 = vmatpush2.bf16.msra.mxu0 0
      %2119 = vmatprep.subr.bf16.mxu0 0
      %2120 = vmatpush2.bf16.msra.mxu0 0
      %2121 = vmatprep.subr.bf16.mxu0 0
      %2122 = vmatpush2.bf16.msra.mxu0 0
      %2123 = vmatprep.subr.bf16.mxu0 0
      %2124 = vmatpush2.bf16.msra.mxu0 0
      %2125 = vmatprep.subr.bf16.mxu0 0
      %2126 = vmatpush2.bf16.msra.mxu0 0
      %2127 = vmatprep.subr.bf16.mxu0 0
      %2128 = vmatpush2.bf16.msra.mxu0 0
      %2129 = vmatprep.mubr.bf16.mxu0 0
      %2130 = vmatmul.mubr.bf16.gmra.mxu0 %v2047
      %v2131 = vpop.f32.mrf.mxu0
      %v2132 = vadd.f32 0.0, %v2131
      %v2133 = vpop.f32.mrf.mxu0
      %v2134 = vpop.f32.mrf.mxu0
      %v2135 = vadd.f32 0.0, %v2134
      %v2136 = vpop.f32.mrf.mxu0
      %2137 = vmatprep.mubr.bf16.mxu0 0
      %2138 = vmatmul.mubr.bf16.gmra.mxu0 %v2050
      %v2139 = vpop.f32.mrf.mxu0
      %v2140 = vadd.f32 0.0, %v2139
      %v2141 = vpop.f32.mrf.mxu0
      %v2142 = vpop.f32.mrf.mxu0
      %v2143 = vadd.f32 0.0, %v2142
      %v2144 = vpop.f32.mrf.mxu0
      %2145 = vmatprep.mubr.bf16.mxu0 0
      %2146 = vmatmul.mubr.bf16.gmra.mxu0 %v2053
      %v2147 = vpop.f32.mrf.mxu0
      %v2148 = vadd.f32 0.0, %v2147
      %v2149 = vpop.f32.mrf.mxu0
      %v2150 = vpop.f32.mrf.mxu0
      %v2151 = vadd.f32 0.0, %v2150
      %v2152 = vpop.f32.mrf.mxu0
      %2153 = vmatprep.mubr.bf16.mxu0 0
      %2154 = vmatmul.mubr.bf16.gmra.mxu0 %v2056
      %v2155 = vpop.f32.mrf.mxu0
      %v2156 = vadd.f32 0.0, %v2155
      %v2157 = vpop.f32.mrf.mxu0
      %v2158 = vpop.f32.mrf.mxu0
      %v2159 = vadd.f32 0.0, %v2158
      %v2160 = vpop.f32.mrf.mxu0
      %2161 = vmatprep.mubr.bf16.mxu0 0
      %2162 = vmatmul.mubr.bf16.gmra.mxu0 %v2059
      %v2163 = vpop.f32.mrf.mxu0
      %v2164 = vadd.f32 0.0, %v2163
      %v2165 = vpop.f32.mrf.mxu0
      %v2166 = vpop.f32.mrf.mxu0
      %v2167 = vadd.f32 0.0, %v2166
      %v2168 = vpop.f32.mrf.mxu0
      %2169 = vmatprep.mubr.bf16.mxu0 0
      %2170 = vmatmul.mubr.bf16.gmra.mxu0 %v2062
      %v2171 = vpop.f32.mrf.mxu0
      %v2172 = vadd.f32 0.0, %v2171
      %v2173 = vpop.f32.mrf.mxu0
      %v2174 = vpop.f32.mrf.mxu0
      %v2175 = vadd.f32 0.0, %v2174
      %v2176 = vpop.f32.mrf.mxu0
      %2177 = vmatprep.mubr.bf16.mxu0 0
      %2178 = vmatmul.mubr.bf16.gmra.mxu0 %v2065
      %v2179 = vpop.f32.mrf.mxu0
      %v2180 = vadd.f32 0.0, %v2179
      %v2181 = vpop.f32.mrf.mxu0
      %v2182 = vpop.f32.mrf.mxu0
      %v2183 = vadd.f32 0.0, %v2182
      %v2184 = vpop.f32.mrf.mxu0
      %2185 = vmatprep.mubr.bf16.mxu0 0
      %2186 = vmatmul.mubr.bf16.gmra.mxu0 %v2068
      %v2187 = vpop.f32.mrf.mxu0
      %v2188 = vadd.f32 0.0, %v2187
      %v2189 = vpop.f32.mrf.mxu0
      %v2190 = vpop.f32.mrf.mxu0
      %v2191 = vadd.f32 0.0, %v2190
      %v2192 = vpop.f32.mrf.mxu0
      %2193 = vmatprep.mubr.bf16.mxu0 0
      %2194 = vmatmul.mubr.bf16.gmra.mxu0 %v2071
      %v2195 = vpop.f32.mrf.mxu0
      %v2196 = vadd.f32 0.0, %v2195
      %v2197 = vpop.f32.mrf.mxu0
      %v2198 = vpop.f32.mrf.mxu0
      %v2199 = vadd.f32 0.0, %v2198
      %v2200 = vpop.f32.mrf.mxu0
      %2201 = vmatprep.mubr.bf16.mxu0 0
      %2202 = vmatmul.mubr.bf16.gmra.mxu0 %v2074
      %v2203 = vpop.f32.mrf.mxu0
      %v2204 = vadd.f32 0.0, %v2203
      %v2205 = vpop.f32.mrf.mxu0
      %v2206 = vpop.f32.mrf.mxu0
      %v2207 = vadd.f32 0.0, %v2206
      %v2208 = vpop.f32.mrf.mxu0
      %2209 = vmatprep.mubr.bf16.mxu0 0
      %2210 = vmatmul.mubr.bf16.gmra.mxu0 %v2077
      %v2211 = vpop.f32.mrf.mxu0
      %v2212 = vadd.f32 0.0, %v2211
      %v2213 = vpop.f32.mrf.mxu0
      %v2214 = vpop.f32.mrf.mxu0
      %v2215 = vadd.f32 0.0, %v2214
      %v2216 = vpop.f32.mrf.mxu0
      %2217 = vmatprep.mubr.bf16.mxu0 0
      %2218 = vmatmul.mubr.bf16.gmra.mxu0 %v2080
      %v2219 = vpop.f32.mrf.mxu0
      %v2220 = vadd.f32 0.0, %v2219
      %v2221 = vpop.f32.mrf.mxu0
      %v2222 = vpop.f32.mrf.mxu0
      %v2223 = vadd.f32 0.0, %v2222
      %v2224 = vpop.f32.mrf.mxu0
      %2225 = vmatprep.mubr.bf16.mxu0 0
      %2226 = vmatmul.mubr.bf16.gmra.mxu0 %v2083
      %v2227 = vpop.f32.mrf.mxu0
      %v2228 = vadd.f32 0.0, %v2227
      %v2229 = vpop.f32.mrf.mxu0
      %v2230 = vpop.f32.mrf.mxu0
      %v2231 = vadd.f32 0.0, %v2230
      %v2232 = vpop.f32.mrf.mxu0
      %2233 = vmatprep.mubr.bf16.mxu0 0
      %2234 = vmatmul.mubr.bf16.gmra.mxu0 %v2086
      %v2235 = vpop.f32.mrf.mxu0
      %v2236 = vadd.f32 0.0, %v2235
      %v2237 = vpop.f32.mrf.mxu0
      %v2238 = vpop.f32.mrf.mxu0
      %v2239 = vadd.f32 0.0, %v2238
      %v2240 = vpop.f32.mrf.mxu0
      %2241 = vmatprep.mubr.bf16.mxu0 0
      %2242 = vmatmul.mubr.bf16.gmra.mxu0 %v2089
      %v2243 = vpop.f32.mrf.mxu0
      %v2244 = vadd.f32 0.0, %v2243
      %v2245 = vpop.f32.mrf.mxu0
      %v2246 = vpop.f32.mrf.mxu0
      %v2247 = vadd.f32 0.0, %v2246
      %v2248 = vpop.f32.mrf.mxu0
      %2249 = vmatprep.mubr.bf16.mxu0 0
      %2250 = vmatmul.mubr.bf16.gmra.mxu0 %v2092
      %v2251 = vpop.f32.mrf.mxu0
      %v2252 = vadd.f32 0.0, %v2251
      %v2253 = vpop.f32.mrf.mxu0
      %v2254 = vpop.f32.mrf.mxu0
      %v2255 = vadd.f32 0.0, %v2254
      %v2256 = vpop.f32.mrf.mxu0
      %2257 = vdwg.mxu0
      %v2258 = vadd.f32 %v1799, %v2132
      %v2259 = vadd.f32 %v1802, %v2135
      %v2260 = vadd.f32 %v1807, %v2140
      %v2261 = vadd.f32 %v1810, %v2143
      %v2262 = vadd.f32 %v1815, %v2148
      %v2263 = vadd.f32 %v1818, %v2151
      %v2264 = vadd.f32 %v1823, %v2156
      %v2265 = vadd.f32 %v1826, %v2159
      %v2266 = vadd.f32 %v1831, %v2164
      %v2267 = vadd.f32 %v1834, %v2167
      %v2268 = vadd.f32 %v1839, %v2172
      %v2269 = vadd.f32 %v1842, %v2175
      %v2270 = vadd.f32 %v1847, %v2180
      %v2271 = vadd.f32 %v1850, %v2183
      %v2272 = vadd.f32 %v1855, %v2188
      %v2273 = vadd.f32 %v1858, %v2191
      %v2274 = vadd.f32 %v1863, %v2196
      %v2275 = vadd.f32 %v1866, %v2199
      %v2276 = vadd.f32 %v1871, %v2204
      %v2277 = vadd.f32 %v1874, %v2207
      %v2278 = vadd.f32 %v1879, %v2212
      %v2279 = vadd.f32 %v1882, %v2215
      %v2280 = vadd.f32 %v1887, %v2220
      %v2281 = vadd.f32 %v1890, %v2223
      %v2282 = vadd.f32 %v1895, %v2228
      %v2283 = vadd.f32 %v1898, %v2231
      %v2284 = vadd.f32 %v1903, %v2236
      %v2285 = vadd.f32 %v1906, %v2239
      %v2286 = vadd.f32 %v1911, %v2244
      %v2287 = vadd.f32 %v1914, %v2247
      %v2288 = vadd.f32 %v1919, %v2252
      %v2289 = vadd.f32 %v1922, %v2255
      %v2290 = vld [vmem:[%s2] sm:$0x1]
      %v2292 = vlaneseq
      %v2293 = vshrl.u32 %v2292, 7
      %v2294 = vsub.s32 0, %v2293
      %v2295 = vrot.slane %v2290, %v2294
      %v2297 = vadd.f32 %v2258, %v2295
      %v2298 = vadd.f32 %v2259, %v2295
      %v2299 = vadd.f32 %v2260, %v2295
      %v2300 = vadd.f32 %v2261, %v2295
      %v2301 = vadd.f32 %v2262, %v2295
      %v2302 = vadd.f32 %v2263, %v2295
      %v2303 = vadd.f32 %v2264, %v2295
      %v2304 = vadd.f32 %v2265, %v2295
      %v2305 = vadd.f32 %v2266, %v2295
      %v2306 = vadd.f32 %v2267, %v2295
      %v2307 = vadd.f32 %v2268, %v2295
      %v2308 = vadd.f32 %v2269, %v2295
      %v2309 = vadd.f32 %v2270, %v2295
      %v2310 = vadd.f32 %v2271, %v2295
      %v2311 = vadd.f32 %v2272, %v2295
      %v2312 = vadd.f32 %v2273, %v2295
      %v2313 = vadd.f32 %v2274, %v2295
      %v2314 = vadd.f32 %v2275, %v2295
      %v2315 = vadd.f32 %v2276, %v2295
      %v2316 = vadd.f32 %v2277, %v2295
      %v2317 = vadd.f32 %v2278, %v2295
      %v2318 = vadd.f32 %v2279, %v2295
      %v2319 = vadd.f32 %v2280, %v2295
      %v2320 = vadd.f32 %v2281, %v2295
      %v2321 = vadd.f32 %v2282, %v2295
      %v2322 = vadd.f32 %v2283, %v2295
      %v2323 = vadd.f32 %v2284, %v2295
      %v2324 = vadd.f32 %v2285, %v2295
      %v2325 = vadd.f32 %v2286, %v2295
      %v2326 = vadd.f32 %v2287, %v2295
      %v2327 = vadd.f32 %v2288, %v2295
      %v2328 = vadd.f32 %v2289, %v2295
      %v2329 = vmax.f32 %v2297, 0.0
      %v2330 = vmax.f32 %v2298, 0.0
      %v2331 = vmax.f32 %v2299, 0.0
      %v2332 = vmax.f32 %v2300, 0.0
      %v2333 = vmax.f32 %v2301, 0.0
      %v2334 = vmax.f32 %v2302, 0.0
      %v2335 = vmax.f32 %v2303, 0.0
      %v2336 = vmax.f32 %v2304, 0.0
      %v2337 = vmax.f32 %v2305, 0.0
      %v2338 = vmax.f32 %v2306, 0.0
      %v2339 = vmax.f32 %v2307, 0.0
      %v2340 = vmax.f32 %v2308, 0.0
      %v2341 = vmax.f32 %v2309, 0.0
      %v2342 = vmax.f32 %v2310, 0.0
      %v2343 = vmax.f32 %v2311, 0.0
      %v2344 = vmax.f32 %v2312, 0.0
      %v2345 = vmax.f32 %v2313, 0.0
      %v2346 = vmax.f32 %v2314, 0.0
      %v2347 = vmax.f32 %v2315, 0.0
      %v2348 = vmax.f32 %v2316, 0.0
      %v2349 = vmax.f32 %v2317, 0.0
      %v2350 = vmax.f32 %v2318, 0.0
      %v2351 = vmax.f32 %v2319, 0.0
      %v2352 = vmax.f32 %v2320, 0.0
      %v2353 = vmax.f32 %v2321, 0.0
      %v2354 = vmax.f32 %v2322, 0.0
      %v2355 = vmax.f32 %v2323, 0.0
      %v2356 = vmax.f32 %v2324, 0.0
      %v2357 = vmax.f32 %v2325, 0.0
      %v2358 = vmax.f32 %v2326, 0.0
      %v2359 = vmax.f32 %v2327, 0.0
      %v2360 = vmax.f32 %v2328, 0.0
      %v2361 = vpack.c.bf16 %v2330, %v2329
      %v2362 = vpack.c.bf16 %v2332, %v2331
      %v2363 = vpack.c.bf16 %v2334, %v2333
      %v2364 = vpack.c.bf16 %v2336, %v2335
      %v2365 = vpack.c.bf16 %v2338, %v2337
      %v2366 = vpack.c.bf16 %v2340, %v2339
      %v2367 = vpack.c.bf16 %v2342, %v2341
      %v2368 = vpack.c.bf16 %v2344, %v2343
      %v2369 = vpack.c.bf16 %v2346, %v2345
      %v2370 = vpack.c.bf16 %v2348, %v2347
      %v2371 = vpack.c.bf16 %v2350, %v2349
      %v2372 = vpack.c.bf16 %v2352, %v2351
      %v2373 = vpack.c.bf16 %v2354, %v2353
      %v2374 = vpack.c.bf16 %v2356, %v2355
      %v2375 = vpack.c.bf16 %v2358, %v2357
      %v2376 = vpack.c.bf16 %v2360, %v2359
      %2377 = vst.msk [vmem:[#allocation3] sm:$0xf] %vm274, 0
      %2378 = vst.msk [vmem:[#allocation3 + $0x4] sm:$0xf] %vm274, 0
      %s2379 = scalar_lea.vmem [#allocation3], 136
      %2380 = vst.msk [vmem:[%s2379] sm:$0xf] %vm274, 0
      %2381 = vst.msk [vmem:[%s2379 + $0x4] sm:$0xf] %vm274, 0
      %v2398 = vunpack.c.l.b16 %v2361
      %v2399 = vunpack.c.h.b16 %v2361
      %v2400 = vunpack.c.l.b16 %v2362
      %v2401 = vunpack.c.h.b16 %v2362
      %v2402 = vunpack.c.l.b16 %v2363
      %v2403 = vunpack.c.h.b16 %v2363
      %v2404 = vunpack.c.l.b16 %v2364
      %v2405 = vunpack.c.h.b16 %v2364
      %v2406 = vunpack.c.l.b16 %v2365
      %v2407 = vunpack.c.h.b16 %v2365
      %v2408 = vunpack.c.l.b16 %v2366
      %v2409 = vunpack.c.h.b16 %v2366
      %v2410 = vunpack.c.l.b16 %v2367
      %v2411 = vunpack.c.h.b16 %v2367
      %v2412 = vunpack.c.l.b16 %v2368
      %v2413 = vunpack.c.h.b16 %v2368
      %v2414 = vunpack.c.l.b16 %v2369
      %v2415 = vunpack.c.h.b16 %v2369
      %v2416 = vunpack.c.l.b16 %v2370
      %v2417 = vunpack.c.h.b16 %v2370
      %v2418 = vunpack.c.l.b16 %v2371
      %v2419 = vunpack.c.h.b16 %v2371
      %v2420 = vunpack.c.l.b16 %v2372
      %v2421 = vunpack.c.h.b16 %v2372
      %v2422 = vunpack.c.l.b16 %v2373
      %v2423 = vunpack.c.h.b16 %v2373
      %v2424 = vunpack.c.l.b16 %v2374
      %v2425 = vunpack.c.h.b16 %v2374
      %v2426 = vunpack.c.l.b16 %v2375
      %v2427 = vunpack.c.h.b16 %v2375
      %v2428 = vunpack.c.l.b16 %v2376
      %v2429 = vunpack.c.h.b16 %v2376
      %v2430 = vpack.c.b16 %v2398, %v2398
      %v2431 = vpack.c.b16 %v2399, %v2399
      %v2432 = vpack.c.b16 %v2400, %v2400
      %v2433 = vpack.c.b16 %v2401, %v2401
      %v2434 = vpack.c.b16 %v2402, %v2402
      %v2435 = vpack.c.b16 %v2403, %v2403
      %v2436 = vpack.c.b16 %v2404, %v2404
      %v2437 = vpack.c.b16 %v2405, %v2405
      %v2438 = vpack.c.b16 %v2406, %v2406
      %v2439 = vpack.c.b16 %v2407, %v2407
      %v2440 = vpack.c.b16 %v2408, %v2408
      %v2441 = vpack.c.b16 %v2409, %v2409
      %v2442 = vpack.c.b16 %v2410, %v2410
      %v2443 = vpack.c.b16 %v2411, %v2411
      %v2444 = vpack.c.b16 %v2412, %v2412
      %v2445 = vpack.c.b16 %v2413, %v2413
      %v2446 = vpack.c.b16 %v2414, %v2414
      %v2447 = vpack.c.b16 %v2415, %v2415
      %v2448 = vpack.c.b16 %v2416, %v2416
      %v2449 = vpack.c.b16 %v2417, %v2417
      %v2450 = vpack.c.b16 %v2418, %v2418
      %v2451 = vpack.c.b16 %v2419, %v2419
      %v2452 = vpack.c.b16 %v2420, %v2420
      %v2453 = vpack.c.b16 %v2421, %v2421
      %v2454 = vpack.c.b16 %v2422, %v2422
      %v2455 = vpack.c.b16 %v2423, %v2423
      %v2456 = vpack.c.b16 %v2424, %v2424
      %v2457 = vpack.c.b16 %v2425, %v2425
      %v2458 = vpack.c.b16 %v2426, %v2426
      %v2459 = vpack.c.b16 %v2427, %v2427
      %v2460 = vpack.c.b16 %v2428, %v2428
      %v2461 = vpack.c.b16 %v2429, %v2429
      %2462 = vrot.lane.b32.xlu0 %v2430, 4
      %v2463 = vpop.permute.xlu0 %2462
      %2464 = vrot.lane.b32.xlu0 %v2431, 4
      %v2465 = vpop.permute.xlu0 %2464
      %2466 = vrot.lane.b32.xlu0 %v2432, 4
      %v2467 = vpop.permute.xlu0 %2466
      %2468 = vrot.lane.b32.xlu0 %v2433, 4
      %v2469 = vpop.permute.xlu0 %2468
      %2470 = vrot.lane.b32.xlu0 %v2434, 4
      %v2471 = vpop.permute.xlu0 %2470
      %2472 = vrot.lane.b32.xlu0 %v2435, 4
      %v2473 = vpop.permute.xlu0 %2472
      %2474 = vrot.lane.b32.xlu0 %v2436, 4
      %v2475 = vpop.permute.xlu0 %2474
      %2476 = vrot.lane.b32.xlu0 %v2437, 4
      %v2477 = vpop.permute.xlu0 %2476
      %2478 = vrot.lane.b32.xlu0 %v2438, 4
      %v2479 = vpop.permute.xlu0 %2478
      %2480 = vrot.lane.b32.xlu0 %v2439, 4
      %v2481 = vpop.permute.xlu0 %2480
      %2482 = vrot.lane.b32.xlu0 %v2440, 4
      %v2483 = vpop.permute.xlu0 %2482
      %2484 = vrot.lane.b32.xlu0 %v2441, 4
      %v2485 = vpop.permute.xlu0 %2484
      %2486 = vrot.lane.b32.xlu0 %v2442, 4
      %v2487 = vpop.permute.xlu0 %2486
      %2488 = vrot.lane.b32.xlu0 %v2443, 4
      %v2489 = vpop.permute.xlu0 %2488
      %2490 = vrot.lane.b32.xlu0 %v2444, 4
      %v2491 = vpop.permute.xlu0 %2490
      %2492 = vrot.lane.b32.xlu0 %v2445, 4
      %v2493 = vpop.permute.xlu0 %2492
      %2494 = vrot.lane.b32.xlu0 %v2446, 4
      %v2495 = vpop.permute.xlu0 %2494
      %2496 = vrot.lane.b32.xlu0 %v2447, 4
      %v2497 = vpop.permute.xlu0 %2496
      %2498 = vrot.lane.b32.xlu0 %v2448, 4
      %v2499 = vpop.permute.xlu0 %2498
      %2500 = vrot.lane.b32.xlu0 %v2449, 4
      %v2501 = vpop.permute.xlu0 %2500
      %2502 = vrot.lane.b32.xlu0 %v2450, 4
      %v2503 = vpop.permute.xlu0 %2502
      %2504 = vrot.lane.b32.xlu0 %v2451, 4
      %v2505 = vpop.permute.xlu0 %2504
      %2506 = vrot.lane.b32.xlu0 %v2452, 4
      %v2507 = vpop.permute.xlu0 %2506
      %2508 = vrot.lane.b32.xlu0 %v2453, 4
      %v2509 = vpop.permute.xlu0 %2508
      %2510 = vrot.lane.b32.xlu0 %v2454, 4
      %v2511 = vpop.permute.xlu0 %2510
      %2512 = vrot.lane.b32.xlu0 %v2455, 4
      %v2513 = vpop.permute.xlu0 %2512
      %2514 = vrot.lane.b32.xlu0 %v2456, 4
      %v2515 = vpop.permute.xlu0 %2514
      %2516 = vrot.lane.b32.xlu0 %v2457, 4
      %v2517 = vpop.permute.xlu0 %2516
      %2518 = vrot.lane.b32.xlu0 %v2458, 4
      %v2519 = vpop.permute.xlu0 %2518
      %2520 = vrot.lane.b32.xlu0 %v2459, 4
      %v2521 = vpop.permute.xlu0 %2520
      %2522 = vrot.lane.b32.xlu0 %v2460, 4
      %v2523 = vpop.permute.xlu0 %2522
      %2524 = vrot.lane.b32.xlu0 %v2461, 4
      %v2525 = vpop.permute.xlu0 %2524
      %s2558 = scalar_lea.vmem [#allocation3], 8
      %2559 = vst.msk [vmem:[%s2558] sm:$0xf] %vm457, %v2463
      %2560 = vst.msk [vmem:[%s2558 + $0x4] sm:$0xf] %vm457, %v2465
      %2561 = vst.msk [vmem:[%s2558 + $0x8] sm:$0xf] %vm457, %v2467
      %2562 = vst.msk [vmem:[%s2558 + $0xc] sm:$0xf] %vm457, %v2469
      %2563 = vst.msk [vmem:[%s2558 + $0x10] sm:$0xf] %vm457, %v2471
      %2564 = vst.msk [vmem:[%s2558 + $0x14] sm:$0xf] %vm457, %v2473
      %2565 = vst.msk [vmem:[%s2558 + $0x18] sm:$0xf] %vm457, %v2475
      %2566 = vst.msk [vmem:[%s2558 + $0x1c] sm:$0xf] %vm457, %v2477
      %2567 = vst.msk [vmem:[%s2558 + $0x20] sm:$0xf] %vm457, %v2479
      %2568 = vst.msk [vmem:[%s2558 + $0x24] sm:$0xf] %vm457, %v2481
      %2569 = vst.msk [vmem:[%s2558 + $0x28] sm:$0xf] %vm457, %v2483
      %2570 = vst.msk [vmem:[%s2558 + $0x2c] sm:$0xf] %vm457, %v2485
      %2571 = vst.msk [vmem:[%s2558 + $0x30] sm:$0xf] %vm457, %v2487
      %2572 = vst.msk [vmem:[%s2558 + $0x34] sm:$0xf] %vm457, %v2489
      %2573 = vst.msk [vmem:[%s2558 + $0x38] sm:$0xf] %vm457, %v2491
      %2574 = vst.msk [vmem:[%s2558 + $0x3c] sm:$0xf] %vm457, %v2493
      %2575 = vst.msk [vmem:[%s2558 + $0x40] sm:$0xf] %vm457, %v2495
      %2576 = vst.msk [vmem:[%s2558 + $0x44] sm:$0xf] %vm457, %v2497
      %2577 = vst.msk [vmem:[%s2558 + $0x48] sm:$0xf] %vm457, %v2499
      %2578 = vst.msk [vmem:[%s2558 + $0x4c] sm:$0xf] %vm457, %v2501
      %2579 = vst.msk [vmem:[%s2558 + $0x50] sm:$0xf] %vm457, %v2503
      %2580 = vst.msk [vmem:[%s2558 + $0x54] sm:$0xf] %vm457, %v2505
      %2581 = vst.msk [vmem:[%s2558 + $0x58] sm:$0xf] %vm457, %v2507
      %2582 = vst.msk [vmem:[%s2558 + $0x5c] sm:$0xf] %vm457, %v2509
      %2583 = vst.msk [vmem:[%s2558 + $0x60] sm:$0xf] %vm457, %v2511
      %2584 = vst.msk [vmem:[%s2558 + $0x64] sm:$0xf] %vm457, %v2513
      %2585 = vst.msk [vmem:[%s2558 + $0x68] sm:$0xf] %vm457, %v2515
      %2586 = vst.msk [vmem:[%s2558 + $0x6c] sm:$0xf] %vm457, %v2517
      %2587 = vst.msk [vmem:[%s2558 + $0x70] sm:$0xf] %vm457, %v2519
      %2588 = vst.msk [vmem:[%s2558 + $0x74] sm:$0xf] %vm457, %v2521
      %2589 = vst.msk [vmem:[%s2558 + $0x78] sm:$0xf] %vm457, %v2523
      %2590 = vst.msk [vmem:[%s2558 + $0x7c] sm:$0xf] %vm457, %v2525
      %v2591 = vld [vmem:[%s2558] sm:$0x1]
      %v2592 = vsel %vm492, 0, %v2591
      %2593 = vst [vmem:[%s2558] sm:$0x1] %v2592
      %v2594 = vld [vmem:[%s2558 + $0x8] sm:$0x1]
      %v2595 = vsel %vm492, 0, %v2594
      %2596 = vst [vmem:[%s2558 + $0x8] sm:$0x1] %v2595
      %v2597 = vld [vmem:[%s2558 + $0x10] sm:$0x1]
      %v2598 = vsel %vm492, 0, %v2597
      %2599 = vst [vmem:[%s2558 + $0x10] sm:$0x1] %v2598
      %v2600 = vld [vmem:[%s2558 + $0x18] sm:$0x1]
      %v2601 = vsel %vm492, 0, %v2600
      %2602 = vst [vmem:[%s2558 + $0x18] sm:$0x1] %v2601
      %v2603 = vld [vmem:[%s2558 + $0x20] sm:$0x1]
      %v2604 = vsel %vm492, 0, %v2603
      %2605 = vst [vmem:[%s2558 + $0x20] sm:$0x1] %v2604
      %v2606 = vld [vmem:[%s2558 + $0x28] sm:$0x1]
      %v2607 = vsel %vm492, 0, %v2606
      %2608 = vst [vmem:[%s2558 + $0x28] sm:$0x1] %v2607
      %v2609 = vld [vmem:[%s2558 + $0x30] sm:$0x1]
      %v2610 = vsel %vm492, 0, %v2609
      %2611 = vst [vmem:[%s2558 + $0x30] sm:$0x1] %v2610
      %v2612 = vld [vmem:[%s2558 + $0x38] sm:$0x1]
      %v2613 = vsel %vm492, 0, %v2612
      %2614 = vst [vmem:[%s2558 + $0x38] sm:$0x1] %v2613
      %v2615 = vld [vmem:[%s2558 + $0x40] sm:$0x1]
      %v2616 = vsel %vm492, 0, %v2615
      %2617 = vst [vmem:[%s2558 + $0x40] sm:$0x1] %v2616
      %v2618 = vld [vmem:[%s2558 + $0x48] sm:$0x1]
      %v2619 = vsel %vm492, 0, %v2618
      %2620 = vst [vmem:[%s2558 + $0x48] sm:$0x1] %v2619
      %v2621 = vld [vmem:[%s2558 + $0x50] sm:$0x1]
      %v2622 = vsel %vm492, 0, %v2621
      %2623 = vst [vmem:[%s2558 + $0x50] sm:$0x1] %v2622
      %v2624 = vld [vmem:[%s2558 + $0x58] sm:$0x1]
      %v2625 = vsel %vm492, 0, %v2624
      %2626 = vst [vmem:[%s2558 + $0x58] sm:$0x1] %v2625
      %v2627 = vld [vmem:[%s2558 + $0x60] sm:$0x1]
      %v2628 = vsel %vm492, 0, %v2627
      %2629 = vst [vmem:[%s2558 + $0x60] sm:$0x1] %v2628
      %v2630 = vld [vmem:[%s2558 + $0x68] sm:$0x1]
      %v2631 = vsel %vm492, 0, %v2630
      %2632 = vst [vmem:[%s2558 + $0x68] sm:$0x1] %v2631
      %v2633 = vld [vmem:[%s2558 + $0x70] sm:$0x1]
      %v2634 = vsel %vm492, 0, %v2633
      %2635 = vst [vmem:[%s2558 + $0x70] sm:$0x1] %v2634
      %v2636 = vld [vmem:[%s2558 + $0x78] sm:$0x1]
      %v2637 = vsel %vm492, 0, %v2636
      %2638 = vst [vmem:[%s2558 + $0x78] sm:$0x1] %v2637
      %v2640 = vshrl.u32 %v2430, 16
      %v2642 = vrot.slane %v2640, 7
      %v2643 = vshll.u32 %v2430, 16
      %v2645 = vor.u32 %v2642, %v2643
      %v2646 = vrot.slane %v2642, 4
      %v2648 = vshrl.u32 %v2431, 16
      %v2650 = vrot.slane %v2648, 7
      %v2651 = vshll.u32 %v2431, 16
      %v2653 = vor.u32 %v2650, %v2651
      %v2654 = vsel %vm542, %v2646, %v2653
      %v2656 = vshrl.u32 %v2432, 16
      %v2658 = vrot.slane %v2656, 7
      %v2659 = vshll.u32 %v2432, 16
      %v2661 = vor.u32 %v2658, %v2659
      %v2662 = vrot.slane %v2658, 4
      %v2664 = vshrl.u32 %v2433, 16
      %v2666 = vrot.slane %v2664, 7
      %v2667 = vshll.u32 %v2433, 16
      %v2669 = vor.u32 %v2666, %v2667
      %v2670 = vsel %vm542, %v2662, %v2669
      %v2672 = vshrl.u32 %v2434, 16
      %v2674 = vrot.slane %v2672, 7
      %v2675 = vshll.u32 %v2434, 16
      %v2677 = vor.u32 %v2674, %v2675
      %v2678 = vrot.slane %v2674, 4
      %v2680 = vshrl.u32 %v2435, 16
      %v2682 = vrot.slane %v2680, 7
      %v2683 = vshll.u32 %v2435, 16
      %v2685 = vor.u32 %v2682, %v2683
      %v2686 = vsel %vm542, %v2678, %v2685
      %v2688 = vshrl.u32 %v2436, 16
      %v2690 = vrot.slane %v2688, 7
      %v2691 = vshll.u32 %v2436, 16
      %v2693 = vor.u32 %v2690, %v2691
      %v2694 = vrot.slane %v2690, 4
      %v2696 = vshrl.u32 %v2437, 16
      %v2698 = vrot.slane %v2696, 7
      %v2699 = vshll.u32 %v2437, 16
      %v2701 = vor.u32 %v2698, %v2699
      %v2702 = vsel %vm542, %v2694, %v2701
      %v2704 = vshrl.u32 %v2438, 16
      %v2706 = vrot.slane %v2704, 7
      %v2707 = vshll.u32 %v2438, 16
      %v2709 = vor.u32 %v2706, %v2707
      %v2710 = vrot.slane %v2706, 4
      %v2712 = vshrl.u32 %v2439, 16
      %v2714 = vrot.slane %v2712, 7
      %v2715 = vshll.u32 %v2439, 16
      %v2717 = vor.u32 %v2714, %v2715
      %v2718 = vsel %vm542, %v2710, %v2717
      %v2720 = vshrl.u32 %v2440, 16
      %v2722 = vrot.slane %v2720, 7
      %v2723 = vshll.u32 %v2440, 16
      %v2725 = vor.u32 %v2722, %v2723
      %v2726 = vrot.slane %v2722, 4
      %v2728 = vshrl.u32 %v2441, 16
      %v2730 = vrot.slane %v2728, 7
      %v2731 = vshll.u32 %v2441, 16
      %v2733 = vor.u32 %v2730, %v2731
      %v2734 = vsel %vm542, %v2726, %v2733
      %v2736 = vshrl.u32 %v2442, 16
      %v2738 = vrot.slane %v2736, 7
      %v2739 = vshll.u32 %v2442, 16
      %v2741 = vor.u32 %v2738, %v2739
      %v2742 = vrot.slane %v2738, 4
      %v2744 = vshrl.u32 %v2443, 16
      %v2746 = vrot.slane %v2744, 7
      %v2747 = vshll.u32 %v2443, 16
      %v2749 = vor.u32 %v2746, %v2747
      %v2750 = vsel %vm542, %v2742, %v2749
      %v2752 = vshrl.u32 %v2444, 16
      %v2754 = vrot.slane %v2752, 7
      %v2755 = vshll.u32 %v2444, 16
      %v2757 = vor.u32 %v2754, %v2755
      %v2758 = vrot.slane %v2754, 4
      %v2760 = vshrl.u32 %v2445, 16
      %v2762 = vrot.slane %v2760, 7
      %v2763 = vshll.u32 %v2445, 16
      %v2765 = vor.u32 %v2762, %v2763
      %v2766 = vsel %vm542, %v2758, %v2765
      %v2768 = vshrl.u32 %v2446, 16
      %v2770 = vrot.slane %v2768, 7
      %v2771 = vshll.u32 %v2446, 16
      %v2773 = vor.u32 %v2770, %v2771
      %v2774 = vrot.slane %v2770, 4
      %v2776 = vshrl.u32 %v2447, 16
      %v2778 = vrot.slane %v2776, 7
      %v2779 = vshll.u32 %v2447, 16
      %v2781 = vor.u32 %v2778, %v2779
      %v2782 = vsel %vm542, %v2774, %v2781
      %v2784 = vshrl.u32 %v2448, 16
      %v2786 = vrot.slane %v2784, 7
      %v2787 = vshll.u32 %v2448, 16
      %v2789 = vor.u32 %v2786, %v2787
      %v2790 = vrot.slane %v2786, 4
      %v2792 = vshrl.u32 %v2449, 16
      %v2794 = vrot.slane %v2792, 7
      %v2795 = vshll.u32 %v2449, 16
      %v2797 = vor.u32 %v2794, %v2795
      %v2798 = vsel %vm542, %v2790, %v2797
      %v2800 = vshrl.u32 %v2450, 16
      %v2802 = vrot.slane %v2800, 7
      %v2803 = vshll.u32 %v2450, 16
      %v2805 = vor.u32 %v2802, %v2803
      %v2806 = vrot.slane %v2802, 4
      %v2808 = vshrl.u32 %v2451, 16
      %v2810 = vrot.slane %v2808, 7
      %v2811 = vshll.u32 %v2451, 16
      %v2813 = vor.u32 %v2810, %v2811
      %v2814 = vsel %vm542, %v2806, %v2813
      %v2816 = vshrl.u32 %v2452, 16
      %v2818 = vrot.slane %v2816, 7
      %v2819 = vshll.u32 %v2452, 16
      %v2821 = vor.u32 %v2818, %v2819
      %v2822 = vrot.slane %v2818, 4
      %v2824 = vshrl.u32 %v2453, 16
      %v2826 = vrot.slane %v2824, 7
      %v2827 = vshll.u32 %v2453, 16
      %v2829 = vor.u32 %v2826, %v2827
      %v2830 = vsel %vm542, %v2822, %v2829
      %v2832 = vshrl.u32 %v2454, 16
      %v2834 = vrot.slane %v2832, 7
      %v2835 = vshll.u32 %v2454, 16
      %v2837 = vor.u32 %v2834, %v2835
      %v2838 = vrot.slane %v2834, 4
      %v2840 = vshrl.u32 %v2455, 16
      %v2842 = vrot.slane %v2840, 7
      %v2843 = vshll.u32 %v2455, 16
      %v2845 = vor.u32 %v2842, %v2843
      %v2846 = vsel %vm542, %v2838, %v2845
      %v2848 = vshrl.u32 %v2456, 16
      %v2850 = vrot.slane %v2848, 7
      %v2851 = vshll.u32 %v2456, 16
      %v2853 = vor.u32 %v2850, %v2851
      %v2854 = vrot.slane %v2850, 4
      %v2856 = vshrl.u32 %v2457, 16
      %v2858 = vrot.slane %v2856, 7
      %v2859 = vshll.u32 %v2457, 16
      %v2861 = vor.u32 %v2858, %v2859
      %v2862 = vsel %vm542, %v2854, %v2861
      %v2864 = vshrl.u32 %v2458, 16
      %v2866 = vrot.slane %v2864, 7
      %v2867 = vshll.u32 %v2458, 16
      %v2869 = vor.u32 %v2866, %v2867
      %v2870 = vrot.slane %v2866, 4
      %v2872 = vshrl.u32 %v2459, 16
      %v2874 = vrot.slane %v2872, 7
      %v2875 = vshll.u32 %v2459, 16
      %v2877 = vor.u32 %v2874, %v2875
      %v2878 = vsel %vm542, %v2870, %v2877
      %v2880 = vshrl.u32 %v2460, 16
      %v2882 = vrot.slane %v2880, 7
      %v2883 = vshll.u32 %v2460, 16
      %v2885 = vor.u32 %v2882, %v2883
      %v2886 = vrot.slane %v2882, 4
      %v2888 = vshrl.u32 %v2461, 16
      %v2890 = vrot.slane %v2888, 7
      %v2891 = vshll.u32 %v2461, 16
      %v2893 = vor.u32 %v2890, %v2891
      %v2894 = vsel %vm542, %v2886, %v2893
      %v2927 = vld [vmem:[%s2558] sm:$0xf]
      %v2928 = vsel %vm833, %v2645, %v2927
      %2929 = vst [vmem:[%s2558] sm:$0xf] %v2928
      %2930 = vst.msk [vmem:[%s2558 + $0x4] sm:$0xf] %vm837, %v2654
      %v2931 = vld [vmem:[%s2558 + $0x8] sm:$0xf]
      %v2932 = vsel %vm833, %v2661, %v2931
      %2933 = vst [vmem:[%s2558 + $0x8] sm:$0xf] %v2932
      %2934 = vst.msk [vmem:[%s2558 + $0xc] sm:$0xf] %vm837, %v2670
      %v2935 = vld [vmem:[%s2558 + $0x10] sm:$0xf]
      %v2936 = vsel %vm833, %v2677, %v2935
      %2937 = vst [vmem:[%s2558 + $0x10] sm:$0xf] %v2936
      %2938 = vst.msk [vmem:[%s2558 + $0x14] sm:$0xf] %vm837, %v2686
      %v2939 = vld [vmem:[%s2558 + $0x18] sm:$0xf]
      %v2940 = vsel %vm833, %v2693, %v2939
      %2941 = vst [vmem:[%s2558 + $0x18] sm:$0xf] %v2940
      %2942 = vst.msk [vmem:[%s2558 + $0x1c] sm:$0xf] %vm837, %v2702
      %v2943 = vld [vmem:[%s2558 + $0x20] sm:$0xf]
      %v2944 = vsel %vm833, %v2709, %v2943
      %2945 = vst [vmem:[%s2558 + $0x20] sm:$0xf] %v2944
      %2946 = vst.msk [vmem:[%s2558 + $0x24] sm:$0xf] %vm837, %v2718
      %v2947 = vld [vmem:[%s2558 + $0x28] sm:$0xf]
      %v2948 = vsel %vm833, %v2725, %v2947
      %2949 = vst [vmem:[%s2558 + $0x28] sm:$0xf] %v2948
      %2950 = vst.msk [vmem:[%s2558 + $0x2c] sm:$0xf] %vm837, %v2734
      %v2951 = vld [vmem:[%s2558 + $0x30] sm:$0xf]
      %v2952 = vsel %vm833, %v2741, %v2951
      %2953 = vst [vmem:[%s2558 + $0x30] sm:$0xf] %v2952
      %2954 = vst.msk [vmem:[%s2558 + $0x34] sm:$0xf] %vm837, %v2750
      %v2955 = vld [vmem:[%s2558 + $0x38] sm:$0xf]
      %v2956 = vsel %vm833, %v2757, %v2955
      %2957 = vst [vmem:[%s2558 + $0x38] sm:$0xf] %v2956
      %2958 = vst.msk [vmem:[%s2558 + $0x3c] sm:$0xf] %vm837, %v2766
      %v2959 = vld [vmem:[%s2558 + $0x40] sm:$0xf]
      %v2960 = vsel %vm833, %v2773, %v2959
      %2961 = vst [vmem:[%s2558 + $0x40] sm:$0xf] %v2960
      %2962 = vst.msk [vmem:[%s2558 + $0x44] sm:$0xf] %vm837, %v2782
      %v2963 = vld [vmem:[%s2558 + $0x48] sm:$0xf]
      %v2964 = vsel %vm833, %v2789, %v2963
      %2965 = vst [vmem:[%s2558 + $0x48] sm:$0xf] %v2964
      %2966 = vst.msk [vmem:[%s2558 + $0x4c] sm:$0xf] %vm837, %v2798
      %v2967 = vld [vmem:[%s2558 + $0x50] sm:$0xf]
      %v2968 = vsel %vm833, %v2805, %v2967
      %2969 = vst [vmem:[%s2558 + $0x50] sm:$0xf] %v2968
      %2970 = vst.msk [vmem:[%s2558 + $0x54] sm:$0xf] %vm837, %v2814
      %v2971 = vld [vmem:[%s2558 + $0x58] sm:$0xf]
      %v2972 = vsel %vm833, %v2821, %v2971
      %2973 = vst [vmem:[%s2558 + $0x58] sm:$0xf] %v2972
      %2974 = vst.msk [vmem:[%s2558 + $0x5c] sm:$0xf] %vm837, %v2830
      %v2975 = vld [vmem:[%s2558 + $0x60] sm:$0xf]
      %v2976 = vsel %vm833, %v2837, %v2975
      %2977 = vst [vmem:[%s2558 + $0x60] sm:$0xf] %v2976
      %2978 = vst.msk [vmem:[%s2558 + $0x64] sm:$0xf] %vm837, %v2846
      %v2979 = vld [vmem:[%s2558 + $0x68] sm:$0xf]
      %v2980 = vsel %vm833, %v2853, %v2979
      %2981 = vst [vmem:[%s2558 + $0x68] sm:$0xf] %v2980
      %2982 = vst.msk [vmem:[%s2558 + $0x6c] sm:$0xf] %vm837, %v2862
      %v2983 = vld [vmem:[%s2558 + $0x70] sm:$0xf]
      %v2984 = vsel %vm833, %v2869, %v2983
      %2985 = vst [vmem:[%s2558 + $0x70] sm:$0xf] %v2984
      %2986 = vst.msk [vmem:[%s2558 + $0x74] sm:$0xf] %vm837, %v2878
      %v2987 = vld [vmem:[%s2558 + $0x78] sm:$0xf]
      %v2988 = vsel %vm833, %v2885, %v2987
      %2989 = vst [vmem:[%s2558 + $0x78] sm:$0xf] %v2988
      %2990 = vst.msk [vmem:[%s2558 + $0x7c] sm:$0xf] %vm837, %v2894
      %v2991 = vrot.slane %v2640, 4
      %v2992 = vrot.slane %v2643, 5
      %v2993 = vor.u32 %v2991, %v2992
      %v2994 = vrot.slane %v2993, 4
      %v2995 = vrot.slane %v2651, 5
      %v2996 = vsel %vm901, %v2994, %v2995
      %v2997 = vrot.slane %v2648, 4
      %v2998 = vor.u32 %v2997, %v2995
      %v2999 = vrot.slane %v2998, 4
      %v3000 = vrot.slane %v2656, 4
      %v3001 = vrot.slane %v2659, 5
      %v3002 = vor.u32 %v3000, %v3001
      %v3003 = vrot.slane %v3002, 4
      %v3004 = vrot.slane %v2667, 5
      %v3005 = vsel %vm901, %v3003, %v3004
      %v3006 = vrot.slane %v2664, 4
      %v3007 = vor.u32 %v3006, %v3004
      %v3008 = vrot.slane %v3007, 4
      %v3009 = vrot.slane %v2672, 4
      %v3010 = vrot.slane %v2675, 5
      %v3011 = vor.u32 %v3009, %v3010
      %v3012 = vrot.slane %v3011, 4
      %v3013 = vrot.slane %v2683, 5
      %v3014 = vsel %vm901, %v3012, %v3013
      %v3015 = vrot.slane %v2680, 4
      %v3016 = vor.u32 %v3015, %v3013
      %v3017 = vrot.slane %v3016, 4
      %v3018 = vrot.slane %v2688, 4
      %v3019 = vrot.slane %v2691, 5
      %v3020 = vor.u32 %v3018, %v3019
      %v3021 = vrot.slane %v3020, 4
      %v3022 = vrot.slane %v2699, 5
      %v3023 = vsel %vm901, %v3021, %v3022
      %v3024 = vrot.slane %v2696, 4
      %v3025 = vor.u32 %v3024, %v3022
      %v3026 = vrot.slane %v3025, 4
      %v3027 = vrot.slane %v2704, 4
      %v3028 = vrot.slane %v2707, 5
      %v3029 = vor.u32 %v3027, %v3028
      %v3030 = vrot.slane %v3029, 4
      %v3031 = vrot.slane %v2715, 5
      %v3032 = vsel %vm901, %v3030, %v3031
      %v3033 = vrot.slane %v2712, 4
      %v3034 = vor.u32 %v3033, %v3031
      %v3035 = vrot.slane %v3034, 4
      %v3036 = vrot.slane %v2720, 4
      %v3037 = vrot.slane %v2723, 5
      %v3038 = vor.u32 %v3036, %v3037
      %v3039 = vrot.slane %v3038, 4
      %v3040 = vrot.slane %v2731, 5
      %v3041 = vsel %vm901, %v3039, %v3040
      %v3042 = vrot.slane %v2728, 4
      %v3043 = vor.u32 %v3042, %v3040
      %v3044 = vrot.slane %v3043, 4
      %v3045 = vrot.slane %v2736, 4
      %v3046 = vrot.slane %v2739, 5
      %v3047 = vor.u32 %v3045, %v3046
      %v3048 = vrot.slane %v3047, 4
      %v3049 = vrot.slane %v2747, 5
      %v3050 = vsel %vm901, %v3048, %v3049
      %v3051 = vrot.slane %v2744, 4
      %v3052 = vor.u32 %v3051, %v3049
      %v3053 = vrot.slane %v3052, 4
      %v3054 = vrot.slane %v2752, 4
      %v3055 = vrot.slane %v2755, 5
      %v3056 = vor.u32 %v3054, %v3055
      %v3057 = vrot.slane %v3056, 4
      %v3058 = vrot.slane %v2763, 5
      %v3059 = vsel %vm901, %v3057, %v3058
      %v3060 = vrot.slane %v2760, 4
      %v3061 = vor.u32 %v3060, %v3058
      %v3062 = vrot.slane %v3061, 4
      %v3063 = vrot.slane %v2768, 4
      %v3064 = vrot.slane %v2771, 5
      %v3065 = vor.u32 %v3063, %v3064
      %v3066 = vrot.slane %v3065, 4
      %v3067 = vrot.slane %v2779, 5
      %v3068 = vsel %vm901, %v3066, %v3067
      %v3069 = vrot.slane %v2776, 4
      %v3070 = vor.u32 %v3069, %v3067
      %v3071 = vrot.slane %v3070, 4
      %v3072 = vrot.slane %v2784, 4
      %v3073 = vrot.slane %v2787, 5
      %v3074 = vor.u32 %v3072, %v3073
      %v3075 = vrot.slane %v3074, 4
      %v3076 = vrot.slane %v2795, 5
      %v3077 = vsel %vm901, %v3075, %v3076
      %v3078 = vrot.slane %v2792, 4
      %v3079 = vor.u32 %v3078, %v3076
      %v3080 = vrot.slane %v3079, 4
      %v3081 = vrot.slane %v2800, 4
      %v3082 = vrot.slane %v2803, 5
      %v3083 = vor.u32 %v3081, %v3082
      %v3084 = vrot.slane %v3083, 4
      %v3085 = vrot.slane %v2811, 5
      %v3086 = vsel %vm901, %v3084, %v3085
      %v3087 = vrot.slane %v2808, 4
      %v3088 = vor.u32 %v3087, %v3085
      %v3089 = vrot.slane %v3088, 4
      %v3090 = vrot.slane %v2816, 4
      %v3091 = vrot.slane %v2819, 5
      %v3092 = vor.u32 %v3090, %v3091
      %v3093 = vrot.slane %v3092, 4
      %v3094 = vrot.slane %v2827, 5
      %v3095 = vsel %vm901, %v3093, %v3094
      %v3096 = vrot.slane %v2824, 4
      %v3097 = vor.u32 %v3096, %v3094
      %v3098 = vrot.slane %v3097, 4
      %v3099 = vrot.slane %v2832, 4
      %v3100 = vrot.slane %v2835, 5
      %v3101 = vor.u32 %v3099, %v3100
      %v3102 = vrot.slane %v3101, 4
      %v3103 = vrot.slane %v2843, 5
      %v3104 = vsel %vm901, %v3102, %v3103
      %v3105 = vrot.slane %v2840, 4
      %v3106 = vor.u32 %v3105, %v3103
      %v3107 = vrot.slane %v3106, 4
      %v3108 = vrot.slane %v2848, 4
      %v3109 = vrot.slane %v2851, 5
      %v3110 = vor.u32 %v3108, %v3109
      %v3111 = vrot.slane %v3110, 4
      %v3112 = vrot.slane %v2859, 5
      %v3113 = vsel %vm901, %v3111, %v3112
      %v3114 = vrot.slane %v2856, 4
      %v3115 = vor.u32 %v3114, %v3112
      %v3116 = vrot.slane %v3115, 4
      %v3117 = vrot.slane %v2864, 4
      %v3118 = vrot.slane %v2867, 5
      %v3119 = vor.u32 %v3117, %v3118
      %v3120 = vrot.slane %v3119, 4
      %v3121 = vrot.slane %v2875, 5
      %v3122 = vsel %vm901, %v3120, %v3121
      %v3123 = vrot.slane %v2872, 4
      %v3124 = vor.u32 %v3123, %v3121
      %v3125 = vrot.slane %v3124, 4
      %v3126 = vrot.slane %v2880, 4
      %v3127 = vrot.slane %v2883, 5
      %v3128 = vor.u32 %v3126, %v3127
      %v3129 = vrot.slane %v3128, 4
      %v3130 = vrot.slane %v2891, 5
      %v3131 = vsel %vm901, %v3129, %v3130
      %v3132 = vrot.slane %v2888, 4
      %v3133 = vor.u32 %v3132, %v3130
      %v3134 = vrot.slane %v3133, 4
      %3135 = vrot.lane.b32.xlu0 %v2996, 8
      %v3136 = vpop.permute.xlu0 %3135
      %3137 = vrot.lane.b32.xlu0 %v2999, 8
      %v3138 = vpop.permute.xlu0 %3137
      %3139 = vrot.lane.b32.xlu0 %v3005, 8
      %v3140 = vpop.permute.xlu0 %3139
      %3141 = vrot.lane.b32.xlu0 %v3008, 8
      %v3142 = vpop.permute.xlu0 %3141
      %3143 = vrot.lane.b32.xlu0 %v3014, 8
      %v3144 = vpop.permute.xlu0 %3143
      %3145 = vrot.lane.b32.xlu0 %v3017, 8
      %v3146 = vpop.permute.xlu0 %3145
      %3147 = vrot.lane.b32.xlu0 %v3023, 8
      %v3148 = vpop.permute.xlu0 %3147
      %3149 = vrot.lane.b32.xlu0 %v3026, 8
      %v3150 = vpop.permute.xlu0 %3149
      %3151 = vrot.lane.b32.xlu0 %v3032, 8
      %v3152 = vpop.permute.xlu0 %3151
      %3153 = vrot.lane.b32.xlu0 %v3035, 8
      %v3154 = vpop.permute.xlu0 %3153
      %3155 = vrot.lane.b32.xlu0 %v3041, 8
      %v3156 = vpop.permute.xlu0 %3155
      %3157 = vrot.lane.b32.xlu0 %v3044, 8
      %v3158 = vpop.permute.xlu0 %3157
      %3159 = vrot.lane.b32.xlu0 %v3050, 8
      %v3160 = vpop.permute.xlu0 %3159
      %3161 = vrot.lane.b32.xlu0 %v3053, 8
      %v3162 = vpop.permute.xlu0 %3161
      %3163 = vrot.lane.b32.xlu0 %v3059, 8
      %v3164 = vpop.permute.xlu0 %3163
      %3165 = vrot.lane.b32.xlu0 %v3062, 8
      %v3166 = vpop.permute.xlu0 %3165
      %3167 = vrot.lane.b32.xlu0 %v3068, 8
      %v3168 = vpop.permute.xlu0 %3167
      %3169 = vrot.lane.b32.xlu0 %v3071, 8
      %v3170 = vpop.permute.xlu0 %3169
      %3171 = vrot.lane.b32.xlu0 %v3077, 8
      %v3172 = vpop.permute.xlu0 %3171
      %3173 = vrot.lane.b32.xlu0 %v3080, 8
      %v3174 = vpop.permute.xlu0 %3173
      %3175 = vrot.lane.b32.xlu0 %v3086, 8
      %v3176 = vpop.permute.xlu0 %3175
      %3177 = vrot.lane.b32.xlu0 %v3089, 8
      %v3178 = vpop.permute.xlu0 %3177
      %3179 = vrot.lane.b32.xlu0 %v3095, 8
      %v3180 = vpop.permute.xlu0 %3179
      %3181 = vrot.lane.b32.xlu0 %v3098, 8
      %v3182 = vpop.permute.xlu0 %3181
      %3183 = vrot.lane.b32.xlu0 %v3104, 8
      %v3184 = vpop.permute.xlu0 %3183
      %3185 = vrot.lane.b32.xlu0 %v3107, 8
      %v3186 = vpop.permute.xlu0 %3185
      %3187 = vrot.lane.b32.xlu0 %v3113, 8
      %v3188 = vpop.permute.xlu0 %3187
      %3189 = vrot.lane.b32.xlu0 %v3116, 8
      %v3190 = vpop.permute.xlu0 %3189
      %3191 = vrot.lane.b32.xlu0 %v3122, 8
      %v3192 = vpop.permute.xlu0 %3191
      %3193 = vrot.lane.b32.xlu0 %v3125, 8
      %v3194 = vpop.permute.xlu0 %3193
      %3195 = vrot.lane.b32.xlu0 %v3131, 8
      %v3196 = vpop.permute.xlu0 %3195
      %3197 = vrot.lane.b32.xlu0 %v3134, 8
      %v3198 = vpop.permute.xlu0 %3197
      %3231 = vst.msk [vmem:[%s2558] sm:$0xf] %vm1142, %v3136
      %v3232 = vld [vmem:[%s2558 + $0x4] sm:$0xf]
      %v3233 = vsel %vm1145, %v3138, %v3232
      %3234 = vst [vmem:[%s2558 + $0x4] sm:$0xf] %v3233
      %3235 = vst.msk [vmem:[%s2558 + $0x8] sm:$0xf] %vm1142, %v3140
      %v3236 = vld [vmem:[%s2558 + $0xc] sm:$0xf]
      %v3237 = vsel %vm1145, %v3142, %v3236
      %3238 = vst [vmem:[%s2558 + $0xc] sm:$0xf] %v3237
      %3239 = vst.msk [vmem:[%s2558 + $0x10] sm:$0xf] %vm1142, %v3144
      %v3240 = vld [vmem:[%s2558 + $0x14] sm:$0xf]
      %v3241 = vsel %vm1145, %v3146, %v3240
      %3242 = vst [vmem:[%s2558 + $0x14] sm:$0xf] %v3241
      %3243 = vst.msk [vmem:[%s2558 + $0x18] sm:$0xf] %vm1142, %v3148
      %v3244 = vld [vmem:[%s2558 + $0x1c] sm:$0xf]
      %v3245 = vsel %vm1145, %v3150, %v3244
      %3246 = vst [vmem:[%s2558 + $0x1c] sm:$0xf] %v3245
      %3247 = vst.msk [vmem:[%s2558 + $0x20] sm:$0xf] %vm1142, %v3152
      %v3248 = vld [vmem:[%s2558 + $0x24] sm:$0xf]
      %v3249 = vsel %vm1145, %v3154, %v3248
      %3250 = vst [vmem:[%s2558 + $0x24] sm:$0xf] %v3249
      %3251 = vst.msk [vmem:[%s2558 + $0x28] sm:$0xf] %vm1142, %v3156
      %v3252 = vld [vmem:[%s2558 + $0x2c] sm:$0xf]
      %v3253 = vsel %vm1145, %v3158, %v3252
      %3254 = vst [vmem:[%s2558 + $0x2c] sm:$0xf] %v3253
      %3255 = vst.msk [vmem:[%s2558 + $0x30] sm:$0xf] %vm1142, %v3160
      %v3256 = vld [vmem:[%s2558 + $0x34] sm:$0xf]
      %v3257 = vsel %vm1145, %v3162, %v3256
      %3258 = vst [vmem:[%s2558 + $0x34] sm:$0xf] %v3257
      %3259 = vst.msk [vmem:[%s2558 + $0x38] sm:$0xf] %vm1142, %v3164
      %v3260 = vld [vmem:[%s2558 + $0x3c] sm:$0xf]
      %v3261 = vsel %vm1145, %v3166, %v3260
      %3262 = vst [vmem:[%s2558 + $0x3c] sm:$0xf] %v3261
      %3263 = vst.msk [vmem:[%s2558 + $0x40] sm:$0xf] %vm1142, %v3168
      %v3264 = vld [vmem:[%s2558 + $0x44] sm:$0xf]
      %v3265 = vsel %vm1145, %v3170, %v3264
      %3266 = vst [vmem:[%s2558 + $0x44] sm:$0xf] %v3265
      %3267 = vst.msk [vmem:[%s2558 + $0x48] sm:$0xf] %vm1142, %v3172
      %v3268 = vld [vmem:[%s2558 + $0x4c] sm:$0xf]
      %v3269 = vsel %vm1145, %v3174, %v3268
      %3270 = vst [vmem:[%s2558 + $0x4c] sm:$0xf] %v3269
      %3271 = vst.msk [vmem:[%s2558 + $0x50] sm:$0xf] %vm1142, %v3176
      %v3272 = vld [vmem:[%s2558 + $0x54] sm:$0xf]
      %v3273 = vsel %vm1145, %v3178, %v3272
      %3274 = vst [vmem:[%s2558 + $0x54] sm:$0xf] %v3273
      %3275 = vst.msk [vmem:[%s2558 + $0x58] sm:$0xf] %vm1142, %v3180
      %v3276 = vld [vmem:[%s2558 + $0x5c] sm:$0xf]
      %v3277 = vsel %vm1145, %v3182, %v3276
      %3278 = vst [vmem:[%s2558 + $0x5c] sm:$0xf] %v3277
      %3279 = vst.msk [vmem:[%s2558 + $0x60] sm:$0xf] %vm1142, %v3184
      %v3280 = vld [vmem:[%s2558 + $0x64] sm:$0xf]
      %v3281 = vsel %vm1145, %v3186, %v3280
      %3282 = vst [vmem:[%s2558 + $0x64] sm:$0xf] %v3281
      %3283 = vst.msk [vmem:[%s2558 + $0x68] sm:$0xf] %vm1142, %v3188
      %v3284 = vld [vmem:[%s2558 + $0x6c] sm:$0xf]
      %v3285 = vsel %vm1145, %v3190, %v3284
      %3286 = vst [vmem:[%s2558 + $0x6c] sm:$0xf] %v3285
      %3287 = vst.msk [vmem:[%s2558 + $0x70] sm:$0xf] %vm1142, %v3192
      %v3288 = vld [vmem:[%s2558 + $0x74] sm:$0xf]
      %v3289 = vsel %vm1145, %v3194, %v3288
      %3290 = vst [vmem:[%s2558 + $0x74] sm:$0xf] %v3289
      %3291 = vst.msk [vmem:[%s2558 + $0x78] sm:$0xf] %vm1142, %v3196
      %v3292 = vld [vmem:[%s2558 + $0x7c] sm:$0xf]
      %v3293 = vsel %vm1145, %v3198, %v3292
      %3294 = vst [vmem:[%s2558 + $0x7c] sm:$0xf] %v3293
      %v3295 = vld [vmem:[%s2558 + $0x4] sm:$0x8]
      %v3296 = vsel %vm1211, 0, %v3295
      %3297 = vst [vmem:[%s2558 + $0x4] sm:$0x8] %v3296
      %v3298 = vld [vmem:[%s2558 + $0xc] sm:$0x8]
      %v3299 = vsel %vm1211, 0, %v3298
      %3300 = vst [vmem:[%s2558 + $0xc] sm:$0x8] %v3299
      %v3301 = vld [vmem:[%s2558 + $0x14] sm:$0x8]
      %v3302 = vsel %vm1211, 0, %v3301
      %3303 = vst [vmem:[%s2558 + $0x14] sm:$0x8] %v3302
      %v3304 = vld [vmem:[%s2558 + $0x1c] sm:$0x8]
      %v3305 = vsel %vm1211, 0, %v3304
      %3306 = vst [vmem:[%s2558 + $0x1c] sm:$0x8] %v3305
      %v3307 = vld [vmem:[%s2558 + $0x24] sm:$0x8]
      %v3308 = vsel %vm1211, 0, %v3307
      %3309 = vst [vmem:[%s2558 + $0x24] sm:$0x8] %v3308
      %v3310 = vld [vmem:[%s2558 + $0x2c] sm:$0x8]
      %v3311 = vsel %vm1211, 0, %v3310
      %3312 = vst [vmem:[%s2558 + $0x2c] sm:$0x8] %v3311
      %v3313 = vld [vmem:[%s2558 + $0x34] sm:$0x8]
      %v3314 = vsel %vm1211, 0, %v3313
      %3315 = vst [vmem:[%s2558 + $0x34] sm:$0x8] %v3314
      %v3316 = vld [vmem:[%s2558 + $0x3c] sm:$0x8]
      %v3317 = vsel %vm1211, 0, %v3316
      %3318 = vst [vmem:[%s2558 + $0x3c] sm:$0x8] %v3317
      %v3319 = vld [vmem:[%s2558 + $0x44] sm:$0x8]
      %v3320 = vsel %vm1211, 0, %v3319
      %3321 = vst [vmem:[%s2558 + $0x44] sm:$0x8] %v3320
      %v3322 = vld [vmem:[%s2558 + $0x4c] sm:$0x8]
      %v3323 = vsel %vm1211, 0, %v3322
      %3324 = vst [vmem:[%s2558 + $0x4c] sm:$0x8] %v3323
      %v3325 = vld [vmem:[%s2558 + $0x54] sm:$0x8]
      %v3326 = vsel %vm1211, 0, %v3325
      %3327 = vst [vmem:[%s2558 + $0x54] sm:$0x8] %v3326
      %v3328 = vld [vmem:[%s2558 + $0x5c] sm:$0x8]
      %v3329 = vsel %vm1211, 0, %v3328
      %3330 = vst [vmem:[%s2558 + $0x5c] sm:$0x8] %v3329
      %v3331 = vld [vmem:[%s2558 + $0x64] sm:$0x8]
      %v3332 = vsel %vm1211, 0, %v3331
      %3333 = vst [vmem:[%s2558 + $0x64] sm:$0x8] %v3332
      %v3334 = vld [vmem:[%s2558 + $0x6c] sm:$0x8]
      %v3335 = vsel %vm1211, 0, %v3334
      %3336 = vst [vmem:[%s2558 + $0x6c] sm:$0x8] %v3335
      %v3337 = vld [vmem:[%s2558 + $0x74] sm:$0x8]
      %v3338 = vsel %vm1211, 0, %v3337
      %3339 = vst [vmem:[%s2558 + $0x74] sm:$0x8] %v3338
      %v3340 = vld [vmem:[%s2558 + $0x7c] sm:$0x8]
      %v3341 = vsel %vm1211, 0, %v3340
      %3342 = vst [vmem:[%s2558 + $0x7c] sm:$0x8] %v3341
      %v3343 = vld [vmem:[#allocation3] sm:$0xf]
      %v3344 = vld [vmem:[#allocation3 + $0x4] sm:$0xf]
      %v3345 = vld [vmem:[#allocation3 + $0x8] sm:$0xf]
      %v3346 = vld [vmem:[#allocation3 + $0xc] sm:$0xf]
      %v3347 = vld [vmem:[#allocation3 + $0x10] sm:$0xf]
      %v3348 = vld [vmem:[#allocation3 + $0x14] sm:$0xf]
      %v3349 = vld [vmem:[#allocation3 + $0x18] sm:$0xf]
      %v3350 = vld [vmem:[#allocation3 + $0x1c] sm:$0xf]
      %v3351 = vld [vmem:[#allocation3 + $0x20] sm:$0xf]
      %v3352 = vld [vmem:[#allocation3 + $0x24] sm:$0xf]
      %v3353 = vld [vmem:[#allocation3 + $0x28] sm:$0xf]
      %v3354 = vld [vmem:[#allocation3 + $0x2c] sm:$0xf]
      %v3355 = vld [vmem:[#allocation3 + $0x30] sm:$0xf]
      %v3356 = vld [vmem:[#allocation3 + $0x34] sm:$0xf]
      %v3357 = vld [vmem:[#allocation3 + $0x38] sm:$0xf]
      %v3358 = vld [vmem:[#allocation3 + $0x3c] sm:$0xf]
      %v3359 = vld [vmem:[#allocation3 + $0x40] sm:$0xf]
      %v3360 = vld [vmem:[#allocation3 + $0x44] sm:$0xf]
      %v3361 = vld [vmem:[#allocation3 + $0x48] sm:$0xf]
      %v3362 = vld [vmem:[#allocation3 + $0x4c] sm:$0xf]
      %v3363 = vld [vmem:[#allocation3 + $0x50] sm:$0xf]
      %v3364 = vld [vmem:[#allocation3 + $0x54] sm:$0xf]
      %v3365 = vld [vmem:[#allocation3 + $0x58] sm:$0xf]
      %v3366 = vld [vmem:[#allocation3 + $0x5c] sm:$0xf]
      %v3367 = vld [vmem:[#allocation3 + $0x60] sm:$0xf]
      %v3368 = vld [vmem:[#allocation3 + $0x64] sm:$0xf]
      %v3369 = vld [vmem:[#allocation3 + $0x68] sm:$0xf]
      %v3370 = vld [vmem:[#allocation3 + $0x6c] sm:$0xf]
      %v3371 = vld [vmem:[#allocation3 + $0x70] sm:$0xf]
      %v3372 = vld [vmem:[#allocation3 + $0x74] sm:$0xf]
      %v3373 = vld [vmem:[#allocation3 + $0x78] sm:$0xf]
      %v3374 = vld [vmem:[#allocation3 + $0x7c] sm:$0xf]
      %v3375 = vld [vmem:[%s3] sm:$0xf]
      %v3376 = vld [vmem:[%s3 + $0x4] sm:$0x3]
      %v3377 = vld [vmem:[%s2558] sm:$0xf]
      %v3378 = vld [vmem:[%s2558 + $0x4] sm:$0xf]
      %v3379 = vld [vmem:[%s2558 + $0x8] sm:$0xf]
      %v3380 = vld [vmem:[%s2558 + $0xc] sm:$0xf]
      %v3381 = vld [vmem:[%s2558 + $0x10] sm:$0xf]
      %v3382 = vld [vmem:[%s2558 + $0x14] sm:$0xf]
      %v3383 = vld [vmem:[%s2558 + $0x18] sm:$0xf]
      %v3384 = vld [vmem:[%s2558 + $0x1c] sm:$0xf]
      %v3385 = vld [vmem:[%s2558 + $0x20] sm:$0xf]
      %v3386 = vld [vmem:[%s2558 + $0x24] sm:$0xf]
      %v3387 = vld [vmem:[%s2558 + $0x28] sm:$0xf]
      %v3388 = vld [vmem:[%s2558 + $0x2c] sm:$0xf]
      %v3389 = vld [vmem:[%s2558 + $0x30] sm:$0xf]
      %v3390 = vld [vmem:[%s2558 + $0x34] sm:$0xf]
      %v3391 = vld [vmem:[%s2558 + $0x38] sm:$0xf]
      %v3392 = vld [vmem:[%s2558 + $0x3c] sm:$0xf]
      %v3393 = vld [vmem:[%s2558 + $0x40] sm:$0xf]
      %v3394 = vld [vmem:[%s2558 + $0x44] sm:$0xf]
      %v3395 = vld [vmem:[%s2558 + $0x48] sm:$0xf]
      %v3396 = vld [vmem:[%s2558 + $0x4c] sm:$0xf]
      %v3397 = vld [vmem:[%s2558 + $0x50] sm:$0xf]
      %v3398 = vld [vmem:[%s2558 + $0x54] sm:$0xf]
      %v3399 = vld [vmem:[%s2558 + $0x58] sm:$0xf]
      %v3400 = vld [vmem:[%s2558 + $0x5c] sm:$0xf]
      %v3401 = vld [vmem:[%s2558 + $0x60] sm:$0xf]
      %v3402 = vld [vmem:[%s2558 + $0x64] sm:$0xf]
      %v3403 = vld [vmem:[%s2558 + $0x68] sm:$0xf]
      %v3404 = vld [vmem:[%s2558 + $0x6c] sm:$0xf]
      %v3405 = vld [vmem:[%s2558 + $0x70] sm:$0xf]
      %v3406 = vld [vmem:[%s2558 + $0x74] sm:$0xf]
      %v3407 = vld [vmem:[%s2558 + $0x78] sm:$0xf]
      %v3408 = vld [vmem:[%s2558 + $0x7c] sm:$0xf]
      %s3409 = scalar_lea.vmem %s3, 8
      %v3410 = vld [vmem:[%s3409] sm:$0xf]
      %v3411 = vld [vmem:[%s3409 + $0x4] sm:$0x3]
      %v3444 = vunpack.c.l.b16 %v3377
      %v3445 = vunpack.c.l.b16 %v3378
      %v3446 = vunpack.c.l.b16 %v3379
      %v3447 = vunpack.c.l.b16 %v3380
      %v3448 = vunpack.c.l.b16 %v3381
      %v3449 = vunpack.c.l.b16 %v3382
      %v3450 = vunpack.c.l.b16 %v3383
      %v3451 = vunpack.c.l.b16 %v3384
      %v3452 = vunpack.c.l.b16 %v3385
      %v3453 = vunpack.c.l.b16 %v3386
      %v3454 = vunpack.c.l.b16 %v3387
      %v3455 = vunpack.c.l.b16 %v3388
      %v3456 = vunpack.c.l.b16 %v3389
      %v3457 = vunpack.c.l.b16 %v3390
      %v3458 = vunpack.c.l.b16 %v3391
      %v3459 = vunpack.c.l.b16 %v3392
      %v3460 = vunpack.c.l.b16 %v3393
      %v3461 = vunpack.c.l.b16 %v3394
      %v3462 = vunpack.c.l.b16 %v3395
      %v3463 = vunpack.c.l.b16 %v3396
      %v3464 = vunpack.c.l.b16 %v3397
      %v3465 = vunpack.c.l.b16 %v3398
      %v3466 = vunpack.c.l.b16 %v3399
      %v3467 = vunpack.c.l.b16 %v3400
      %v3468 = vunpack.c.l.b16 %v3401
      %v3469 = vunpack.c.l.b16 %v3402
      %v3470 = vunpack.c.l.b16 %v3403
      %v3471 = vunpack.c.l.b16 %v3404
      %v3472 = vunpack.c.l.b16 %v3405
      %v3473 = vunpack.c.l.b16 %v3406
      %v3474 = vunpack.c.l.b16 %v3407
      %v3475 = vunpack.c.l.b16 %v3408
      %v3476 = vpack.c.b16 %v3445, %v3444
      %v3477 = vpack.c.b16 %v3447, %v3446
      %v3478 = vpack.c.b16 %v3449, %v3448
      %v3479 = vpack.c.b16 %v3451, %v3450
      %v3480 = vpack.c.b16 %v3453, %v3452
      %v3481 = vpack.c.b16 %v3455, %v3454
      %v3482 = vpack.c.b16 %v3457, %v3456
      %v3483 = vpack.c.b16 %v3459, %v3458
      %v3484 = vpack.c.b16 %v3461, %v3460
      %v3485 = vpack.c.b16 %v3463, %v3462
      %v3486 = vpack.c.b16 %v3465, %v3464
      %v3487 = vpack.c.b16 %v3467, %v3466
      %v3488 = vpack.c.b16 %v3469, %v3468
      %v3489 = vpack.c.b16 %v3471, %v3470
      %v3490 = vpack.c.b16 %v3473, %v3472
      %v3491 = vpack.c.b16 %v3475, %v3474
      %v3494 = vunpack.c.l.b16 %v3410
      %v3495 = vunpack.c.l.b16 %v3411
      %v3496 = vpack.c.b16 %v3495, %v3494
      %v3498 = vsel %vm1414, %v3476, 0
      %v3501 = vsel %vm1414, %v3477, 0
      %v3504 = vsel %vm1414, %v3478, 0
      %v3507 = vsel %vm1414, %v3479, 0
      %v3510 = vsel %vm1414, %v3480, 0
      %v3513 = vsel %vm1414, %v3481, 0
      %v3516 = vsel %vm1414, %v3482, 0
      %v3519 = vsel %vm1414, %v3483, 0
      %v3522 = vsel %vm1414, %v3484, 0
      %v3525 = vsel %vm1414, %v3485, 0
      %v3528 = vsel %vm1414, %v3486, 0
      %v3531 = vsel %vm1414, %v3487, 0
      %v3534 = vsel %vm1414, %v3488, 0
      %v3537 = vsel %vm1414, %v3489, 0
      %v3540 = vsel %vm1414, %v3490, 0
      %v3543 = vsel %vm1414, %v3491, 0
      %v3546 = vsel %vm1463, %v3496, 0
      %3548 = vmatprep.subr.bf16.mxu0 0
      %3549 = vmatpush1.bf16.msra.mxu0 0
      %3550 = vmatprep.subr.bf16.mxu0 0
      %3551 = vmatpush1.bf16.msra.mxu0 0
      %3552 = vmatprep.subr.bf16.mxu0 0
      %3553 = vmatpush1.bf16.msra.mxu0 0
      %3554 = vmatprep.subr.bf16.mxu0 0
      %3555 = vmatpush1.bf16.msra.mxu0 0
      %3556 = vmatprep.subr.bf16.mxu0 0
      %3557 = vmatpush1.bf16.msra.mxu0 0
      %3558 = vmatprep.subr.bf16.mxu0 0
      %3559 = vmatpush1.bf16.msra.mxu0 0
      %3560 = vmatprep.subr.bf16.mxu0 0
      %3561 = vmatpush1.bf16.msra.mxu0 0
      %3562 = vmatprep.subr.bf16.mxu0 0
      %3563 = vmatpush1.bf16.msra.mxu0 %v3546
      %3564 = vmatprep.subr.bf16.mxu0 0
      %3565 = vmatpush2.bf16.msra.mxu0 0
      %3566 = vmatprep.subr.bf16.mxu0 0
      %3567 = vmatpush2.bf16.msra.mxu0 0
      %3568 = vmatprep.subr.bf16.mxu0 0
      %3569 = vmatpush2.bf16.msra.mxu0 0
      %3570 = vmatprep.subr.bf16.mxu0 0
      %3571 = vmatpush2.bf16.msra.mxu0 0
      %3572 = vmatprep.subr.bf16.mxu0 0
      %3573 = vmatpush2.bf16.msra.mxu0 0
      %3574 = vmatprep.subr.bf16.mxu0 0
      %3575 = vmatpush2.bf16.msra.mxu0 0
      %3576 = vmatprep.subr.bf16.mxu0 0
      %3577 = vmatpush2.bf16.msra.mxu0 0
      %3578 = vmatprep.subr.bf16.mxu0 0
      %3579 = vmatpush2.bf16.msra.mxu0 0
      %3580 = vmatprep.mubr.bf16.mxu0 0
      %3581 = vmatmul.mubr.bf16.gmra.mxu0 %v3498
      %v3582 = vpop.f32.mrf.mxu0
      %v3583 = vadd.f32 0.0, %v3582
      %v3584 = vpop.f32.mrf.mxu0
      %v3585 = vpop.f32.mrf.mxu0
      %v3586 = vadd.f32 0.0, %v3585
      %v3587 = vpop.f32.mrf.mxu0
      %3588 = vmatprep.mubr.bf16.mxu0 0
      %3589 = vmatmul.mubr.bf16.gmra.mxu0 %v3501
      %v3590 = vpop.f32.mrf.mxu0
      %v3591 = vadd.f32 0.0, %v3590
      %v3592 = vpop.f32.mrf.mxu0
      %v3593 = vpop.f32.mrf.mxu0
      %v3594 = vadd.f32 0.0, %v3593
      %v3595 = vpop.f32.mrf.mxu0
      %3596 = vmatprep.mubr.bf16.mxu0 0
      %3597 = vmatmul.mubr.bf16.gmra.mxu0 %v3504
      %v3598 = vpop.f32.mrf.mxu0
      %v3599 = vadd.f32 0.0, %v3598
      %v3600 = vpop.f32.mrf.mxu0
      %v3601 = vpop.f32.mrf.mxu0
      %v3602 = vadd.f32 0.0, %v3601
      %v3603 = vpop.f32.mrf.mxu0
      %3604 = vmatprep.mubr.bf16.mxu0 0
      %3605 = vmatmul.mubr.bf16.gmra.mxu0 %v3507
      %v3606 = vpop.f32.mrf.mxu0
      %v3607 = vadd.f32 0.0, %v3606
      %v3608 = vpop.f32.mrf.mxu0
      %v3609 = vpop.f32.mrf.mxu0
      %v3610 = vadd.f32 0.0, %v3609
      %v3611 = vpop.f32.mrf.mxu0
      %3612 = vmatprep.mubr.bf16.mxu0 0
      %3613 = vmatmul.mubr.bf16.gmra.mxu0 %v3510
      %v3614 = vpop.f32.mrf.mxu0
      %v3615 = vadd.f32 0.0, %v3614
      %v3616 = vpop.f32.mrf.mxu0
      %v3617 = vpop.f32.mrf.mxu0
      %v3618 = vadd.f32 0.0, %v3617
      %v3619 = vpop.f32.mrf.mxu0
      %3620 = vmatprep.mubr.bf16.mxu0 0
      %3621 = vmatmul.mubr.bf16.gmra.mxu0 %v3513
      %v3622 = vpop.f32.mrf.mxu0
      %v3623 = vadd.f32 0.0, %v3622
      %v3624 = vpop.f32.mrf.mxu0
      %v3625 = vpop.f32.mrf.mxu0
      %v3626 = vadd.f32 0.0, %v3625
      %v3627 = vpop.f32.mrf.mxu0
      %3628 = vmatprep.mubr.bf16.mxu0 0
      %3629 = vmatmul.mubr.bf16.gmra.mxu0 %v3516
      %v3630 = vpop.f32.mrf.mxu0
      %v3631 = vadd.f32 0.0, %v3630
      %v3632 = vpop.f32.mrf.mxu0
      %v3633 = vpop.f32.mrf.mxu0
      %v3634 = vadd.f32 0.0, %v3633
      %v3635 = vpop.f32.mrf.mxu0
      %3636 = vmatprep.mubr.bf16.mxu0 0
      %3637 = vmatmul.mubr.bf16.gmra.mxu0 %v3519
      %v3638 = vpop.f32.mrf.mxu0
      %v3639 = vadd.f32 0.0, %v3638
      %v3640 = vpop.f32.mrf.mxu0
      %v3641 = vpop.f32.mrf.mxu0
      %v3642 = vadd.f32 0.0, %v3641
      %v3643 = vpop.f32.mrf.mxu0
      %3644 = vmatprep.mubr.bf16.mxu0 0
      %3645 = vmatmul.mubr.bf16.gmra.mxu0 %v3522
      %v3646 = vpop.f32.mrf.mxu0
      %v3647 = vadd.f32 0.0, %v3646
      %v3648 = vpop.f32.mrf.mxu0
      %v3649 = vpop.f32.mrf.mxu0
      %v3650 = vadd.f32 0.0, %v3649
      %v3651 = vpop.f32.mrf.mxu0
      %3652 = vmatprep.mubr.bf16.mxu0 0
      %3653 = vmatmul.mubr.bf16.gmra.mxu0 %v3525
      %v3654 = vpop.f32.mrf.mxu0
      %v3655 = vadd.f32 0.0, %v3654
      %v3656 = vpop.f32.mrf.mxu0
      %v3657 = vpop.f32.mrf.mxu0
      %v3658 = vadd.f32 0.0, %v3657
      %v3659 = vpop.f32.mrf.mxu0
      %3660 = vmatprep.mubr.bf16.mxu0 0
      %3661 = vmatmul.mubr.bf16.gmra.mxu0 %v3528
      %v3662 = vpop.f32.mrf.mxu0
      %v3663 = vadd.f32 0.0, %v3662
      %v3664 = vpop.f32.mrf.mxu0
      %v3665 = vpop.f32.mrf.mxu0
      %v3666 = vadd.f32 0.0, %v3665
      %v3667 = vpop.f32.mrf.mxu0
      %3668 = vmatprep.mubr.bf16.mxu0 0
      %3669 = vmatmul.mubr.bf16.gmra.mxu0 %v3531
      %v3670 = vpop.f32.mrf.mxu0
      %v3671 = vadd.f32 0.0, %v3670
      %v3672 = vpop.f32.mrf.mxu0
      %v3673 = vpop.f32.mrf.mxu0
      %v3674 = vadd.f32 0.0, %v3673
      %v3675 = vpop.f32.mrf.mxu0
      %3676 = vmatprep.mubr.bf16.mxu0 0
      %3677 = vmatmul.mubr.bf16.gmra.mxu0 %v3534
      %v3678 = vpop.f32.mrf.mxu0
      %v3679 = vadd.f32 0.0, %v3678
      %v3680 = vpop.f32.mrf.mxu0
      %v3681 = vpop.f32.mrf.mxu0
      %v3682 = vadd.f32 0.0, %v3681
      %v3683 = vpop.f32.mrf.mxu0
      %3684 = vmatprep.mubr.bf16.mxu0 0
      %3685 = vmatmul.mubr.bf16.gmra.mxu0 %v3537
      %v3686 = vpop.f32.mrf.mxu0
      %v3687 = vadd.f32 0.0, %v3686
      %v3688 = vpop.f32.mrf.mxu0
      %v3689 = vpop.f32.mrf.mxu0
      %v3690 = vadd.f32 0.0, %v3689
      %v3691 = vpop.f32.mrf.mxu0
      %3692 = vmatprep.mubr.bf16.mxu0 0
      %3693 = vmatmul.mubr.bf16.gmra.mxu0 %v3540
      %v3694 = vpop.f32.mrf.mxu0
      %v3695 = vadd.f32 0.0, %v3694
      %v3696 = vpop.f32.mrf.mxu0
      %v3697 = vpop.f32.mrf.mxu0
      %v3698 = vadd.f32 0.0, %v3697
      %v3699 = vpop.f32.mrf.mxu0
      %3700 = vmatprep.mubr.bf16.mxu0 0
      %3701 = vmatmul.mubr.bf16.gmra.mxu0 %v3543
      %v3702 = vpop.f32.mrf.mxu0
      %v3703 = vadd.f32 0.0, %v3702
      %v3704 = vpop.f32.mrf.mxu0
      %v3705 = vpop.f32.mrf.mxu0
      %v3706 = vadd.f32 0.0, %v3705
      %v3707 = vpop.f32.mrf.mxu0
      %3708 = vdwg.mxu0
      %v3741 = vunpack.c.l.b16 %v3343
      %v3742 = vunpack.c.l.b16 %v3344
      %v3743 = vunpack.c.l.b16 %v3345
      %v3744 = vunpack.c.l.b16 %v3346
      %v3745 = vunpack.c.l.b16 %v3347
      %v3746 = vunpack.c.l.b16 %v3348
      %v3747 = vunpack.c.l.b16 %v3349
      %v3748 = vunpack.c.l.b16 %v3350
      %v3749 = vunpack.c.l.b16 %v3351
      %v3750 = vunpack.c.l.b16 %v3352
      %v3751 = vunpack.c.l.b16 %v3353
      %v3752 = vunpack.c.l.b16 %v3354
      %v3753 = vunpack.c.l.b16 %v3355
      %v3754 = vunpack.c.l.b16 %v3356
      %v3755 = vunpack.c.l.b16 %v3357
      %v3756 = vunpack.c.l.b16 %v3358
      %v3757 = vunpack.c.l.b16 %v3359
      %v3758 = vunpack.c.l.b16 %v3360
      %v3759 = vunpack.c.l.b16 %v3361
      %v3760 = vunpack.c.l.b16 %v3362
      %v3761 = vunpack.c.l.b16 %v3363
      %v3762 = vunpack.c.l.b16 %v3364
      %v3763 = vunpack.c.l.b16 %v3365
      %v3764 = vunpack.c.l.b16 %v3366
      %v3765 = vunpack.c.l.b16 %v3367
      %v3766 = vunpack.c.l.b16 %v3368
      %v3767 = vunpack.c.l.b16 %v3369
      %v3768 = vunpack.c.l.b16 %v3370
      %v3769 = vunpack.c.l.b16 %v3371
      %v3770 = vunpack.c.l.b16 %v3372
      %v3771 = vunpack.c.l.b16 %v3373
      %v3772 = vunpack.c.l.b16 %v3374
      %v3773 = vpack.c.b16 %v3742, %v3741
      %v3774 = vpack.c.b16 %v3744, %v3743
      %v3775 = vpack.c.b16 %v3746, %v3745
      %v3776 = vpack.c.b16 %v3748, %v3747
      %v3777 = vpack.c.b16 %v3750, %v3749
      %v3778 = vpack.c.b16 %v3752, %v3751
      %v3779 = vpack.c.b16 %v3754, %v3753
      %v3780 = vpack.c.b16 %v3756, %v3755
      %v3781 = vpack.c.b16 %v3758, %v3757
      %v3782 = vpack.c.b16 %v3760, %v3759
      %v3783 = vpack.c.b16 %v3762, %v3761
      %v3784 = vpack.c.b16 %v3764, %v3763
      %v3785 = vpack.c.b16 %v3766, %v3765
      %v3786 = vpack.c.b16 %v3768, %v3767
      %v3787 = vpack.c.b16 %v3770, %v3769
      %v3788 = vpack.c.b16 %v3772, %v3771
      %v3791 = vunpack.c.l.b16 %v3375
      %v3792 = vunpack.c.l.b16 %v3376
      %v3793 = vpack.c.b16 %v3792, %v3791
      %v3795 = vsel %vm1414, %v3773, 0
      %v3798 = vsel %vm1414, %v3774, 0
      %v3801 = vsel %vm1414, %v3775, 0
      %v3804 = vsel %vm1414, %v3776, 0
      %v3807 = vsel %vm1414, %v3777, 0
      %v3810 = vsel %vm1414, %v3778, 0
      %v3813 = vsel %vm1414, %v3779, 0
      %v3816 = vsel %vm1414, %v3780, 0
      %v3819 = vsel %vm1414, %v3781, 0
      %v3822 = vsel %vm1414, %v3782, 0
      %v3825 = vsel %vm1414, %v3783, 0
      %v3828 = vsel %vm1414, %v3784, 0
      %v3831 = vsel %vm1414, %v3785, 0
      %v3834 = vsel %vm1414, %v3786, 0
      %v3837 = vsel %vm1414, %v3787, 0
      %v3840 = vsel %vm1414, %v3788, 0
      %v3843 = vsel %vm1463, %v3793, 0
      %3845 = vmatprep.subr.bf16.mxu0 0
      %3846 = vmatpush1.bf16.msra.mxu0 0
      %3847 = vmatprep.subr.bf16.mxu0 0
      %3848 = vmatpush1.bf16.msra.mxu0 0
      %3849 = vmatprep.subr.bf16.mxu0 0
      %3850 = vmatpush1.bf16.msra.mxu0 0
      %3851 = vmatprep.subr.bf16.mxu0 0
      %3852 = vmatpush1.bf16.msra.mxu0 0
      %3853 = vmatprep.subr.bf16.mxu0 0
      %3854 = vmatpush1.bf16.msra.mxu0 0
      %3855 = vmatprep.subr.bf16.mxu0 0
      %3856 = vmatpush1.bf16.msra.mxu0 0
      %3857 = vmatprep.subr.bf16.mxu0 0
      %3858 = vmatpush1.bf16.msra.mxu0 0
      %3859 = vmatprep.subr.bf16.mxu0 0
      %3860 = vmatpush1.bf16.msra.mxu0 %v3843
      %3861 = vmatprep.subr.bf16.mxu0 0
      %3862 = vmatpush2.bf16.msra.mxu0 0
      %3863 = vmatprep.subr.bf16.mxu0 0
      %3864 = vmatpush2.bf16.msra.mxu0 0
      %3865 = vmatprep.subr.bf16.mxu0 0
      %3866 = vmatpush2.bf16.msra.mxu0 0
      %3867 = vmatprep.subr.bf16.mxu0 0
      %3868 = vmatpush2.bf16.msra.mxu0 0
      %3869 = vmatprep.subr.bf16.mxu0 0
      %3870 = vmatpush2.bf16.msra.mxu0 0
      %3871 = vmatprep.subr.bf16.mxu0 0
      %3872 = vmatpush2.bf16.msra.mxu0 0
      %3873 = vmatprep.subr.bf16.mxu0 0
      %3874 = vmatpush2.bf16.msra.mxu0 0
      %3875 = vmatprep.subr.bf16.mxu0 0
      %3876 = vmatpush2.bf16.msra.mxu0 0
      %3877 = vmatprep.mubr.bf16.mxu0 0
      %3878 = vmatmul.mubr.bf16.gmra.mxu0 %v3795
      %v3879 = vpop.f32.mrf.mxu0
      %v3880 = vadd.f32 %v3583, %v3879
      %v3881 = vpop.f32.mrf.mxu0
      %v3882 = vpop.f32.mrf.mxu0
      %v3883 = vadd.f32 %v3586, %v3882
      %v3884 = vpop.f32.mrf.mxu0
      %3885 = vmatprep.mubr.bf16.mxu0 0
      %3886 = vmatmul.mubr.bf16.gmra.mxu0 %v3798
      %v3887 = vpop.f32.mrf.mxu0
      %v3888 = vadd.f32 %v3591, %v3887
      %v3889 = vpop.f32.mrf.mxu0
      %v3890 = vpop.f32.mrf.mxu0
      %v3891 = vadd.f32 %v3594, %v3890
      %v3892 = vpop.f32.mrf.mxu0
      %3893 = vmatprep.mubr.bf16.mxu0 0
      %3894 = vmatmul.mubr.bf16.gmra.mxu0 %v3801
      %v3895 = vpop.f32.mrf.mxu0
      %v3896 = vadd.f32 %v3599, %v3895
      %v3897 = vpop.f32.mrf.mxu0
      %v3898 = vpop.f32.mrf.mxu0
      %v3899 = vadd.f32 %v3602, %v3898
      %v3900 = vpop.f32.mrf.mxu0
      %3901 = vmatprep.mubr.bf16.mxu0 0
      %3902 = vmatmul.mubr.bf16.gmra.mxu0 %v3804
      %v3903 = vpop.f32.mrf.mxu0
      %v3904 = vadd.f32 %v3607, %v3903
      %v3905 = vpop.f32.mrf.mxu0
      %v3906 = vpop.f32.mrf.mxu0
      %v3907 = vadd.f32 %v3610, %v3906
      %v3908 = vpop.f32.mrf.mxu0
      %3909 = vmatprep.mubr.bf16.mxu0 0
      %3910 = vmatmul.mubr.bf16.gmra.mxu0 %v3807
      %v3911 = vpop.f32.mrf.mxu0
      %v3912 = vadd.f32 %v3615, %v3911
      %v3913 = vpop.f32.mrf.mxu0
      %v3914 = vpop.f32.mrf.mxu0
      %v3915 = vadd.f32 %v3618, %v3914
      %v3916 = vpop.f32.mrf.mxu0
      %3917 = vmatprep.mubr.bf16.mxu0 0
      %3918 = vmatmul.mubr.bf16.gmra.mxu0 %v3810
      %v3919 = vpop.f32.mrf.mxu0
      %v3920 = vadd.f32 %v3623, %v3919
      %v3921 = vpop.f32.mrf.mxu0
      %v3922 = vpop.f32.mrf.mxu0
      %v3923 = vadd.f32 %v3626, %v3922
      %v3924 = vpop.f32.mrf.mxu0
      %3925 = vmatprep.mubr.bf16.mxu0 0
      %3926 = vmatmul.mubr.bf16.gmra.mxu0 %v3813
      %v3927 = vpop.f32.mrf.mxu0
      %v3928 = vadd.f32 %v3631, %v3927
      %v3929 = vpop.f32.mrf.mxu0
      %v3930 = vpop.f32.mrf.mxu0
      %v3931 = vadd.f32 %v3634, %v3930
      %v3932 = vpop.f32.mrf.mxu0
      %3933 = vmatprep.mubr.bf16.mxu0 0
      %3934 = vmatmul.mubr.bf16.gmra.mxu0 %v3816
      %v3935 = vpop.f32.mrf.mxu0
      %v3936 = vadd.f32 %v3639, %v3935
      %v3937 = vpop.f32.mrf.mxu0
      %v3938 = vpop.f32.mrf.mxu0
      %v3939 = vadd.f32 %v3642, %v3938
      %v3940 = vpop.f32.mrf.mxu0
      %3941 = vmatprep.mubr.bf16.mxu0 0
      %3942 = vmatmul.mubr.bf16.gmra.mxu0 %v3819
      %v3943 = vpop.f32.mrf.mxu0
      %v3944 = vadd.f32 %v3647, %v3943
      %v3945 = vpop.f32.mrf.mxu0
      %v3946 = vpop.f32.mrf.mxu0
      %v3947 = vadd.f32 %v3650, %v3946
      %v3948 = vpop.f32.mrf.mxu0
      %3949 = vmatprep.mubr.bf16.mxu0 0
      %3950 = vmatmul.mubr.bf16.gmra.mxu0 %v3822
      %v3951 = vpop.f32.mrf.mxu0
      %v3952 = vadd.f32 %v3655, %v3951
      %v3953 = vpop.f32.mrf.mxu0
      %v3954 = vpop.f32.mrf.mxu0
      %v3955 = vadd.f32 %v3658, %v3954
      %v3956 = vpop.f32.mrf.mxu0
      %3957 = vmatprep.mubr.bf16.mxu0 0
      %3958 = vmatmul.mubr.bf16.gmra.mxu0 %v3825
      %v3959 = vpop.f32.mrf.mxu0
      %v3960 = vadd.f32 %v3663, %v3959
      %v3961 = vpop.f32.mrf.mxu0
      %v3962 = vpop.f32.mrf.mxu0
      %v3963 = vadd.f32 %v3666, %v3962
      %v3964 = vpop.f32.mrf.mxu0
      %3965 = vmatprep.mubr.bf16.mxu0 0
      %3966 = vmatmul.mubr.bf16.gmra.mxu0 %v3828
      %v3967 = vpop.f32.mrf.mxu0
      %v3968 = vadd.f32 %v3671, %v3967
      %v3969 = vpop.f32.mrf.mxu0
      %v3970 = vpop.f32.mrf.mxu0
      %v3971 = vadd.f32 %v3674, %v3970
      %v3972 = vpop.f32.mrf.mxu0
      %3973 = vmatprep.mubr.bf16.mxu0 0
      %3974 = vmatmul.mubr.bf16.gmra.mxu0 %v3831
      %v3975 = vpop.f32.mrf.mxu0
      %v3976 = vadd.f32 %v3679, %v3975
      %v3977 = vpop.f32.mrf.mxu0
      %v3978 = vpop.f32.mrf.mxu0
      %v3979 = vadd.f32 %v3682, %v3978
      %v3980 = vpop.f32.mrf.mxu0
      %3981 = vmatprep.mubr.bf16.mxu0 0
      %3982 = vmatmul.mubr.bf16.gmra.mxu0 %v3834
      %v3983 = vpop.f32.mrf.mxu0
      %v3984 = vadd.f32 %v3687, %v3983
      %v3985 = vpop.f32.mrf.mxu0
      %v3986 = vpop.f32.mrf.mxu0
      %v3987 = vadd.f32 %v3690, %v3986
      %v3988 = vpop.f32.mrf.mxu0
      %3989 = vmatprep.mubr.bf16.mxu0 0
      %3990 = vmatmul.mubr.bf16.gmra.mxu0 %v3837
      %v3991 = vpop.f32.mrf.mxu0
      %v3992 = vadd.f32 %v3695, %v3991
      %v3993 = vpop.f32.mrf.mxu0
      %v3994 = vpop.f32.mrf.mxu0
      %v3995 = vadd.f32 %v3698, %v3994
      %v3996 = vpop.f32.mrf.mxu0
      %3997 = vmatprep.mubr.bf16.mxu0 0
      %3998 = vmatmul.mubr.bf16.gmra.mxu0 %v3840
      %v3999 = vpop.f32.mrf.mxu0
      %v4000 = vadd.f32 %v3703, %v3999
      %v4001 = vpop.f32.mrf.mxu0
      %v4002 = vpop.f32.mrf.mxu0
      %v4003 = vadd.f32 %v3706, %v4002
      %v4004 = vpop.f32.mrf.mxu0
      %4005 = vdwg.mxu0
      %s4006 = scalar_lea.vmem [#allocation3], 16
      %v4007 = vld [vmem:[%s4006] sm:$0xf]
      %v4008 = vld [vmem:[%s4006 + $0x4] sm:$0xf]
      %v4009 = vld [vmem:[%s4006 + $0x8] sm:$0xf]
      %v4010 = vld [vmem:[%s4006 + $0xc] sm:$0xf]
      %v4011 = vld [vmem:[%s4006 + $0x10] sm:$0xf]
      %v4012 = vld [vmem:[%s4006 + $0x14] sm:$0xf]
      %v4013 = vld [vmem:[%s4006 + $0x18] sm:$0xf]
      %v4014 = vld [vmem:[%s4006 + $0x1c] sm:$0xf]
      %v4015 = vld [vmem:[%s4006 + $0x20] sm:$0xf]
      %v4016 = vld [vmem:[%s4006 + $0x24] sm:$0xf]
      %v4017 = vld [vmem:[%s4006 + $0x28] sm:$0xf]
      %v4018 = vld [vmem:[%s4006 + $0x2c] sm:$0xf]
      %v4019 = vld [vmem:[%s4006 + $0x30] sm:$0xf]
      %v4020 = vld [vmem:[%s4006 + $0x34] sm:$0xf]
      %v4021 = vld [vmem:[%s4006 + $0x38] sm:$0xf]
      %v4022 = vld [vmem:[%s4006 + $0x3c] sm:$0xf]
      %v4023 = vld [vmem:[%s4006 + $0x40] sm:$0xf]
      %v4024 = vld [vmem:[%s4006 + $0x44] sm:$0xf]
      %v4025 = vld [vmem:[%s4006 + $0x48] sm:$0xf]
      %v4026 = vld [vmem:[%s4006 + $0x4c] sm:$0xf]
      %v4027 = vld [vmem:[%s4006 + $0x50] sm:$0xf]
      %v4028 = vld [vmem:[%s4006 + $0x54] sm:$0xf]
      %v4029 = vld [vmem:[%s4006 + $0x58] sm:$0xf]
      %v4030 = vld [vmem:[%s4006 + $0x5c] sm:$0xf]
      %v4031 = vld [vmem:[%s4006 + $0x60] sm:$0xf]
      %v4032 = vld [vmem:[%s4006 + $0x64] sm:$0xf]
      %v4033 = vld [vmem:[%s4006 + $0x68] sm:$0xf]
      %v4034 = vld [vmem:[%s4006 + $0x6c] sm:$0xf]
      %v4035 = vld [vmem:[%s4006 + $0x70] sm:$0xf]
      %v4036 = vld [vmem:[%s4006 + $0x74] sm:$0xf]
      %v4037 = vld [vmem:[%s4006 + $0x78] sm:$0xf]
      %v4038 = vld [vmem:[%s4006 + $0x7c] sm:$0xf]
      %s4039 = scalar_lea.vmem %s3, 16
      %v4040 = vld [vmem:[%s4039] sm:$0xf]
      %v4041 = vld [vmem:[%s4039 + $0x4] sm:$0x3]
      %v4074 = vunpack.c.l.b16 %v4007
      %v4075 = vunpack.c.l.b16 %v4008
      %v4076 = vunpack.c.l.b16 %v4009
      %v4077 = vunpack.c.l.b16 %v4010
      %v4078 = vunpack.c.l.b16 %v4011
      %v4079 = vunpack.c.l.b16 %v4012
      %v4080 = vunpack.c.l.b16 %v4013
      %v4081 = vunpack.c.l.b16 %v4014
      %v4082 = vunpack.c.l.b16 %v4015
      %v4083 = vunpack.c.l.b16 %v4016
      %v4084 = vunpack.c.l.b16 %v4017
      %v4085 = vunpack.c.l.b16 %v4018
      %v4086 = vunpack.c.l.b16 %v4019
      %v4087 = vunpack.c.l.b16 %v4020
      %v4088 = vunpack.c.l.b16 %v4021
      %v4089 = vunpack.c.l.b16 %v4022
      %v4090 = vunpack.c.l.b16 %v4023
      %v4091 = vunpack.c.l.b16 %v4024
      %v4092 = vunpack.c.l.b16 %v4025
      %v4093 = vunpack.c.l.b16 %v4026
      %v4094 = vunpack.c.l.b16 %v4027
      %v4095 = vunpack.c.l.b16 %v4028
      %v4096 = vunpack.c.l.b16 %v4029
      %v4097 = vunpack.c.l.b16 %v4030
      %v4098 = vunpack.c.l.b16 %v4031
      %v4099 = vunpack.c.l.b16 %v4032
      %v4100 = vunpack.c.l.b16 %v4033
      %v4101 = vunpack.c.l.b16 %v4034
      %v4102 = vunpack.c.l.b16 %v4035
      %v4103 = vunpack.c.l.b16 %v4036
      %v4104 = vunpack.c.l.b16 %v4037
      %v4105 = vunpack.c.l.b16 %v4038
      %v4106 = vpack.c.b16 %v4075, %v4074
      %v4107 = vpack.c.b16 %v4077, %v4076
      %v4108 = vpack.c.b16 %v4079, %v4078
      %v4109 = vpack.c.b16 %v4081, %v4080
      %v4110 = vpack.c.b16 %v4083, %v4082
      %v4111 = vpack.c.b16 %v4085, %v4084
      %v4112 = vpack.c.b16 %v4087, %v4086
      %v4113 = vpack.c.b16 %v4089, %v4088
      %v4114 = vpack.c.b16 %v4091, %v4090
      %v4115 = vpack.c.b16 %v4093, %v4092
      %v4116 = vpack.c.b16 %v4095, %v4094
      %v4117 = vpack.c.b16 %v4097, %v4096
      %v4118 = vpack.c.b16 %v4099, %v4098
      %v4119 = vpack.c.b16 %v4101, %v4100
      %v4120 = vpack.c.b16 %v4103, %v4102
      %v4121 = vpack.c.b16 %v4105, %v4104
      %v4124 = vunpack.c.l.b16 %v4040
      %v4125 = vunpack.c.l.b16 %v4041
      %v4126 = vpack.c.b16 %v4125, %v4124
      %v4128 = vsel %vm1414, %v4106, 0
      %v4131 = vsel %vm1414, %v4107, 0
      %v4134 = vsel %vm1414, %v4108, 0
      %v4137 = vsel %vm1414, %v4109, 0
      %v4140 = vsel %vm1414, %v4110, 0
      %v4143 = vsel %vm1414, %v4111, 0
      %v4146 = vsel %vm1414, %v4112, 0
      %v4149 = vsel %vm1414, %v4113, 0
      %v4152 = vsel %vm1414, %v4114, 0
      %v4155 = vsel %vm1414, %v4115, 0
      %v4158 = vsel %vm1414, %v4116, 0
      %v4161 = vsel %vm1414, %v4117, 0
      %v4164 = vsel %vm1414, %v4118, 0
      %v4167 = vsel %vm1414, %v4119, 0
      %v4170 = vsel %vm1414, %v4120, 0
      %v4173 = vsel %vm1414, %v4121, 0
      %v4176 = vsel %vm1463, %v4126, 0
      %4178 = vmatprep.subr.bf16.mxu0 0
      %4179 = vmatpush1.bf16.msra.mxu0 0
      %4180 = vmatprep.subr.bf16.mxu0 0
      %4181 = vmatpush1.bf16.msra.mxu0 0
      %4182 = vmatprep.subr.bf16.mxu0 0
      %4183 = vmatpush1.bf16.msra.mxu0 0
      %4184 = vmatprep.subr.bf16.mxu0 0
      %4185 = vmatpush1.bf16.msra.mxu0 0
      %4186 = vmatprep.subr.bf16.mxu0 0
      %4187 = vmatpush1.bf16.msra.mxu0 0
      %4188 = vmatprep.subr.bf16.mxu0 0
      %4189 = vmatpush1.bf16.msra.mxu0 0
      %4190 = vmatprep.subr.bf16.mxu0 0
      %4191 = vmatpush1.bf16.msra.mxu0 0
      %4192 = vmatprep.subr.bf16.mxu0 0
      %4193 = vmatpush1.bf16.msra.mxu0 %v4176
      %4194 = vmatprep.subr.bf16.mxu0 0
      %4195 = vmatpush2.bf16.msra.mxu0 0
      %4196 = vmatprep.subr.bf16.mxu0 0
      %4197 = vmatpush2.bf16.msra.mxu0 0
      %4198 = vmatprep.subr.bf16.mxu0 0
      %4199 = vmatpush2.bf16.msra.mxu0 0
      %4200 = vmatprep.subr.bf16.mxu0 0
      %4201 = vmatpush2.bf16.msra.mxu0 0
      %4202 = vmatprep.subr.bf16.mxu0 0
      %4203 = vmatpush2.bf16.msra.mxu0 0
      %4204 = vmatprep.subr.bf16.mxu0 0
      %4205 = vmatpush2.bf16.msra.mxu0 0
      %4206 = vmatprep.subr.bf16.mxu0 0
      %4207 = vmatpush2.bf16.msra.mxu0 0
      %4208 = vmatprep.subr.bf16.mxu0 0
      %4209 = vmatpush2.bf16.msra.mxu0 0
      %4210 = vmatprep.mubr.bf16.mxu0 0
      %4211 = vmatmul.mubr.bf16.gmra.mxu0 %v4128
      %v4212 = vpop.f32.mrf.mxu0
      %v4213 = vadd.f32 0.0, %v4212
      %v4214 = vpop.f32.mrf.mxu0
      %v4215 = vpop.f32.mrf.mxu0
      %v4216 = vadd.f32 0.0, %v4215
      %v4217 = vpop.f32.mrf.mxu0
      %4218 = vmatprep.mubr.bf16.mxu0 0
      %4219 = vmatmul.mubr.bf16.gmra.mxu0 %v4131
      %v4220 = vpop.f32.mrf.mxu0
      %v4221 = vadd.f32 0.0, %v4220
      %v4222 = vpop.f32.mrf.mxu0
      %v4223 = vpop.f32.mrf.mxu0
      %v4224 = vadd.f32 0.0, %v4223
      %v4225 = vpop.f32.mrf.mxu0
      %4226 = vmatprep.mubr.bf16.mxu0 0
      %4227 = vmatmul.mubr.bf16.gmra.mxu0 %v4134
      %v4228 = vpop.f32.mrf.mxu0
      %v4229 = vadd.f32 0.0, %v4228
      %v4230 = vpop.f32.mrf.mxu0
      %v4231 = vpop.f32.mrf.mxu0
      %v4232 = vadd.f32 0.0, %v4231
      %v4233 = vpop.f32.mrf.mxu0
      %4234 = vmatprep.mubr.bf16.mxu0 0
      %4235 = vmatmul.mubr.bf16.gmra.mxu0 %v4137
      %v4236 = vpop.f32.mrf.mxu0
      %v4237 = vadd.f32 0.0, %v4236
      %v4238 = vpop.f32.mrf.mxu0
      %v4239 = vpop.f32.mrf.mxu0
      %v4240 = vadd.f32 0.0, %v4239
      %v4241 = vpop.f32.mrf.mxu0
      %4242 = vmatprep.mubr.bf16.mxu0 0
      %4243 = vmatmul.mubr.bf16.gmra.mxu0 %v4140
      %v4244 = vpop.f32.mrf.mxu0
      %v4245 = vadd.f32 0.0, %v4244
      %v4246 = vpop.f32.mrf.mxu0
      %v4247 = vpop.f32.mrf.mxu0
      %v4248 = vadd.f32 0.0, %v4247
      %v4249 = vpop.f32.mrf.mxu0
      %4250 = vmatprep.mubr.bf16.mxu0 0
      %4251 = vmatmul.mubr.bf16.gmra.mxu0 %v4143
      %v4252 = vpop.f32.mrf.mxu0
      %v4253 = vadd.f32 0.0, %v4252
      %v4254 = vpop.f32.mrf.mxu0
      %v4255 = vpop.f32.mrf.mxu0
      %v4256 = vadd.f32 0.0, %v4255
      %v4257 = vpop.f32.mrf.mxu0
      %4258 = vmatprep.mubr.bf16.mxu0 0
      %4259 = vmatmul.mubr.bf16.gmra.mxu0 %v4146
      %v4260 = vpop.f32.mrf.mxu0
      %v4261 = vadd.f32 0.0, %v4260
      %v4262 = vpop.f32.mrf.mxu0
      %v4263 = vpop.f32.mrf.mxu0
      %v4264 = vadd.f32 0.0, %v4263
      %v4265 = vpop.f32.mrf.mxu0
      %4266 = vmatprep.mubr.bf16.mxu0 0
      %4267 = vmatmul.mubr.bf16.gmra.mxu0 %v4149
      %v4268 = vpop.f32.mrf.mxu0
      %v4269 = vadd.f32 0.0, %v4268
      %v4270 = vpop.f32.mrf.mxu0
      %v4271 = vpop.f32.mrf.mxu0
      %v4272 = vadd.f32 0.0, %v4271
      %v4273 = vpop.f32.mrf.mxu0
      %4274 = vmatprep.mubr.bf16.mxu0 0
      %4275 = vmatmul.mubr.bf16.gmra.mxu0 %v4152
      %v4276 = vpop.f32.mrf.mxu0
      %v4277 = vadd.f32 0.0, %v4276
      %v4278 = vpop.f32.mrf.mxu0
      %v4279 = vpop.f32.mrf.mxu0
      %v4280 = vadd.f32 0.0, %v4279
      %v4281 = vpop.f32.mrf.mxu0
      %4282 = vmatprep.mubr.bf16.mxu0 0
      %4283 = vmatmul.mubr.bf16.gmra.mxu0 %v4155
      %v4284 = vpop.f32.mrf.mxu0
      %v4285 = vadd.f32 0.0, %v4284
      %v4286 = vpop.f32.mrf.mxu0
      %v4287 = vpop.f32.mrf.mxu0
      %v4288 = vadd.f32 0.0, %v4287
      %v4289 = vpop.f32.mrf.mxu0
      %4290 = vmatprep.mubr.bf16.mxu0 0
      %4291 = vmatmul.mubr.bf16.gmra.mxu0 %v4158
      %v4292 = vpop.f32.mrf.mxu0
      %v4293 = vadd.f32 0.0, %v4292
      %v4294 = vpop.f32.mrf.mxu0
      %v4295 = vpop.f32.mrf.mxu0
      %v4296 = vadd.f32 0.0, %v4295
      %v4297 = vpop.f32.mrf.mxu0
      %4298 = vmatprep.mubr.bf16.mxu0 0
      %4299 = vmatmul.mubr.bf16.gmra.mxu0 %v4161
      %v4300 = vpop.f32.mrf.mxu0
      %v4301 = vadd.f32 0.0, %v4300
      %v4302 = vpop.f32.mrf.mxu0
      %v4303 = vpop.f32.mrf.mxu0
      %v4304 = vadd.f32 0.0, %v4303
      %v4305 = vpop.f32.mrf.mxu0
      %4306 = vmatprep.mubr.bf16.mxu0 0
      %4307 = vmatmul.mubr.bf16.gmra.mxu0 %v4164
      %v4308 = vpop.f32.mrf.mxu0
      %v4309 = vadd.f32 0.0, %v4308
      %v4310 = vpop.f32.mrf.mxu0
      %v4311 = vpop.f32.mrf.mxu0
      %v4312 = vadd.f32 0.0, %v4311
      %v4313 = vpop.f32.mrf.mxu0
      %4314 = vmatprep.mubr.bf16.mxu0 0
      %4315 = vmatmul.mubr.bf16.gmra.mxu0 %v4167
      %v4316 = vpop.f32.mrf.mxu0
      %v4317 = vadd.f32 0.0, %v4316
      %v4318 = vpop.f32.mrf.mxu0
      %v4319 = vpop.f32.mrf.mxu0
      %v4320 = vadd.f32 0.0, %v4319
      %v4321 = vpop.f32.mrf.mxu0
      %4322 = vmatprep.mubr.bf16.mxu0 0
      %4323 = vmatmul.mubr.bf16.gmra.mxu0 %v4170
      %v4324 = vpop.f32.mrf.mxu0
      %v4325 = vadd.f32 0.0, %v4324
      %v4326 = vpop.f32.mrf.mxu0
      %v4327 = vpop.f32.mrf.mxu0
      %v4328 = vadd.f32 0.0, %v4327
      %v4329 = vpop.f32.mrf.mxu0
      %4330 = vmatprep.mubr.bf16.mxu0 0
      %4331 = vmatmul.mubr.bf16.gmra.mxu0 %v4173
      %v4332 = vpop.f32.mrf.mxu0
      %v4333 = vadd.f32 0.0, %v4332
      %v4334 = vpop.f32.mrf.mxu0
      %v4335 = vpop.f32.mrf.mxu0
      %v4336 = vadd.f32 0.0, %v4335
      %v4337 = vpop.f32.mrf.mxu0
      %4338 = vdwg.mxu0
      %v4339 = vadd.f32 %v3880, %v4213
      %v4340 = vadd.f32 %v3883, %v4216
      %v4341 = vadd.f32 %v3888, %v4221
      %v4342 = vadd.f32 %v3891, %v4224
      %v4343 = vadd.f32 %v3896, %v4229
      %v4344 = vadd.f32 %v3899, %v4232
      %v4345 = vadd.f32 %v3904, %v4237
      %v4346 = vadd.f32 %v3907, %v4240
      %v4347 = vadd.f32 %v3912, %v4245
      %v4348 = vadd.f32 %v3915, %v4248
      %v4349 = vadd.f32 %v3920, %v4253
      %v4350 = vadd.f32 %v3923, %v4256
      %v4351 = vadd.f32 %v3928, %v4261
      %v4352 = vadd.f32 %v3931, %v4264
      %v4353 = vadd.f32 %v3936, %v4269
      %v4354 = vadd.f32 %v3939, %v4272
      %v4355 = vadd.f32 %v3944, %v4277
      %v4356 = vadd.f32 %v3947, %v4280
      %v4357 = vadd.f32 %v3952, %v4285
      %v4358 = vadd.f32 %v3955, %v4288
      %v4359 = vadd.f32 %v3960, %v4293
      %v4360 = vadd.f32 %v3963, %v4296
      %v4361 = vadd.f32 %v3968, %v4301
      %v4362 = vadd.f32 %v3971, %v4304
      %v4363 = vadd.f32 %v3976, %v4309
      %v4364 = vadd.f32 %v3979, %v4312
      %v4365 = vadd.f32 %v3984, %v4317
      %v4366 = vadd.f32 %v3987, %v4320
      %v4367 = vadd.f32 %v3992, %v4325
      %v4368 = vadd.f32 %v3995, %v4328
      %v4369 = vadd.f32 %v4000, %v4333
      %v4370 = vadd.f32 %v4003, %v4336
      %v4371 = vld [vmem:[%s4] sm:$0x1]
      %v4373 = vlaneseq
      %v4374 = vshrl.u32 %v4373, 7
      %v4375 = vsub.s32 0, %v4374
      %v4376 = vrot.slane %v4371, %v4375
      %v4378 = vadd.f32 %v4339, %v4376
      %v4379 = vadd.f32 %v4340, %v4376
      %v4380 = vadd.f32 %v4341, %v4376
      %v4381 = vadd.f32 %v4342, %v4376
      %v4382 = vadd.f32 %v4343, %v4376
      %v4383 = vadd.f32 %v4344, %v4376
      %v4384 = vadd.f32 %v4345, %v4376
      %v4385 = vadd.f32 %v4346, %v4376
      %v4386 = vadd.f32 %v4347, %v4376
      %v4387 = vadd.f32 %v4348, %v4376
      %v4388 = vadd.f32 %v4349, %v4376
      %v4389 = vadd.f32 %v4350, %v4376
      %v4390 = vadd.f32 %v4351, %v4376
      %v4391 = vadd.f32 %v4352, %v4376
      %v4392 = vadd.f32 %v4353, %v4376
      %v4393 = vadd.f32 %v4354, %v4376
      %v4394 = vadd.f32 %v4355, %v4376
      %v4395 = vadd.f32 %v4356, %v4376
      %v4396 = vadd.f32 %v4357, %v4376
      %v4397 = vadd.f32 %v4358, %v4376
      %v4398 = vadd.f32 %v4359, %v4376
      %v4399 = vadd.f32 %v4360, %v4376
      %v4400 = vadd.f32 %v4361, %v4376
      %v4401 = vadd.f32 %v4362, %v4376
      %v4402 = vadd.f32 %v4363, %v4376
      %v4403 = vadd.f32 %v4364, %v4376
      %v4404 = vadd.f32 %v4365, %v4376
      %v4405 = vadd.f32 %v4366, %v4376
      %v4406 = vadd.f32 %v4367, %v4376
      %v4407 = vadd.f32 %v4368, %v4376
      %v4408 = vadd.f32 %v4369, %v4376
      %v4409 = vadd.f32 %v4370, %v4376
      %v4410 = vadd.f32 %v4378, %v226
      %v4411 = vadd.f32 %v4379, %v227
      %v4412 = vadd.f32 %v4380, %v228
      %v4413 = vadd.f32 %v4381, %v229
      %v4414 = vadd.f32 %v4382, %v230
      %v4415 = vadd.f32 %v4383, %v231
      %v4416 = vadd.f32 %v4384, %v232
      %v4417 = vadd.f32 %v4385, %v233
      %v4418 = vadd.f32 %v4386, %v234
      %v4419 = vadd.f32 %v4387, %v235
      %v4420 = vadd.f32 %v4388, %v236
      %v4421 = vadd.f32 %v4389, %v237
      %v4422 = vadd.f32 %v4390, %v238
      %v4423 = vadd.f32 %v4391, %v239
      %v4424 = vadd.f32 %v4392, %v240
      %v4425 = vadd.f32 %v4393, %v241
      %v4426 = vadd.f32 %v4394, %v242
      %v4427 = vadd.f32 %v4395, %v243
      %v4428 = vadd.f32 %v4396, %v244
      %v4429 = vadd.f32 %v4397, %v245
      %v4430 = vadd.f32 %v4398, %v246
      %v4431 = vadd.f32 %v4399, %v247
      %v4432 = vadd.f32 %v4400, %v248
      %v4433 = vadd.f32 %v4401, %v249
      %v4434 = vadd.f32 %v4402, %v250
      %v4435 = vadd.f32 %v4403, %v251
      %v4436 = vadd.f32 %v4404, %v252
      %v4437 = vadd.f32 %v4405, %v253
      %v4438 = vadd.f32 %v4406, %v254
      %v4439 = vadd.f32 %v4407, %v255
      %v4440 = vadd.f32 %v4408, %v256
      %v4441 = vadd.f32 %v4409, %v257
      %v4442 = vmax.f32 %v4410, 0.0
      %v4443 = vmax.f32 %v4411, 0.0
      %v4444 = vmax.f32 %v4412, 0.0
      %v4445 = vmax.f32 %v4413, 0.0
      %v4446 = vmax.f32 %v4414, 0.0
      %v4447 = vmax.f32 %v4415, 0.0
      %v4448 = vmax.f32 %v4416, 0.0
      %v4449 = vmax.f32 %v4417, 0.0
      %v4450 = vmax.f32 %v4418, 0.0
      %v4451 = vmax.f32 %v4419, 0.0
      %v4452 = vmax.f32 %v4420, 0.0
      %v4453 = vmax.f32 %v4421, 0.0
      %v4454 = vmax.f32 %v4422, 0.0
      %v4455 = vmax.f32 %v4423, 0.0
      %v4456 = vmax.f32 %v4424, 0.0
      %v4457 = vmax.f32 %v4425, 0.0
      %v4458 = vmax.f32 %v4426, 0.0
      %v4459 = vmax.f32 %v4427, 0.0
      %v4460 = vmax.f32 %v4428, 0.0
      %v4461 = vmax.f32 %v4429, 0.0
      %v4462 = vmax.f32 %v4430, 0.0
      %v4463 = vmax.f32 %v4431, 0.0
      %v4464 = vmax.f32 %v4432, 0.0
      %v4465 = vmax.f32 %v4433, 0.0
      %v4466 = vmax.f32 %v4434, 0.0
      %v4467 = vmax.f32 %v4435, 0.0
      %v4468 = vmax.f32 %v4436, 0.0
      %v4469 = vmax.f32 %v4437, 0.0
      %v4470 = vmax.f32 %v4438, 0.0
      %v4471 = vmax.f32 %v4439, 0.0
      %v4472 = vmax.f32 %v4440, 0.0
      %v4473 = vmax.f32 %v4441, 0.0
      %vm4474 = vcmask 31744
      %4475 = vst.msk [vmem:[%s224] sm:$0xff] %vm4474, %v4442
      %4476 = vst.msk [vmem:[%s224 + $0x8] sm:$0xff] %vm4474, %v4443
      %4477 = vst.msk [vmem:[%s224 + $0x10] sm:$0xff] %vm4474, %v4444
      %4478 = vst.msk [vmem:[%s224 + $0x18] sm:$0xff] %vm4474, %v4445
      %4479 = vst.msk [vmem:[%s224 + $0x20] sm:$0xff] %vm4474, %v4446
      %4480 = vst.msk [vmem:[%s224 + $0x28] sm:$0xff] %vm4474, %v4447
      %4481 = vst.msk [vmem:[%s224 + $0x30] sm:$0xff] %vm4474, %v4448
      %4482 = vst.msk [vmem:[%s224 + $0x38] sm:$0xff] %vm4474, %v4449
      %4483 = vst.msk [vmem:[%s224 + $0x40] sm:$0xff] %vm4474, %v4450
      %4484 = vst.msk [vmem:[%s224 + $0x48] sm:$0xff] %vm4474, %v4451
      %4485 = vst.msk [vmem:[%s224 + $0x50] sm:$0xff] %vm4474, %v4452
      %4486 = vst.msk [vmem:[%s224 + $0x58] sm:$0xff] %vm4474, %v4453
      %4487 = vst.msk [vmem:[%s224 + $0x60] sm:$0xff] %vm4474, %v4454
      %4488 = vst.msk [vmem:[%s224 + $0x68] sm:$0xff] %vm4474, %v4455
      %4489 = vst.msk [vmem:[%s224 + $0x70] sm:$0xff] %vm4474, %v4456
      %4490 = vst.msk [vmem:[%s224 + $0x78] sm:$0xff] %vm4474, %v4457
      %4491 = vst.msk [vmem:[%s224 + $0x80] sm:$0xff] %vm4474, %v4458
      %4492 = vst.msk [vmem:[%s224 + $0x88] sm:$0xff] %vm4474, %v4459
      %4493 = vst.msk [vmem:[%s224 + $0x90] sm:$0xff] %vm4474, %v4460
      %4494 = vst.msk [vmem:[%s224 + $0x98] sm:$0xff] %vm4474, %v4461
      %4495 = vst.msk [vmem:[%s224 + $0xa0] sm:$0xff] %vm4474, %v4462
      %4496 = vst.msk [vmem:[%s224 + $0xa8] sm:$0xff] %vm4474, %v4463
      %4497 = vst.msk [vmem:[%s224 + $0xb0] sm:$0xff] %vm4474, %v4464
      %4498 = vst.msk [vmem:[%s224 + $0xb8] sm:$0xff] %vm4474, %v4465
      %4499 = vst.msk [vmem:[%s224 + $0xc0] sm:$0xff] %vm4474, %v4466
      %4500 = vst.msk [vmem:[%s224 + $0xc8] sm:$0xff] %vm4474, %v4467
      %4501 = vst.msk [vmem:[%s224 + $0xd0] sm:$0xff] %vm4474, %v4468
      %4502 = vst.msk [vmem:[%s224 + $0xd8] sm:$0xff] %vm4474, %v4469
      %4503 = vst.msk [vmem:[%s224 + $0xe0] sm:$0xff] %vm4474, %v4470
      %4504 = vst.msk [vmem:[%s224 + $0xe8] sm:$0xff] %vm4474, %v4471
      %4505 = vst.msk [vmem:[%s224 + $0xf0] sm:$0xff] %vm4474, %v4472
      %4506 = vst.msk [vmem:[%s224 + $0xf8] sm:$0xff] %vm4474, %v4473
      %p4507 = scmp.lt.s32.totalorder %s16, 1
      %s4508 = scalar_select %p4507, %s16, 1
      %s4509 = smul.addr %s4508, 32
      %s4510 = smul.addr %s4509, 8
      %s4511 = scalar_lea.vmem %s5, %s4510
      // Predicated region
      $region41: #{res_block_forward.1} parent=39 // pred_check
        %p4512 = pneg %p144
      $region42: #{res_block_forward.1} parent=39 // pred_check_branch
        %4514 = sbr.rel (%p4512) target = $region44
      $region43: #{res_block_forward.1} parent=39 // pred_region
        _
      $region44: #{res_block_forward.1} parent=39 // pred_fallthru
        _
    $region40: #{res_block_forward.1} parent=5 // pred_fallthru
      _
    %p4515 = scmp.le.s32.totalorder 2, %s11
    // Predicated region
    $region45: #{res_block_forward.1} parent=5 // pred_check
      %p4516 = pneg %p4515
    $region46: #{res_block_forward.1} parent=5 // pred_check_branch
      %4518 = sbr.rel (%p4516) target = $region48
    $region47: #{res_block_forward.1} parent=5 // pred_region
      %s4519 = ssub.s32 %s11, 2
      // Predicated region
      $region49: #{res_block_forward.1} parent=47 // pred_check
        %p4520 = pneg %p150
      $region50: #{res_block_forward.1} parent=47 // pred_check_branch
        %4522 = sbr.rel (%p4520) target = $region52
      $region51: #{res_block_forward.1} parent=47 // pred_region
        %p4523 = scmp.lt.s32.totalorder %s17, 1
        %s4524 = scalar_select %p4523, %s17, 1
        %s4525 = smul.addr %s4524, 32
        %s4526 = smul.addr %s4525, 8
        %s4527 = scalar_lea.vmem %s5, %s4526
      $region52: #{res_block_forward.1} parent=47 // pred_fallthru
        _
    $region48: #{res_block_forward.1} parent=5 // pred_fallthru
      _
  $region6: #{res_block_forward.1} parent=0 // loop_footer
    %s15 = sadd.s32 1, %s11
  $region7: #{res_block_forward.1} parent=0 // loop_footer_branch
    %10 = sbr.rel target = $region3
  $region8: #{res_block_forward.1} parent=0 // loop_exit
    _

</llo_original>
